<compile_context>
chip_gen: v6e
topology: v6e:2x2x1
jax: 0.10.0
libtpu: 0.0.40
codegen_flags: <defaults>
</compile_context>

<pallas_src>
import jax
import jax.numpy as jnp
from jax.experimental import pallas as pl
from jax.experimental.pallas import tpu as pltpu

NEG_SLOPE = 0.01   # F.leaky_relu default negative_slope
BN_EPS = 1e-5      # nn.BatchNorm2d default eps
CP = 128           # lane-aligned padded channel / reduction dimension


# ------------------------- Pallas kernel -------------------------

def _make_fused_block_kernel(imgs, ho, wo, cp, neg_slope):
    """conv1+bn1+lrelu -> in-kernel im2col -> single conv2 matmul -> bn2+add+lrelu."""
    hw = ho * wo

    def kernel(p1_ref, w1_ref, b1_ref, w2_ref, b2_ref, sc_ref, o_ref,
               pad_ref, lhs_ref):
        # ---- conv1 (+ folded BN1 scale) as one batch-folded matmul, M = imgs*hw.
        acc1 = jnp.dot(p1_ref[...], w1_ref[...],
                       preferred_element_type=jnp.float32)          # (M, CP) f32
        y1 = acc1 + b1_ref[...]
        # LeakyReLU, then cast to bf16 exactly once (conv2's MXU input dtype).
        out1 = jnp.maximum(y1, neg_slope * y1).astype(jnp.bfloat16)

        # ---- lay out1 out spatially with a zero border inside a bf16 scratch.
        # Border-only zeroing; interior fully overwritten each step.
        zrow = jnp.zeros((1, wo + 2, cp), jnp.bfloat16)
        zcol = jnp.zeros((ho, 1, cp), jnp.bfloat16)
        for b in range(imgs):
            pad_ref[b, 0:1, :, :] = zrow
            pad_ref[b, ho + 1:ho + 2, :, :] = zrow
            pad_ref[b, 1:ho + 1, 0:1, :] = zcol
            pad_ref[b, 1:ho + 1, wo + 1:wo + 2, :] = zcol
            pad_ref[b, 1:ho + 1, 1:wo + 1, :] = (
                out1[b * hw:(b + 1) * hw, :].reshape(ho, wo, cp))

        # ---- build (M, 9*CP) bf16 im2col LHS with lane-aligned 128-wide stores.
        for kh in range(3):
            for kw in range(3):
                tap = kh * 3 + kw
                for b in range(imgs):
                    lhs_ref[b * hw:(b + 1) * hw, tap * cp:(tap + 1) * cp] = (
                        pad_ref[b, kh:kh + ho, kw:kw + wo, :].reshape(hw, cp))

        # ---- conv2 (+ folded BN2 scale) as ONE matmul, K = 9*CP = 1152;
        # all nine taps accumulate inside the MXU.
        acc2 = jnp.dot(lhs_ref[...], w2_ref[...],
                       preferred_element_type=jnp.float32)          # (M, CP) f32

        # ---- BN2 shift + residual add + LeakyReLU; lane-dense (CP=128) store.
        y2 = acc2 + b2_ref[...] + sc_ref[...].astype(jnp.float32)
        o_ref[...] = jnp.maximum(y2, neg_slope * y2)

    return kernel


def fused_basic_block_call(p1, w1m, b1, w2m, b2, sc, imgs, ho, wo):
    m_total, kp = p1.shape
    cp = w1m.shape[1]
    hw = ho * wo
    m = imgs * hw                      # matmul M dim per grid step (batch folded)
    kernel = _make_fused_block_kernel(imgs, ho, wo, cp, NEG_SLOPE)
    return pl.pallas_call(
        kernel,
        out_shape=jax.ShapeDtypeStruct((m_total, cp), jnp.float32),
        grid_spec=pltpu.PrefetchScalarGridSpec(
            num_scalar_prefetch=0,
            grid=(m_total // m,),      # images-per-step images per grid step
            in_specs=[
                pl.BlockSpec((m, kp), lambda i: (i, 0)),        # conv1 patches (bf16)
                pl.BlockSpec((kp, cp), lambda i: (0, 0)),       # w1 (resident)
                pl.BlockSpec((1, cp), lambda i: (0, 0)),        # bn1 shift (f32)
                pl.BlockSpec((9 * cp, cp), lambda i: (0, 0)),   # w2 (resident, single-K)
                pl.BlockSpec((1, cp), lambda i: (0, 0)),        # bn2 shift (f32)
                pl.BlockSpec((m, cp), lambda i: (i, 0)),        # shortcut rows (bf16)
            ],
            out_specs=pl.BlockSpec((m, cp), lambda i: (i, 0)),
            scratch_shapes=[
                pltpu.VMEM((imgs, ho + 2, wo + 2, cp), jnp.bfloat16),  # padded out1
                pltpu.VMEM((m, 9 * cp), jnp.bfloat16),                 # conv2 im2col LHS
            ],
            # TODO(synk): resident weight/bias blocks could use
            # pipeline_mode=pl.Buffered(1) to skip double-buffering; skipped here
            # since the footprint is tiny (~1.6 MiB total) and it adds lowering risk.
        ),
        compiler_params=pltpu.CompilerParams(
            # TODO(synk): for large batches on v7x, use explicit core-parallel
            # semantics (or XLA-level batch sharding) to guarantee both TCs work;
            # with grid=(1,) here there is nothing to split.
            dimension_semantics=("parallel",),
            # Actual VMEM footprint ~1.6 MiB (w2 0.3 MiB x2 bufs + lhs 0.3 MiB +
            # blocks + scratch); the limit is nowhere near binding on any gen.
            vmem_limit_bytes=32 * 1024 * 1024,
        ),
    )(p1, w1m, b1, w2m, b2, sc)


# ------------------- JAX glue (host-side layout prep) -------------------

def pad_last(a, size):
    pad = [(0, 0)] * (a.ndim - 1) + [(0, size - a.shape[-1])]
    return jnp.pad(a, pad)


def im2col_3x3_nhwc(x_nhwc, stride):
    """3x3, padding=1 im2col in NHWC. Returns (N, Ho*Wo, 9*C), Ho, Wo.
    Reduction order is (kh, kw, cin)."""
    n, h, w, c = x_nhwc.shape
    xp = jnp.pad(x_nhwc, ((0, 0), (1, 1), (1, 1), (0, 0)))
    ho = (h + 2 - 3) // stride + 1
    wo = (w + 2 - 3) // stride + 1
    cols = []
    for kh in range(3):
        for kw in range(3):
            cols.append(xp[:, kh:kh + stride * ho:stride,
                              kw:kw + stride * wo:stride, :])     # (N, Ho, Wo, C)
    patches = jnp.concatenate(cols, axis=-1)                      # (N, Ho, Wo, 9*C)
    return patches.reshape(n, ho * wo, 9 * c), ho, wo


def fold_bn(bn_params):
    gamma, beta, run_mean, run_var = bn_params
    scale = gamma / jnp.sqrt(run_var + BN_EPS)
    shift = beta - run_mean * scale
    return scale.astype(jnp.float32), shift.astype(jnp.float32)


def avgpool_shortcut_nhwc(x_nhwc, stride, out_c):
    """AvgPoolShortCut in NHWC: avg-pool spatially, zero-pad channels to out_c."""
    n, h, w, c_in = x_nhwc.shape
    if h % 2 != 0:
        pooled = x_nhwc[:, ::stride, ::stride, :]                 # F.avg_pool2d(x, 1, stride)
    else:
        ho, wo = h // stride, w // stride
        pooled = x_nhwc[:, :ho * stride, :wo * stride, :].reshape(
            n, ho, stride, wo, stride, c_in).mean(axis=(2, 4))
    pad = jnp.zeros((n, pooled.shape[1], pooled.shape[2], out_c - c_in), pooled.dtype)
    return jnp.concatenate([pooled, pad], axis=-1)


def _pick_imgs_per_step(n, hw, target_m=256):
    """Largest divisor of n such that imgs*hw <= target_m (at least 1)."""
    best = 1
    for d in range(1, n + 1):
        if n % d == 0 and d * hw <= target_m:
            best = d
    return best


def init_basic_block_params(key, in_planes, planes):
    k = jax.random.split(key, 10)
    return {
        "w1": jax.random.normal(k[0], (planes, in_planes, 3, 3), jnp.float32) * 0.1,
        "w2": jax.random.normal(k[1], (planes, planes, 3, 3), jnp.float32) * 0.1,
        "bn1": (jax.random.uniform(k[2], (planes,), jnp.float32, 0.5, 1.5),   # gamma
                jax.random.normal(k[3], (planes,), jnp.float32) * 0.1,        # beta
                jax.random.normal(k[4], (planes,), jnp.float32) * 0.1,        # running_mean
                jax.random.uniform(k[5], (planes,), jnp.float32, 0.5, 1.5)),  # running_var
        "bn2": (jax.random.uniform(k[6], (planes,), jnp.float32, 0.5, 1.5),
                jax.random.normal(k[7], (planes,), jnp.float32) * 0.1,
                jax.random.normal(k[8], (planes,), jnp.float32) * 0.1,
                jax.random.uniform(k[9], (planes,), jnp.float32, 0.5, 1.5)),
    }


def basic_block_forward(x_nchw, params, stride, in_planes, planes):
    n = x_nchw.shape[0]
    # NCHW -> NHWC once (channels-last = lane axis); back to NCHW only at the end.
    x_nhwc = jnp.transpose(x_nchw, (0, 2, 3, 1))

    # conv1 patches (host im2col of the input; conv2's im2col is in-kernel).
    p1, ho, wo = im2col_3x3_nhwc(x_nhwc, stride)                  # (N, Ho*Wo, 9*Cin)
    hw = ho * wo
    p1 = pad_last(p1, CP).astype(jnp.bfloat16).reshape(n * hw, CP)  # batch folded into M

    # Weights: fold BN scales, pad to lane-aligned CP tiles, bf16 for the MXU.
    s1, b1 = fold_bn(params["bn1"])
    w1m = params["w1"].transpose(2, 3, 1, 0).reshape(9 * in_planes, planes) * s1[None, :]
    w1m = jnp.pad(w1m, ((0, CP - 9 * in_planes), (0, CP - planes))).astype(jnp.bfloat16)
    b1 = pad_last(b1[None, :], CP)                                # (1, CP) f32

    s2, b2 = fold_bn(params["bn2"])
    w2m = params["w2"].transpose(2, 3, 1, 0) * s2[None, None, None, :]   # (3,3,cin,cout)
    w2m = jnp.pad(w2m, ((0, 0), (0, 0), (0, CP - planes), (0, CP - planes)))
    w2m = w2m.reshape(9 * CP, CP).astype(jnp.bfloat16)            # single-K conv2 weight
    b2 = pad_last(b2[None, :], CP)                                # (1, CP) f32

    # Shortcut branch (AvgPoolShortCut when shape changes, identity otherwise).
    if stride != 1 or in_planes != planes:
        sc = avgpool_shortcut_nhwc(x_nhwc, stride, planes)        # (N, Ho, Wo, planes)
    else:
        sc = x_nhwc
    # Shipped bf16 to cut padded HBM traffic; added back in f32 inside the kernel.
    sc = pad_last(sc, CP).reshape(n * hw, CP).astype(jnp.bfloat16)

    imgs = _pick_imgs_per_step(n, hw)
    out = fused_basic_block_call(p1, w1m, b1, w2m, b2, sc, imgs, ho, wo)  # (N*hw, CP)

    out = out.reshape(n, ho, wo, CP)[..., :planes]
    return jnp.transpose(out, (0, 3, 1, 2))                       # back to NCHW


# ---------------- pure-JAX reference (independent of the Pallas path) ----------------

def _ref_forward(x, params, stride, in_planes, planes):
    def conv(v, w, s):
        return jax.lax.conv_general_dilated(
            v, w, window_strides=(s, s), padding=((1, 1), (1, 1)),
            dimension_numbers=("NCHW", "OIHW", "NCHW"))

    def bn(v, bn_p):
        g, b, rm, rv = bn_p
        sc = (g / jnp.sqrt(rv + BN_EPS))[None, :, None, None]
        sh = (b - rm * g / jnp.sqrt(rv + BN_EPS))[None, :, None, None]
        return v * sc + sh

    def lrelu(v):
        return jnp.where(v > 0, v, NEG_SLOPE * v)

    def shortcut(v):
        if stride == 1 and in_planes == planes:
            return v
        n, c, h, w = v.shape
        if h % 2 != 0:
            pooled = v[:, :, ::stride, ::stride]
        else:
            ho, wo = h // stride, w // stride
            pooled = v[:, :, :ho * stride, :wo * stride].reshape(
                n, c, ho, stride, wo, stride).mean(axis=(3, 5))
        pad = jnp.zeros((n, planes - c, pooled.shape[2], pooled.shape[3]), v.dtype)
        return jnp.concatenate([pooled, pad], axis=1)

    out = lrelu(bn(conv(x, params["w1"], stride), params["bn1"]))
    out = bn(conv(out, params["w2"], 1), params["bn2"])
    out = out + shortcut(x)
    return lrelu(out)


# ------------------------------ main ------------------------------

if __name__ == "__main__":
    key = jax.random.PRNGKey(0)
    kx, kparam = jax.random.split(key)

    N, IN_PLANES, PLANES, STRIDE, H, W = 2, 4, 16, 2, 16, 16
    # Keep the module's canonical small config (in_planes=4, planes=8, stride=2):
    PLANES = 8
    x = jax.random.normal(kx, (N, IN_PLANES, H, W), jnp.float32)
    params = init_basic_block_params(kparam, IN_PLANES, PLANES)

    out = basic_block_forward(x, params, STRIDE, IN_PLANES, PLANES)
    out = jax.block_until_ready(out)

    ref = jax.block_until_ready(_ref_forward(x, params, STRIDE, IN_PLANES, PLANES))
    assert out.shape == (N, PLANES, H // STRIDE, W // STRIDE), out.shape
    # bf16 MXU inputs / bf16 out1 & shortcut (f32 accumulation) -> loosened tolerance.
    err = float(jnp.max(jnp.abs(out - ref)))
    assert jnp.allclose(out, ref, rtol=5e-2, atol=5e-2), err

    print("KERNEL_OK")
</pallas_src>

<mosaic_0001>
module attributes {stable_mosaic.version = 11 : i64} {
  func.func @kernel(%arg0: i32, %arg1: memref<128x128xbf16, #tpu.memory_space<vmem>>, %arg2: memref<128x128xbf16, #tpu.memory_space<vmem>>, %arg3: memref<1x128xf32, #tpu.memory_space<vmem>>, %arg4: memref<1152x128xbf16, #tpu.memory_space<vmem>>, %arg5: memref<1x128xf32, #tpu.memory_space<vmem>>, %arg6: memref<128x128xbf16, #tpu.memory_space<vmem>>, %arg7: memref<128x128xf32, #tpu.memory_space<vmem>>, %arg8: memref<2x10x10x128xbf16, #tpu.memory_space<vmem>>, %arg9: memref<128x1152xbf16, #tpu.memory_space<vmem>>) attributes {dimension_semantics = [#tpu.dimension_semantics<parallel>], iteration_bounds = array<i64: 1>, scalar_prefetch = 0 : i64, scratch_operands = 2 : i64, tpu.core_type = #tpu.core_type<tc>, window_params = [{transform_indices = @transform_0, window_bounds = array<i64: 128, 128>}, {pipeline_mode = #tpu.pipeline_mode<synchronous>, transform_indices = @transform_1, window_bounds = array<i64: 128, 128>}, {pipeline_mode = #tpu.pipeline_mode<synchronous>, transform_indices = @transform_2, window_bounds = array<i64: 1, 128>}, {pipeline_mode = #tpu.pipeline_mode<synchronous>, transform_indices = @transform_3, window_bounds = array<i64: 1152, 128>}, {pipeline_mode = #tpu.pipeline_mode<synchronous>, transform_indices = @transform_4, window_bounds = array<i64: 1, 128>}, {transform_indices = @transform_5, window_bounds = array<i64: 128, 128>}, {transform_indices = @transform_6, window_bounds = array<i64: 128, 128>}]} {
    %c0 = arith.constant 0 : index
    %c0_0 = arith.constant 0 : index
    %0 = vector.load %arg1[%c0, %c0_0] : memref<128x128xbf16, #tpu.memory_space<vmem>>, vector<128x128xbf16>
    %c0_1 = arith.constant 0 : index
    %c0_2 = arith.constant 0 : index
    %1 = vector.load %arg2[%c0_1, %c0_2] : memref<128x128xbf16, #tpu.memory_space<vmem>>, vector<128x128xbf16>
    %cst = arith.constant dense<0.000000e+00> : vector<128x128xf32>
    %2 = tpu.matmul %0, %1, %cst {dimension_numbers = #tpu.dot_dimension_numbers<[1], [0], [0], [1], [0, 0, 1, 1], [], []>} : vector<128x128xbf16>, vector<128x128xbf16>, vector<128x128xf32> -> vector<128x128xf32>
    %c0_3 = arith.constant 0 : index
    %c0_4 = arith.constant 0 : index
    %3 = vector.load %arg3[%c0_3, %c0_4] : memref<1x128xf32, #tpu.memory_space<vmem>>, vector<1x128xf32>
    %4 = vector.broadcast %3 : vector<1x128xf32> to vector<128x128xf32>
    %5 = arith.addf %2, %4 : vector<128x128xf32>
    %cst_5 = arith.constant 0.00999999977 : f32
    %6 = vector.broadcast %cst_5 : f32 to vector<128x128xf32>
    %7 = arith.mulf %6, %5 : vector<128x128xf32>
    %8 = arith.maximumf %5, %7 : vector<128x128xf32>
    %9 = arith.truncf %8 : vector<128x128xf32> to vector<128x128xbf16>
    %cst_6 = arith.constant 0.000000e+00 : bf16
    %10 = vector.broadcast %cst_6 : bf16 to vector<1x10x128xbf16>
    %cst_7 = arith.constant 0.000000e+00 : bf16
    %11 = vector.broadcast %cst_7 : bf16 to vector<8x1x128xbf16>
    %c0_8 = arith.constant 0 : index
    %c0_9 = arith.constant 0 : index
    %c0_10 = arith.constant 0 : index
    %c0_11 = arith.constant 0 : index
    %12 = vector.load %arg8[%c0_8, %c0_9, %c0_10, %c0_11] : memref<2x10x10x128xbf16, #tpu.memory_space<vmem>>, vector<1x1x10x128xbf16>
    %13 = vector.shape_cast %12 : vector<1x1x10x128xbf16> to vector<1x10x128xbf16>
    %14 = vector.shape_cast %10 : vector<1x10x128xbf16> to vector<1x1x10x128xbf16>
    tpu.vector_store %arg8[%c0_8, %c0_9, %c0_10, %c0_11], %14 {strides = array<i32>} : memref<2x10x10x128xbf16, #tpu.memory_space<vmem>>, vector<1x1x10x128xbf16>,
    %c0_12 = arith.constant 0 : index
    %c9 = arith.constant 9 : index
    %c0_13 = arith.constant 0 : index
    %c0_14 = arith.constant 0 : index
    %15 = vector.load %arg8[%c0_12, %c9, %c0_13, %c0_14] : memref<2x10x10x128xbf16, #tpu.memory_space<vmem>>, vector<1x1x10x128xbf16>
    %16 = vector.shape_cast %15 : vector<1x1x10x128xbf16> to vector<1x10x128xbf16>
    %17 = vector.shape_cast %10 : vector<1x10x128xbf16> to vector<1x1x10x128xbf16>
    tpu.vector_store %arg8[%c0_12, %c9, %c0_13, %c0_14], %17 {strides = array<i32>} : memref<2x10x10x128xbf16, #tpu.memory_space<vmem>>, vector<1x1x10x128xbf16>,
    %c0_15 = arith.constant 0 : index
    %c1 = arith.constant 1 : index
    %c0_16 = arith.constant 0 : index
    %c0_17 = arith.constant 0 : index
    %18 = vector.load %arg8[%c0_15, %c1, %c0_16, %c0_17] : memref<2x10x10x128xbf16, #tpu.memory_space<vmem>>, vector<1x8x1x128xbf16>
    %19 = vector.shape_cast %18 : vector<1x8x1x128xbf16> to vector<8x1x128xbf16>
    %20 = vector.shape_cast %11 : vector<8x1x128xbf16> to vector<1x8x1x128xbf16>
    tpu.vector_store %arg8[%c0_15, %c1, %c0_16, %c0_17], %20 {strides = array<i32>} : memref<2x10x10x128xbf16, #tpu.memory_space<vmem>>, vector<1x8x1x128xbf16>,
    %c0_18 = arith.constant 0 : index
    %c1_19 = arith.constant 1 : index
    %c9_20 = arith.constant 9 : index
    %c0_21 = arith.constant 0 : index
    %21 = vector.load %arg8[%c0_18, %c1_19, %c9_20, %c0_21] : memref<2x10x10x128xbf16, #tpu.memory_space<vmem>>, vector<1x8x1x128xbf16>
    %22 = vector.shape_cast %21 : vector<1x8x1x128xbf16> to vector<8x1x128xbf16>
    %23 = vector.shape_cast %11 : vector<8x1x128xbf16> to vector<1x8x1x128xbf16>
    tpu.vector_store %arg8[%c0_18, %c1_19, %c9_20, %c0_21], %23 {strides = array<i32>} : memref<2x10x10x128xbf16, #tpu.memory_space<vmem>>, vector<1x8x1x128xbf16>,
    %24 = vector.extract_strided_slice %9 {offsets = [0, 0], sizes = [64, 128], strides = [1, 1]} : vector<128x128xbf16> to vector<64x128xbf16>
    %25 = vector.shape_cast %24 : vector<64x128xbf16> to vector<8x8x128xbf16>
    %c0_22 = arith.constant 0 : index
    %c1_23 = arith.constant 1 : index
    %c1_24 = arith.constant 1 : index
    %c0_25 = arith.constant 0 : index
    %26 = vector.load %arg8[%c0_22, %c1_23, %c1_24, %c0_25] : memref<2x10x10x128xbf16, #tpu.memory_space<vmem>>, vector<1x8x8x128xbf16>
    %27 = vector.shape_cast %26 : vector<1x8x8x128xbf16> to vector<8x8x128xbf16>
    %28 = vector.shape_cast %25 : vector<8x8x128xbf16> to vector<1x8x8x128xbf16>
    tpu.vector_store %arg8[%c0_22, %c1_23, %c1_24, %c0_25], %28 {strides = array<i32>} : memref<2x10x10x128xbf16, #tpu.memory_space<vmem>>, vector<1x8x8x128xbf16>,
    %c1_26 = arith.constant 1 : index
    %c0_27 = arith.constant 0 : index
    %c0_28 = arith.constant 0 : index
    %c0_29 = arith.constant 0 : index
    %29 = vector.load %arg8[%c1_26, %c0_27, %c0_28, %c0_29] : memref<2x10x10x128xbf16, #tpu.memory_space<vmem>>, vector<1x1x10x128xbf16>
    %30 = vector.shape_cast %29 : vector<1x1x10x128xbf16> to vector<1x10x128xbf16>
    %31 = vector.shape_cast %10 : vector<1x10x128xbf16> to vector<1x1x10x128xbf16>
    tpu.vector_store %arg8[%c1_26, %c0_27, %c0_28, %c0_29], %31 {strides = array<i32>} : memref<2x10x10x128xbf16, #tpu.memory_space<vmem>>, vector<1x1x10x128xbf16>,
    %c1_30 = arith.constant 1 : index
    %c9_31 = arith.constant 9 : index
    %c0_32 = arith.constant 0 : index
    %c0_33 = arith.constant 0 : index
    %32 = vector.load %arg8[%c1_30, %c9_31, %c0_32, %c0_33] : memref<2x10x10x128xbf16, #tpu.memory_space<vmem>>, vector<1x1x10x128xbf16>
    %33 = vector.shape_cast %32 : vector<1x1x10x128xbf16> to vector<1x10x128xbf16>
    %34 = vector.shape_cast %10 : vector<1x10x128xbf16> to vector<1x1x10x128xbf16>
    tpu.vector_store %arg8[%c1_30, %c9_31, %c0_32, %c0_33], %34 {strides = array<i32>} : memref<2x10x10x128xbf16, #tpu.memory_space<vmem>>, vector<1x1x10x128xbf16>,
    %c1_34 = arith.constant 1 : index
    %c1_35 = arith.constant 1 : index
    %c0_36 = arith.constant 0 : index
    %c0_37 = arith.constant 0 : index
    %35 = vector.load %arg8[%c1_34, %c1_35, %c0_36, %c0_37] : memref<2x10x10x128xbf16, #tpu.memory_space<vmem>>, vector<1x8x1x128xbf16>
    %36 = vector.shape_cast %35 : vector<1x8x1x128xbf16> to vector<8x1x128xbf16>
    %37 = vector.shape_cast %11 : vector<8x1x128xbf16> to vector<1x8x1x128xbf16>
    tpu.vector_store %arg8[%c1_34, %c1_35, %c0_36, %c0_37], %37 {strides = array<i32>} : memref<2x10x10x128xbf16, #tpu.memory_space<vmem>>, vector<1x8x1x128xbf16>,
    %c1_38 = arith.constant 1 : index
    %c1_39 = arith.constant 1 : index
    %c9_40 = arith.constant 9 : index
    %c0_41 = arith.constant 0 : index
    %38 = vector.load %arg8[%c1_38, %c1_39, %c9_40, %c0_41] : memref<2x10x10x128xbf16, #tpu.memory_space<vmem>>, vector<1x8x1x128xbf16>
    %39 = vector.shape_cast %38 : vector<1x8x1x128xbf16> to vector<8x1x128xbf16>
    %40 = vector.shape_cast %11 : vector<8x1x128xbf16> to vector<1x8x1x128xbf16>
    tpu.vector_store %arg8[%c1_38, %c1_39, %c9_40, %c0_41], %40 {strides = array<i32>} : memref<2x10x10x128xbf16, #tpu.memory_space<vmem>>, vector<1x8x1x128xbf16>,
    %41 = vector.extract_strided_slice %9 {offsets = [64, 0], sizes = [64, 128], strides = [1, 1]} : vector<128x128xbf16> to vector<64x128xbf16>
    %42 = vector.shape_cast %41 : vector<64x128xbf16> to vector<8x8x128xbf16>
    %c1_42 = arith.constant 1 : index
    %c1_43 = arith.constant 1 : index
    %c1_44 = arith.constant 1 : index
    %c0_45 = arith.constant 0 : index
    %43 = vector.load %arg8[%c1_42, %c1_43, %c1_44, %c0_45] : memref<2x10x10x128xbf16, #tpu.memory_space<vmem>>, vector<1x8x8x128xbf16>
    %44 = vector.shape_cast %43 : vector<1x8x8x128xbf16> to vector<8x8x128xbf16>
    %45 = vector.shape_cast %42 : vector<8x8x128xbf16> to vector<1x8x8x128xbf16>
    tpu.vector_store %arg8[%c1_42, %c1_43, %c1_44, %c0_45], %45 {strides = array<i32>} : memref<2x10x10x128xbf16, #tpu.memory_space<vmem>>, vector<1x8x8x128xbf16>,
    %c0_46 = arith.constant 0 : index
    %c0_47 = arith.constant 0 : index
    %c0_48 = arith.constant 0 : index
    %c0_49 = arith.constant 0 : index
    %46 = vector.load %arg8[%c0_46, %c0_47, %c0_48, %c0_49] : memref<2x10x10x128xbf16, #tpu.memory_space<vmem>>, vector<1x8x8x128xbf16>
    %47 = vector.shape_cast %46 : vector<1x8x8x128xbf16> to vector<8x8x128xbf16>
    %48 = vector.shape_cast %47 : vector<8x8x128xbf16> to vector<64x128xbf16>
    %c0_50 = arith.constant 0 : index
    %c0_51 = arith.constant 0 : index
    %49 = vector.load %arg9[%c0_50, %c0_51] : memref<128x1152xbf16, #tpu.memory_space<vmem>>, vector<64x128xbf16>
    tpu.vector_store %arg9[%c0_50, %c0_51], %48 {strides = array<i32>} : memref<128x1152xbf16, #tpu.memory_space<vmem>>, vector<64x128xbf16>,
    %c1_52 = arith.constant 1 : index
    %c0_53 = arith.constant 0 : index
    %c0_54 = arith.constant 0 : index
    %c0_55 = arith.constant 0 : index
    %50 = vector.load %arg8[%c1_52, %c0_53, %c0_54, %c0_55] : memref<2x10x10x128xbf16, #tpu.memory_space<vmem>>, vector<1x8x8x128xbf16>
    %51 = vector.shape_cast %50 : vector<1x8x8x128xbf16> to vector<8x8x128xbf16>
    %52 = vector.shape_cast %51 : vector<8x8x128xbf16> to vector<64x128xbf16>
    %c64 = arith.constant 64 : index
    %c0_56 = arith.constant 0 : index
    %53 = vector.load %arg9[%c64, %c0_56] : memref<128x1152xbf16, #tpu.memory_space<vmem>>, vector<64x128xbf16>
    tpu.vector_store %arg9[%c64, %c0_56], %52 {strides = array<i32>} : memref<128x1152xbf16, #tpu.memory_space<vmem>>, vector<64x128xbf16>,
    %c0_57 = arith.constant 0 : index
    %c0_58 = arith.constant 0 : index
    %c1_59 = arith.constant 1 : index
    %c0_60 = arith.constant 0 : index
    %54 = vector.load %arg8[%c0_57, %c0_58, %c1_59, %c0_60] : memref<2x10x10x128xbf16, #tpu.memory_space<vmem>>, vector<1x8x8x128xbf16>
    %55 = vector.shape_cast %54 : vector<1x8x8x128xbf16> to vector<8x8x128xbf16>
    %56 = vector.shape_cast %55 : vector<8x8x128xbf16> to vector<64x128xbf16>
    %c0_61 = arith.constant 0 : index
    %c128 = arith.constant 128 : index
    %57 = vector.load %arg9[%c0_61, %c128] : memref<128x1152xbf16, #tpu.memory_space<vmem>>, vector<64x128xbf16>
    tpu.vector_store %arg9[%c0_61, %c128], %56 {strides = array<i32>} : memref<128x1152xbf16, #tpu.memory_space<vmem>>, vector<64x128xbf16>,
    %c1_62 = arith.constant 1 : index
    %c0_63 = arith.constant 0 : index
    %c1_64 = arith.constant 1 : index
    %c0_65 = arith.constant 0 : index
    %58 = vector.load %arg8[%c1_62, %c0_63, %c1_64, %c0_65] : memref<2x10x10x128xbf16, #tpu.memory_space<vmem>>, vector<1x8x8x128xbf16>
    %59 = vector.shape_cast %58 : vector<1x8x8x128xbf16> to vector<8x8x128xbf16>
    %60 = vector.shape_cast %59 : vector<8x8x128xbf16> to vector<64x128xbf16>
    %c64_66 = arith.constant 64 : index
    %c128_67 = arith.constant 128 : index
    %61 = vector.load %arg9[%c64_66, %c128_67] : memref<128x1152xbf16, #tpu.memory_space<vmem>>, vector<64x128xbf16>
    tpu.vector_store %arg9[%c64_66, %c128_67], %60 {strides = array<i32>} : memref<128x1152xbf16, #tpu.memory_space<vmem>>, vector<64x128xbf16>,
    %c0_68 = arith.constant 0 : index
    %c0_69 = arith.constant 0 : index
    %c2 = arith.constant 2 : index
    %c0_70 = arith.constant 0 : index
    %62 = vector.load %arg8[%c0_68, %c0_69, %c2, %c0_70] : memref<2x10x10x128xbf16, #tpu.memory_space<vmem>>, vector<1x8x8x128xbf16>
    %63 = vector.shape_cast %62 : vector<1x8x8x128xbf16> to vector<8x8x128xbf16>
    %64 = vector.shape_cast %63 : vector<8x8x128xbf16> to vector<64x128xbf16>
    %c0_71 = arith.constant 0 : index
    %c256 = arith.constant 256 : index
    %65 = vector.load %arg9[%c0_71, %c256] : memref<128x1152xbf16, #tpu.memory_space<vmem>>, vector<64x128xbf16>
    tpu.vector_store %arg9[%c0_71, %c256], %64 {strides = array<i32>} : memref<128x1152xbf16, #tpu.memory_space<vmem>>, vector<64x128xbf16>,
    %c1_72 = arith.constant 1 : index
    %c0_73 = arith.constant 0 : index
    %c2_74 = arith.constant 2 : index
    %c0_75 = arith.constant 0 : index
    %66 = vector.load %arg8[%c1_72, %c0_73, %c2_74, %c0_75] : memref<2x10x10x128xbf16, #tpu.memory_space<vmem>>, vector<1x8x8x128xbf16>
    %67 = vector.shape_cast %66 : vector<1x8x8x128xbf16> to vector<8x8x128xbf16>
    %68 = vector.shape_cast %67 : vector<8x8x128xbf16> to vector<64x128xbf16>
    %c64_76 = arith.constant 64 : index
    %c256_77 = arith.constant 256 : index
    %69 = vector.load %arg9[%c64_76, %c256_77] : memref<128x1152xbf16, #tpu.memory_space<vmem>>, vector<64x128xbf16>
    tpu.vector_store %arg9[%c64_76, %c256_77], %68 {strides = array<i32>} : memref<128x1152xbf16, #tpu.memory_space<vmem>>, vector<64x128xbf16>,
    %c0_78 = arith.constant 0 : index
    %c1_79 = arith.constant 1 : index
    %c0_80 = arith.constant 0 : index
    %c0_81 = arith.constant 0 : index
    %70 = vector.load %arg8[%c0_78, %c1_79, %c0_80, %c0_81] : memref<2x10x10x128xbf16, #tpu.memory_space<vmem>>, vector<1x8x8x128xbf16>
    %71 = vector.shape_cast %70 : vector<1x8x8x128xbf16> to vector<8x8x128xbf16>
    %72 = vector.shape_cast %71 : vector<8x8x128xbf16> to vector<64x128xbf16>
    %c0_82 = arith.constant 0 : index
    %c384 = arith.constant 384 : index
    %73 = vector.load %arg9[%c0_82, %c384] : memref<128x1152xbf16, #tpu.memory_space<vmem>>, vector<64x128xbf16>
    tpu.vector_store %arg9[%c0_82, %c384], %72 {strides = array<i32>} : memref<128x1152xbf16, #tpu.memory_space<vmem>>, vector<64x128xbf16>,
    %c1_83 = arith.constant 1 : index
    %c1_84 = arith.constant 1 : index
    %c0_85 = arith.constant 0 : index
    %c0_86 = arith.constant 0 : index
    %74 = vector.load %arg8[%c1_83, %c1_84, %c0_85, %c0_86] : memref<2x10x10x128xbf16, #tpu.memory_space<vmem>>, vector<1x8x8x128xbf16>
    %75 = vector.shape_cast %74 : vector<1x8x8x128xbf16> to vector<8x8x128xbf16>
    %76 = vector.shape_cast %75 : vector<8x8x128xbf16> to vector<64x128xbf16>
    %c64_87 = arith.constant 64 : index
    %c384_88 = arith.constant 384 : index
    %77 = vector.load %arg9[%c64_87, %c384_88] : memref<128x1152xbf16, #tpu.memory_space<vmem>>, vector<64x128xbf16>
    tpu.vector_store %arg9[%c64_87, %c384_88], %76 {strides = array<i32>} : memref<128x1152xbf16, #tpu.memory_space<vmem>>, vector<64x128xbf16>,
    %c0_89 = arith.constant 0 : index
    %c1_90 = arith.constant 1 : index
    %c1_91 = arith.constant 1 : index
    %c0_92 = arith.constant 0 : index
    %78 = vector.load %arg8[%c0_89, %c1_90, %c1_91, %c0_92] : memref<2x10x10x128xbf16, #tpu.memory_space<vmem>>, vector<1x8x8x128xbf16>
    %79 = vector.shape_cast %78 : vector<1x8x8x128xbf16> to vector<8x8x128xbf16>
    %80 = vector.shape_cast %79 : vector<8x8x128xbf16> to vector<64x128xbf16>
    %c0_93 = arith.constant 0 : index
    %c512 = arith.constant 512 : index
    %81 = vector.load %arg9[%c0_93, %c512] : memref<128x1152xbf16, #tpu.memory_space<vmem>>, vector<64x128xbf16>
    tpu.vector_store %arg9[%c0_93, %c512], %80 {strides = array<i32>} : memref<128x1152xbf16, #tpu.memory_space<vmem>>, vector<64x128xbf16>,
    %c1_94 = arith.constant 1 : index
    %c1_95 = arith.constant 1 : index
    %c1_96 = arith.constant 1 : index
    %c0_97 = arith.constant 0 : index
    %82 = vector.load %arg8[%c1_94, %c1_95, %c1_96, %c0_97] : memref<2x10x10x128xbf16, #tpu.memory_space<vmem>>, vector<1x8x8x128xbf16>
    %83 = vector.shape_cast %82 : vector<1x8x8x128xbf16> to vector<8x8x128xbf16>
    %84 = vector.shape_cast %83 : vector<8x8x128xbf16> to vector<64x128xbf16>
    %c64_98 = arith.constant 64 : index
    %c512_99 = arith.constant 512 : index
    %85 = vector.load %arg9[%c64_98, %c512_99] : memref<128x1152xbf16, #tpu.memory_space<vmem>>, vector<64x128xbf16>
    tpu.vector_store %arg9[%c64_98, %c512_99], %84 {strides = array<i32>} : memref<128x1152xbf16, #tpu.memory_space<vmem>>, vector<64x128xbf16>,
    %c0_100 = arith.constant 0 : index
    %c1_101 = arith.constant 1 : index
    %c2_102 = arith.constant 2 : index
    %c0_103 = arith.constant 0 : index
    %86 = vector.load %arg8[%c0_100, %c1_101, %c2_102, %c0_103] : memref<2x10x10x128xbf16, #tpu.memory_space<vmem>>, vector<1x8x8x128xbf16>
    %87 = vector.shape_cast %86 : vector<1x8x8x128xbf16> to vector<8x8x128xbf16>
    %88 = vector.shape_cast %87 : vector<8x8x128xbf16> to vector<64x128xbf16>
    %c0_104 = arith.constant 0 : index
    %c640 = arith.constant 640 : index
    %89 = vector.load %arg9[%c0_104, %c640] : memref<128x1152xbf16, #tpu.memory_space<vmem>>, vector<64x128xbf16>
    tpu.vector_store %arg9[%c0_104, %c640], %88 {strides = array<i32>} : memref<128x1152xbf16, #tpu.memory_space<vmem>>, vector<64x128xbf16>,
    %c1_105 = arith.constant 1 : index
    %c1_106 = arith.constant 1 : index
    %c2_107 = arith.constant 2 : index
    %c0_108 = arith.constant 0 : index
    %90 = vector.load %arg8[%c1_105, %c1_106, %c2_107, %c0_108] : memref<2x10x10x128xbf16, #tpu.memory_space<vmem>>, vector<1x8x8x128xbf16>
    %91 = vector.shape_cast %90 : vector<1x8x8x128xbf16> to vector<8x8x128xbf16>
    %92 = vector.shape_cast %91 : vector<8x8x128xbf16> to vector<64x128xbf16>
    %c64_109 = arith.constant 64 : index
    %c640_110 = arith.constant 640 : index
    %93 = vector.load %arg9[%c64_109, %c640_110] : memref<128x1152xbf16, #tpu.memory_space<vmem>>, vector<64x128xbf16>
    tpu.vector_store %arg9[%c64_109, %c640_110], %92 {strides = array<i32>} : memref<128x1152xbf16, #tpu.memory_space<vmem>>, vector<64x128xbf16>,
    %c0_111 = arith.constant 0 : index
    %c2_112 = arith.constant 2 : index
    %c0_113 = arith.constant 0 : index
    %c0_114 = arith.constant 0 : index
    %94 = vector.load %arg8[%c0_111, %c2_112, %c0_113, %c0_114] : memref<2x10x10x128xbf16, #tpu.memory_space<vmem>>, vector<1x8x8x128xbf16>
    %95 = vector.shape_cast %94 : vector<1x8x8x128xbf16> to vector<8x8x128xbf16>
    %96 = vector.shape_cast %95 : vector<8x8x128xbf16> to vector<64x128xbf16>
    %c0_115 = arith.constant 0 : index
    %c768 = arith.constant 768 : index
    %97 = vector.load %arg9[%c0_115, %c768] : memref<128x1152xbf16, #tpu.memory_space<vmem>>, vector<64x128xbf16>
    tpu.vector_store %arg9[%c0_115, %c768], %96 {strides = array<i32>} : memref<128x1152xbf16, #tpu.memory_space<vmem>>, vector<64x128xbf16>,
    %c1_116 = arith.constant 1 : index
    %c2_117 = arith.constant 2 : index
    %c0_118 = arith.constant 0 : index
    %c0_119 = arith.constant 0 : index
    %98 = vector.load %arg8[%c1_116, %c2_117, %c0_118, %c0_119] : memref<2x10x10x128xbf16, #tpu.memory_space<vmem>>, vector<1x8x8x128xbf16>
    %99 = vector.shape_cast %98 : vector<1x8x8x128xbf16> to vector<8x8x128xbf16>
    %100 = vector.shape_cast %99 : vector<8x8x128xbf16> to vector<64x128xbf16>
    %c64_120 = arith.constant 64 : index
    %c768_121 = arith.constant 768 : index
    %101 = vector.load %arg9[%c64_120, %c768_121] : memref<128x1152xbf16, #tpu.memory_space<vmem>>, vector<64x128xbf16>
    tpu.vector_store %arg9[%c64_120, %c768_121], %100 {strides = array<i32>} : memref<128x1152xbf16, #tpu.memory_space<vmem>>, vector<64x128xbf16>,
    %c0_122 = arith.constant 0 : index
    %c2_123 = arith.constant 2 : index
    %c1_124 = arith.constant 1 : index
    %c0_125 = arith.constant 0 : index
    %102 = vector.load %arg8[%c0_122, %c2_123, %c1_124, %c0_125] : memref<2x10x10x128xbf16, #tpu.memory_space<vmem>>, vector<1x8x8x128xbf16>
    %103 = vector.shape_cast %102 : vector<1x8x8x128xbf16> to vector<8x8x128xbf16>
    %104 = vector.shape_cast %103 : vector<8x8x128xbf16> to vector<64x128xbf16>
    %c0_126 = arith.constant 0 : index
    %c896 = arith.constant 896 : index
    %105 = vector.load %arg9[%c0_126, %c896] : memref<128x1152xbf16, #tpu.memory_space<vmem>>, vector<64x128xbf16>
    tpu.vector_store %arg9[%c0_126, %c896], %104 {strides = array<i32>} : memref<128x1152xbf16, #tpu.memory_space<vmem>>, vector<64x128xbf16>,
    %c1_127 = arith.constant 1 : index
    %c2_128 = arith.constant 2 : index
    %c1_129 = arith.constant 1 : index
    %c0_130 = arith.constant 0 : index
    %106 = vector.load %arg8[%c1_127, %c2_128, %c1_129, %c0_130] : memref<2x10x10x128xbf16, #tpu.memory_space<vmem>>, vector<1x8x8x128xbf16>
    %107 = vector.shape_cast %106 : vector<1x8x8x128xbf16> to vector<8x8x128xbf16>
    %108 = vector.shape_cast %107 : vector<8x8x128xbf16> to vector<64x128xbf16>
    %c64_131 = arith.constant 64 : index
    %c896_132 = arith.constant 896 : index
    %109 = vector.load %arg9[%c64_131, %c896_132] : memref<128x1152xbf16, #tpu.memory_space<vmem>>, vector<64x128xbf16>
    tpu.vector_store %arg9[%c64_131, %c896_132], %108 {strides = array<i32>} : memref<128x1152xbf16, #tpu.memory_space<vmem>>, vector<64x128xbf16>,
    %c0_133 = arith.constant 0 : index
    %c2_134 = arith.constant 2 : index
    %c2_135 = arith.constant 2 : index
    %c0_136 = arith.constant 0 : index
    %110 = vector.load %arg8[%c0_133, %c2_134, %c2_135, %c0_136] : memref<2x10x10x128xbf16, #tpu.memory_space<vmem>>, vector<1x8x8x128xbf16>
    %111 = vector.shape_cast %110 : vector<1x8x8x128xbf16> to vector<8x8x128xbf16>
    %112 = vector.shape_cast %111 : vector<8x8x128xbf16> to vector<64x128xbf16>
    %c0_137 = arith.constant 0 : index
    %c1024 = arith.constant 1024 : index
    %113 = vector.load %arg9[%c0_137, %c1024] : memref<128x1152xbf16, #tpu.memory_space<vmem>>, vector<64x128xbf16>
    tpu.vector_store %arg9[%c0_137, %c1024], %112 {strides = array<i32>} : memref<128x1152xbf16, #tpu.memory_space<vmem>>, vector<64x128xbf16>,
    %c1_138 = arith.constant 1 : index
    %c2_139 = arith.constant 2 : index
    %c2_140 = arith.constant 2 : index
    %c0_141 = arith.constant 0 : index
    %114 = vector.load %arg8[%c1_138, %c2_139, %c2_140, %c0_141] : memref<2x10x10x128xbf16, #tpu.memory_space<vmem>>, vector<1x8x8x128xbf16>
    %115 = vector.shape_cast %114 : vector<1x8x8x128xbf16> to vector<8x8x128xbf16>
    %116 = vector.shape_cast %115 : vector<8x8x128xbf16> to vector<64x128xbf16>
    %c64_142 = arith.constant 64 : index
    %c1024_143 = arith.constant 1024 : index
    %117 = vector.load %arg9[%c64_142, %c1024_143] : memref<128x1152xbf16, #tpu.memory_space<vmem>>, vector<64x128xbf16>
    tpu.vector_store %arg9[%c64_142, %c1024_143], %116 {strides = array<i32>} : memref<128x1152xbf16, #tpu.memory_space<vmem>>, vector<64x128xbf16>,
    %c0_144 = arith.constant 0 : index
    %c0_145 = arith.constant 0 : index
    %118 = vector.load %arg9[%c0_144, %c0_145] : memref<128x1152xbf16, #tpu.memory_space<vmem>>, vector<128x1152xbf16>
    %c0_146 = arith.constant 0 : index
    %c0_147 = arith.constant 0 : index
    %119 = vector.load %arg4[%c0_146, %c0_147] : memref<1152x128xbf16, #tpu.memory_space<vmem>>, vector<1152x128xbf16>
    %cst_148 = arith.constant dense<0.000000e+00> : vector<128x128xf32>
    %120 = tpu.matmul %118, %119, %cst_148 {dimension_numbers = #tpu.dot_dimension_numbers<[1], [0], [0], [1], [0, 0, 1, 1], [], []>} : vector<128x1152xbf16>, vector<1152x128xbf16>, vector<128x128xf32> -> vector<128x128xf32>
    %c0_149 = arith.constant 0 : index
    %c0_150 = arith.constant 0 : index
    %121 = vector.load %arg5[%c0_149, %c0_150] : memref<1x128xf32, #tpu.memory_space<vmem>>, vector<1x128xf32>
    %122 = vector.broadcast %121 : vector<1x128xf32> to vector<128x128xf32>
    %123 = arith.addf %120, %122 : vector<128x128xf32>
    %c0_151 = arith.constant 0 : index
    %c0_152 = arith.constant 0 : index
    %124 = vector.load %arg6[%c0_151, %c0_152] : memref<128x128xbf16, #tpu.memory_space<vmem>>, vector<128x128xbf16>
    %125 = arith.extf %124 : vector<128x128xbf16> to vector<128x128xf32>
    %126 = arith.addf %123, %125 : vector<128x128xf32>
    %cst_153 = arith.constant 0.00999999977 : f32
    %127 = vector.broadcast %cst_153 : f32 to vector<128x128xf32>
    %128 = arith.mulf %127, %126 : vector<128x128xf32>
    %129 = arith.maximumf %126, %128 : vector<128x128xf32>
    %c0_154 = arith.constant 0 : index
    %c0_155 = arith.constant 0 : index
    %130 = vector.load %arg7[%c0_154, %c0_155] : memref<128x128xf32, #tpu.memory_space<vmem>>, vector<128x128xf32>
    tpu.vector_store %arg7[%c0_154, %c0_155], %129 {strides = array<i32>} : memref<128x128xf32, #tpu.memory_space<vmem>>, vector<128x128xf32>,
    return
  }
  func.func @transform_0(%arg0: i32) -> (i32, i32) {
    %c0_i32 = arith.constant 0 : i32
    %c0_i32_0 = arith.constant 0 : i32
    return %arg0, %c0_i32 : i32, i32
  }
  func.func @transform_1(%arg0: i32) -> (i32, i32) {
    %c0_i32 = arith.constant 0 : i32
    %c0_i32_0 = arith.constant 0 : i32
    %c0_i32_1 = arith.constant 0 : i32
    return %c0_i32, %c0_i32_0 : i32, i32
  }
  func.func @transform_2(%arg0: i32) -> (i32, i32) {
    %c0_i32 = arith.constant 0 : i32
    %c0_i32_0 = arith.constant 0 : i32
    %c0_i32_1 = arith.constant 0 : i32
    return %c0_i32, %c0_i32_0 : i32, i32
  }
  func.func @transform_3(%arg0: i32) -> (i32, i32) {
    %c0_i32 = arith.constant 0 : i32
    %c0_i32_0 = arith.constant 0 : i32
    %c0_i32_1 = arith.constant 0 : i32
    return %c0_i32, %c0_i32_0 : i32, i32
  }
  func.func @transform_4(%arg0: i32) -> (i32, i32) {
    %c0_i32 = arith.constant 0 : i32
    %c0_i32_0 = arith.constant 0 : i32
    %c0_i32_1 = arith.constant 0 : i32
    return %c0_i32, %c0_i32_0 : i32, i32
  }
  func.func @transform_5(%arg0: i32) -> (i32, i32) {
    %c0_i32 = arith.constant 0 : i32
    %c0_i32_0 = arith.constant 0 : i32
    return %arg0, %c0_i32 : i32, i32
  }
  func.func @transform_6(%arg0: i32) -> (i32, i32) {
    %c0_i32 = arith.constant 0 : i32
    %c0_i32_0 = arith.constant 0 : i32
    return %arg0, %c0_i32 : i32, i32
  }
}

</mosaic_0001>

<llo_original>
// kernel: tpu_custom_call.1
$region0: #{tpu_custom_call.1}
  #allocation0 [shape = 'u32[]', space=smem, size = 0x4, offset = 0x4, fixed_abs, tag = 'smem constant byte address 0x4 - core index']
  #allocation1 [shape = 'u32[144,128]{1,0:T(1,128)}', space=vmem, size = 0x12000, scoped, tag = 'internal scratch']
  #allocation2 [shape = 'bf16[2,10,10,128]{3,2,1,0:T(8,128)(2,1)}', space=vmem, size = 0x14000, scoped, tag = 'scratch operand']
  #allocation3 [shape = 'bf16[128,1152]{1,0:T(8,128)(2,1)}', space=vmem, size = 0x48000, scoped, tag = 'scratch operand']
  %s0 = inlined_call_operand.hbm [shape: bf16[128,128], index: 0, kind: input, shape index: {}]
  %s1 = inlined_call_operand.hbm [shape: bf16[128,128], index: 1, kind: input, shape index: {}]
  %s2 = inlined_call_operand.vmem [shape: f32[1,128], index: 2, kind: input, shape index: {}]
  %s3 = inlined_call_operand.hbm [shape: bf16[1152,128], index: 3, kind: input, shape index: {}]
  %s4 = inlined_call_operand.vmem [shape: f32[1,128], index: 4, kind: input, shape index: {}]
  %s5 = inlined_call_operand.hbm [shape: bf16[128,128], index: 5, kind: input, shape index: {}]
  %s6 = inlined_call_operand.hbm [shape: f32[128,128], index: 6, kind: output, shape index: {}]
  %s7 = sld [smem:[#allocation0]]
  $region50: #{tpu_custom_call.1} parent=0
    _
  %s9 = ssub.s32 1, %s7
  %s10 = scalar_select 0, %s9, %s7
  $region1: #{tpu_custom_call.1} parent=0
    #allocation4 [shape = 'u8[32768]{0}', space=vmem, size = 0x8000, scoped, tag = 'input window, operand 0, single buffered']
    #allocation5 [shape = 's32[1]{0}', space=sflag, size = 0x4, scoped, tag = 'scoped memory for tpu_custom_call.1']
    #allocation6 [shape = 's32[1]{0}', space=sflag, size = 0x4, scoped, tag = 'scoped memory for tpu_custom_call.1']
    #allocation7 [shape = 'u8[32768]{0}', space=vmem, size = 0x8000, scoped, tag = 'input window, operand 1, single buffered']
    #allocation8 [shape = 's32[1]{0}', space=sflag, size = 0x4, scoped, tag = 'scoped memory for tpu_custom_call.1']
    #allocation9 [shape = 'u8[294912]{0}', space=vmem, size = 0x48000, scoped, tag = 'input window, operand 3, single buffered']
    #allocation10 [shape = 'u8[32768]{0}', space=vmem, size = 0x8000, scoped, tag = 'input window, operand 5, single buffered']
    #allocation11 [shape = 's32[1]{0}', space=sflag, size = 0x4, scoped, tag = 'scoped memory for tpu_custom_call.1']
    #allocation12 [shape = 'u8[65536]{0}', space=vmem, size = 0x10000, scoped, tag = 'output window, operand 0, single buffered']
    %11 = vsyncpa [#allocation5], 0
    %12 = vsyncpa [#allocation8], 0
    %13 = vsyncpa [#allocation11], 0
    %14 = vsyncpa [#allocation6], 0
    // Predicated region
    $region2: #{tpu_custom_call.1} parent=1 // pred_check
      _
    $region3: #{tpu_custom_call.1} parent=1 // pred_check_branch
      %16 = sbr.rel (0) target = $region5
    $region4: #{tpu_custom_call.1} parent=1 // pred_region
      %s18 = ssub.s32 1024, 1024
      %19 = vsyncadd [#allocation5], %s18
      %s20 = sshll.u32 [#allocation4], 4
      %s21 = int_to_ptr.vmem [resolvable:$true] %s20
      %26 = dma.hbm_to_vmem [thread:$0]  %s0, 1024, %s21, [#allocation5], 64, 64, 4
    $region5: #{tpu_custom_call.1} parent=1 // pred_fallthru
      _
    // Predicated region
    $region6: #{tpu_custom_call.1} parent=1 // pred_check
      _
    $region7: #{tpu_custom_call.1} parent=1 // pred_check_branch
      %28 = sbr.rel (0) target = $region9
    $region8: #{tpu_custom_call.1} parent=1 // pred_region
      %s30 = ssub.s32 1024, 1024
      %31 = vsyncadd [#allocation8], %s30
      %s32 = sshll.u32 [#allocation7], 4
      %s33 = int_to_ptr.vmem [resolvable:$true] %s32
      %38 = dma.hbm_to_vmem [thread:$0]  %s1, 1024, %s33, [#allocation8], 64, 64, 4
    $region9: #{tpu_custom_call.1} parent=1 // pred_fallthru
      _
    // Predicated region
    $region10: #{tpu_custom_call.1} parent=1 // pred_check
      _
    $region11: #{tpu_custom_call.1} parent=1 // pred_check_branch
      %40 = sbr.rel (0) target = $region13
    $region12: #{tpu_custom_call.1} parent=1 // pred_region
      _
    $region13: #{tpu_custom_call.1} parent=1 // pred_fallthru
      _
    // Predicated region
    $region14: #{tpu_custom_call.1} parent=1 // pred_check
      _
    $region15: #{tpu_custom_call.1} parent=1 // pred_check_branch
      %42 = sbr.rel (0) target = $region17
    $region16: #{tpu_custom_call.1} parent=1 // pred_region
      %s44 = ssub.s32 9216, 9216
      %45 = vsyncadd [#allocation8], %s44
      %s46 = sshll.u32 [#allocation9], 4
      %s47 = int_to_ptr.vmem [resolvable:$true] %s46
      %52 = dma.hbm_to_vmem [thread:$0]  %s3, 9216, %s47, [#allocation8], 64, 64, 4
    $region17: #{tpu_custom_call.1} parent=1 // pred_fallthru
      _
    // Predicated region
    $region18: #{tpu_custom_call.1} parent=1 // pred_check
      _
    $region19: #{tpu_custom_call.1} parent=1 // pred_check_branch
      %54 = sbr.rel (0) target = $region21
    $region20: #{tpu_custom_call.1} parent=1 // pred_region
      _
    $region21: #{tpu_custom_call.1} parent=1 // pred_fallthru
      _
    // Predicated region
    $region22: #{tpu_custom_call.1} parent=1 // pred_check
      _
    $region23: #{tpu_custom_call.1} parent=1 // pred_check_branch
      %56 = sbr.rel (0) target = $region25
    $region24: #{tpu_custom_call.1} parent=1 // pred_region
      %s58 = ssub.s32 1024, 1024
      %59 = vsyncadd [#allocation11], %s58
      %s60 = sshll.u32 [#allocation10], 4
      %s61 = int_to_ptr.vmem [resolvable:$true] %s60
      %66 = dma.hbm_to_vmem [thread:$0]  %s5, 1024, %s61, [#allocation11], 64, 64, 4
    $region25: #{tpu_custom_call.1} parent=1 // pred_fallthru
      _
    // Predicated region
    $region26: #{tpu_custom_call.1} parent=1 // pred_check
      _
    $region27: #{tpu_custom_call.1} parent=1 // pred_check_branch
      %68 = sbr.rel (0) target = $region29
    $region28: #{tpu_custom_call.1} parent=1 // pred_region
      %69 = dma.done [#allocation5], 1024
    $region29: #{tpu_custom_call.1} parent=1 // pred_fallthru
      _
    // Predicated region
    $region30: #{tpu_custom_call.1} parent=1 // pred_check
      _
    $region31: #{tpu_custom_call.1} parent=1 // pred_check_branch
      %71 = sbr.rel (0) target = $region33
    $region32: #{tpu_custom_call.1} parent=1 // pred_region
      %72 = dma.done [#allocation8], 1024
    $region33: #{tpu_custom_call.1} parent=1 // pred_fallthru
      _
    // Predicated region
    $region34: #{tpu_custom_call.1} parent=1 // pred_check
      _
    $region35: #{tpu_custom_call.1} parent=1 // pred_check_branch
      %74 = sbr.rel (0) target = $region37
    $region36: #{tpu_custom_call.1} parent=1 // pred_region
      %75 = dma.done [#allocation8], 9216
    $region37: #{tpu_custom_call.1} parent=1 // pred_fallthru
      _
    // Predicated region
    $region38: #{tpu_custom_call.1} parent=1 // pred_check
      _
    $region39: #{tpu_custom_call.1} parent=1 // pred_check_branch
      %77 = sbr.rel (0) target = $region41
    $region40: #{tpu_custom_call.1} parent=1 // pred_region
      %78 = dma.done [#allocation11], 1024
    $region41: #{tpu_custom_call.1} parent=1 // pred_fallthru
      _
    %v80 = vld [vmem:[#allocation4] sm:$0xf]
    %v81 = vld [vmem:[#allocation4 + $0x4] sm:$0xf]
    %v82 = vld [vmem:[#allocation4 + $0x8] sm:$0xf]
    %v83 = vld [vmem:[#allocation4 + $0xc] sm:$0xf]
    %v84 = vld [vmem:[#allocation4 + $0x10] sm:$0xf]
    %v85 = vld [vmem:[#allocation4 + $0x14] sm:$0xf]
    %v86 = vld [vmem:[#allocation4 + $0x18] sm:$0xf]
    %v87 = vld [vmem:[#allocation4 + $0x1c] sm:$0xf]
    %v88 = vld [vmem:[#allocation4 + $0x20] sm:$0xf]
    %v89 = vld [vmem:[#allocation4 + $0x24] sm:$0xf]
    %v90 = vld [vmem:[#allocation4 + $0x28] sm:$0xf]
    %v91 = vld [vmem:[#allocation4 + $0x2c] sm:$0xf]
    %v92 = vld [vmem:[#allocation4 + $0x30] sm:$0xf]
    %v93 = vld [vmem:[#allocation4 + $0x34] sm:$0xf]
    %v94 = vld [vmem:[#allocation4 + $0x38] sm:$0xf]
    %v95 = vld [vmem:[#allocation4 + $0x3c] sm:$0xf]
    %v96 = vld [vmem:[#allocation7] sm:$0xf]
    %v97 = vld [vmem:[#allocation7 + $0x4] sm:$0xf]
    %v98 = vld [vmem:[#allocation7 + $0x8] sm:$0xf]
    %v99 = vld [vmem:[#allocation7 + $0xc] sm:$0xf]
    %v100 = vld [vmem:[#allocation7 + $0x10] sm:$0xf]
    %v101 = vld [vmem:[#allocation7 + $0x14] sm:$0xf]
    %v102 = vld [vmem:[#allocation7 + $0x18] sm:$0xf]
    %v103 = vld [vmem:[#allocation7 + $0x1c] sm:$0xf]
    %v104 = vld [vmem:[#allocation7 + $0x20] sm:$0xf]
    %v105 = vld [vmem:[#allocation7 + $0x24] sm:$0xf]
    %v106 = vld [vmem:[#allocation7 + $0x28] sm:$0xf]
    %v107 = vld [vmem:[#allocation7 + $0x2c] sm:$0xf]
    %v108 = vld [vmem:[#allocation7 + $0x30] sm:$0xf]
    %v109 = vld [vmem:[#allocation7 + $0x34] sm:$0xf]
    %v110 = vld [vmem:[#allocation7 + $0x38] sm:$0xf]
    %v111 = vld [vmem:[#allocation7 + $0x3c] sm:$0xf]
    %v112 = vld [vmem:[%s2] sm:$0x1]
    %v114 = vlaneseq
    %v115 = vshrl.u32 %v114, 7
    %v116 = vsub.s32 0, %v115
    %v117 = vrot.slane %v112, %v116
    %v135 = vunpack.c.l.b16 %v80
    %v136 = vunpack.c.l.b16 %v81
    %v137 = vunpack.c.l.b16 %v82
    %v138 = vunpack.c.l.b16 %v83
    %v139 = vunpack.c.l.b16 %v84
    %v140 = vunpack.c.l.b16 %v85
    %v141 = vunpack.c.l.b16 %v86
    %v142 = vunpack.c.l.b16 %v87
    %v143 = vunpack.c.l.b16 %v88
    %v144 = vunpack.c.l.b16 %v89
    %v145 = vunpack.c.l.b16 %v90
    %v146 = vunpack.c.l.b16 %v91
    %v147 = vunpack.c.l.b16 %v92
    %v148 = vunpack.c.l.b16 %v93
    %v149 = vunpack.c.l.b16 %v94
    %v150 = vunpack.c.l.b16 %v95
    %v151 = vpack.c.b16 %v136, %v135
    %v152 = vpack.c.b16 %v138, %v137
    %v153 = vpack.c.b16 %v140, %v139
    %v154 = vpack.c.b16 %v142, %v141
    %v155 = vpack.c.b16 %v144, %v143
    %v156 = vpack.c.b16 %v146, %v145
    %v157 = vpack.c.b16 %v148, %v147
    %v158 = vpack.c.b16 %v150, %v149
    %v183 = vunpack.c.l.b16 %v96
    %v184 = vunpack.c.l.b16 %v97
    %v185 = vunpack.c.l.b16 %v98
    %v186 = vunpack.c.l.b16 %v99
    %v187 = vunpack.c.l.b16 %v100
    %v188 = vunpack.c.l.b16 %v101
    %v189 = vunpack.c.l.b16 %v102
    %v190 = vunpack.c.l.b16 %v103
    %v191 = vunpack.c.l.b16 %v104
    %v192 = vunpack.c.l.b16 %v105
    %v193 = vunpack.c.l.b16 %v106
    %v194 = vunpack.c.l.b16 %v107
    %v195 = vunpack.c.l.b16 %v108
    %v196 = vunpack.c.l.b16 %v109
    %v197 = vunpack.c.l.b16 %v110
    %v198 = vunpack.c.l.b16 %v111
    %v199 = vpack.c.b16 %v184, %v183
    %v200 = vpack.c.b16 %v186, %v185
    %v201 = vpack.c.b16 %v188, %v187
    %v202 = vpack.c.b16 %v190, %v189
    %v203 = vpack.c.b16 %v192, %v191
    %v204 = vpack.c.b16 %v194, %v193
    %v205 = vpack.c.b16 %v196, %v195
    %v206 = vpack.c.b16 %v198, %v197
    %215 = vmatprep.subr.bf16.mxu0 0
    %216 = vmatpush1.bf16.msra.mxu0 %v206
    %217 = vmatprep.subr.bf16.mxu0 0
    %218 = vmatpush1.bf16.msra.mxu0 %v205
    %219 = vmatprep.subr.bf16.mxu0 0
    %220 = vmatpush1.bf16.msra.mxu0 %v204
    %221 = vmatprep.subr.bf16.mxu0 0
    %222 = vmatpush1.bf16.msra.mxu0 %v203
    %223 = vmatprep.subr.bf16.mxu0 0
    %224 = vmatpush1.bf16.msra.mxu0 %v202
    %225 = vmatprep.subr.bf16.mxu0 0
    %226 = vmatpush1.bf16.msra.mxu0 %v201
    %227 = vmatprep.subr.bf16.mxu0 0
    %228 = vmatpush1.bf16.msra.mxu0 %v200
    %229 = vmatprep.subr.bf16.mxu0 0
    %230 = vmatpush1.bf16.msra.mxu0 %v199
    %231 = vmatprep.subr.bf16.mxu0 0
    %232 = vmatpush2.bf16.msra.mxu0 0
    %233 = vmatprep.subr.bf16.mxu0 0
    %234 = vmatpush2.bf16.msra.mxu0 0
    %235 = vmatprep.subr.bf16.mxu0 0
    %236 = vmatpush2.bf16.msra.mxu0 0
    %237 = vmatprep.subr.bf16.mxu0 0
    %238 = vmatpush2.bf16.msra.mxu0 0
    %239 = vmatprep.subr.bf16.mxu0 0
    %240 = vmatpush2.bf16.msra.mxu0 0
    %241 = vmatprep.subr.bf16.mxu0 0
    %242 = vmatpush2.bf16.msra.mxu0 0
    %243 = vmatprep.subr.bf16.mxu0 0
    %244 = vmatpush2.bf16.msra.mxu0 0
    %245 = vmatprep.subr.bf16.mxu0 0
    %246 = vmatpush2.bf16.msra.mxu0 0
    %247 = vmatprep.mubr.bf16.mxu0 0
    %248 = vmatmul.mubr.bf16.gmra.mxu0 %v151
    %v249 = vpop.f32.mrf.mxu0
    %v250 = vadd.f32 %v117, %v249
    %v251 = vpop.f32.mrf.mxu0
    %v252 = vpop.f32.mrf.mxu0
    %v253 = vadd.f32 %v117, %v252
    %v254 = vpop.f32.mrf.mxu0
    %255 = vmatprep.mubr.bf16.mxu0 0
    %256 = vmatmul.mubr.bf16.gmra.mxu0 %v152
    %v257 = vpop.f32.mrf.mxu0
    %v258 = vadd.f32 %v117, %v257
    %v259 = vpop.f32.mrf.mxu0
    %v260 = vpop.f32.mrf.mxu0
    %v261 = vadd.f32 %v117, %v260
    %v262 = vpop.f32.mrf.mxu0
    %263 = vmatprep.mubr.bf16.mxu0 0
    %264 = vmatmul.mubr.bf16.gmra.mxu0 %v153
    %v265 = vpop.f32.mrf.mxu0
    %v266 = vadd.f32 %v117, %v265
    %v267 = vpop.f32.mrf.mxu0
    %v268 = vpop.f32.mrf.mxu0
    %v269 = vadd.f32 %v117, %v268
    %v270 = vpop.f32.mrf.mxu0
    %271 = vmatprep.mubr.bf16.mxu0 0
    %272 = vmatmul.mubr.bf16.gmra.mxu0 %v154
    %v273 = vpop.f32.mrf.mxu0
    %v274 = vadd.f32 %v117, %v273
    %v275 = vpop.f32.mrf.mxu0
    %v276 = vpop.f32.mrf.mxu0
    %v277 = vadd.f32 %v117, %v276
    %v278 = vpop.f32.mrf.mxu0
    %279 = vmatprep.mubr.bf16.mxu0 0
    %280 = vmatmul.mubr.bf16.gmra.mxu0 %v155
    %v281 = vpop.f32.mrf.mxu0
    %v282 = vadd.f32 %v117, %v281
    %v283 = vpop.f32.mrf.mxu0
    %v284 = vpop.f32.mrf.mxu0
    %v285 = vadd.f32 %v117, %v284
    %v286 = vpop.f32.mrf.mxu0
    %287 = vmatprep.mubr.bf16.mxu0 0
    %288 = vmatmul.mubr.bf16.gmra.mxu0 %v156
    %v289 = vpop.f32.mrf.mxu0
    %v290 = vadd.f32 %v117, %v289
    %v291 = vpop.f32.mrf.mxu0
    %v292 = vpop.f32.mrf.mxu0
    %v293 = vadd.f32 %v117, %v292
    %v294 = vpop.f32.mrf.mxu0
    %295 = vmatprep.mubr.bf16.mxu0 0
    %296 = vmatmul.mubr.bf16.gmra.mxu0 %v157
    %v297 = vpop.f32.mrf.mxu0
    %v298 = vadd.f32 %v117, %v297
    %v299 = vpop.f32.mrf.mxu0
    %v300 = vpop.f32.mrf.mxu0
    %v301 = vadd.f32 %v117, %v300
    %v302 = vpop.f32.mrf.mxu0
    %303 = vmatprep.mubr.bf16.mxu0 0
    %304 = vmatmul.mubr.bf16.gmra.mxu0 %v158
    %v305 = vpop.f32.mrf.mxu0
    %v306 = vadd.f32 %v117, %v305
    %v307 = vpop.f32.mrf.mxu0
    %v308 = vpop.f32.mrf.mxu0
    %v309 = vadd.f32 %v117, %v308
    %v310 = vpop.f32.mrf.mxu0
    %311 = vdwg.mxu0
    %v312 = vmul.f32 %v250, 0.01
    %v313 = vmul.f32 %v253, 0.01
    %v314 = vmul.f32 %v258, 0.01
    %v315 = vmul.f32 %v261, 0.01
    %v316 = vmul.f32 %v266, 0.01
    %v317 = vmul.f32 %v269, 0.01
    %v318 = vmul.f32 %v274, 0.01
    %v319 = vmul.f32 %v277, 0.01
    %v320 = vmul.f32 %v282, 0.01
    %v321 = vmul.f32 %v285, 0.01
    %v322 = vmul.f32 %v290, 0.01
    %v323 = vmul.f32 %v293, 0.01
    %v324 = vmul.f32 %v298, 0.01
    %v325 = vmul.f32 %v301, 0.01
    %v326 = vmul.f32 %v306, 0.01
    %v327 = vmul.f32 %v309, 0.01
    %v328 = vmax.f32 %v250, %v312
    %v329 = vmax.f32 %v253, %v313
    %v330 = vmax.f32 %v258, %v314
    %v331 = vmax.f32 %v261, %v315
    %v332 = vmax.f32 %v266, %v316
    %v333 = vmax.f32 %v269, %v317
    %v334 = vmax.f32 %v274, %v318
    %v335 = vmax.f32 %v277, %v319
    %v336 = vmax.f32 %v282, %v320
    %v337 = vmax.f32 %v285, %v321
    %v338 = vmax.f32 %v290, %v322
    %v339 = vmax.f32 %v293, %v323
    %v340 = vmax.f32 %v298, %v324
    %v341 = vmax.f32 %v301, %v325
    %v342 = vmax.f32 %v306, %v326
    %v343 = vmax.f32 %v309, %v327
    %v344 = vpack.c.bf16 %v329, %v328
    %v345 = vpack.c.bf16 %v331, %v330
    %v346 = vpack.c.bf16 %v333, %v332
    %v347 = vpack.c.bf16 %v335, %v334
    %v348 = vpack.c.bf16 %v337, %v336
    %v349 = vpack.c.bf16 %v339, %v338
    %v350 = vpack.c.bf16 %v341, %v340
    %v351 = vpack.c.bf16 %v343, %v342
    %352 = vst [vmem:[#allocation2] sm:$0xf] 0
    %353 = vst [vmem:[#allocation2 + $0x4] sm:$0x1] 0
    %s354 = scalar_lea.vmem [#allocation2], 72
    %355 = vst [vmem:[%s354] sm:$0xf] 0
    %356 = vst [vmem:[%s354 + $0x4] sm:$0x1] 0
    %s357 = scalar_lea.vmem [#allocation2], 8
    %vm358 = vcmask 1040384
    %vm359 = vsmask.f32 256
    %vm360 = vmand %vm358, %vm359
    %v361 = vld [vmem:[%s357] sm:$0x1]
    %v362 = vsel %vm360, 0, %v361
    %363 = vst [vmem:[%s357] sm:$0x1] %v362
    %v364 = vld [vmem:[%s357 + $0x8] sm:$0x1]
    %v365 = vsel %vm360, 0, %v364
    %366 = vst [vmem:[%s357 + $0x8] sm:$0x1] %v365
    %v367 = vld [vmem:[%s357 + $0x10] sm:$0x1]
    %v368 = vsel %vm360, 0, %v367
    %369 = vst [vmem:[%s357 + $0x10] sm:$0x1] %v368
    %v370 = vld [vmem:[%s357 + $0x18] sm:$0x1]
    %v371 = vsel %vm360, 0, %v370
    %372 = vst [vmem:[%s357 + $0x18] sm:$0x1] %v371
    %v373 = vld [vmem:[%s357 + $0x20] sm:$0x1]
    %v374 = vsel %vm360, 0, %v373
    %375 = vst [vmem:[%s357 + $0x20] sm:$0x1] %v374
    %v376 = vld [vmem:[%s357 + $0x28] sm:$0x1]
    %v377 = vsel %vm360, 0, %v376
    %378 = vst [vmem:[%s357 + $0x28] sm:$0x1] %v377
    %v379 = vld [vmem:[%s357 + $0x30] sm:$0x1]
    %v380 = vsel %vm360, 0, %v379
    %381 = vst [vmem:[%s357 + $0x30] sm:$0x1] %v380
    %v382 = vld [vmem:[%s357 + $0x38] sm:$0x1]
    %v383 = vsel %vm360, 0, %v382
    %384 = vst [vmem:[%s357 + $0x38] sm:$0x1] %v383
    %vm385 = vsmask.f32 7938
    %vm386 = vmand %vm358, %vm385
    %v387 = vld [vmem:[%s357 + $0x4] sm:$0x1]
    %v388 = vsel %vm386, 0, %v387
    %389 = vst [vmem:[%s357 + $0x4] sm:$0x1] %v388
    %v390 = vld [vmem:[%s357 + $0xc] sm:$0x1]
    %v391 = vsel %vm386, 0, %v390
    %392 = vst [vmem:[%s357 + $0xc] sm:$0x1] %v391
    %v393 = vld [vmem:[%s357 + $0x14] sm:$0x1]
    %v394 = vsel %vm386, 0, %v393
    %395 = vst [vmem:[%s357 + $0x14] sm:$0x1] %v394
    %v396 = vld [vmem:[%s357 + $0x1c] sm:$0x1]
    %v397 = vsel %vm386, 0, %v396
    %398 = vst [vmem:[%s357 + $0x1c] sm:$0x1] %v397
    %v399 = vld [vmem:[%s357 + $0x24] sm:$0x1]
    %v400 = vsel %vm386, 0, %v399
    %401 = vst [vmem:[%s357 + $0x24] sm:$0x1] %v400
    %v402 = vld [vmem:[%s357 + $0x2c] sm:$0x1]
    %v403 = vsel %vm386, 0, %v402
    %404 = vst [vmem:[%s357 + $0x2c] sm:$0x1] %v403
    %v405 = vld [vmem:[%s357 + $0x34] sm:$0x1]
    %v406 = vsel %vm386, 0, %v405
    %407 = vst [vmem:[%s357 + $0x34] sm:$0x1] %v406
    %v408 = vld [vmem:[%s357 + $0x3c] sm:$0x1]
    %v409 = vsel %vm386, 0, %v408
    %410 = vst [vmem:[%s357 + $0x3c] sm:$0x1] %v409
    %v415 = vunpack.c.l.b16 %v344
    %v416 = vunpack.c.h.b16 %v344
    %v417 = vunpack.c.l.b16 %v345
    %v418 = vunpack.c.h.b16 %v345
    %v419 = vunpack.c.l.b16 %v346
    %v420 = vunpack.c.h.b16 %v346
    %v421 = vunpack.c.l.b16 %v347
    %v422 = vunpack.c.h.b16 %v347
    %v423 = vpack.c.b16 %v415, %v415
    %v424 = vpack.c.b16 %v416, %v416
    %v425 = vpack.c.b16 %v417, %v417
    %v426 = vpack.c.b16 %v418, %v418
    %v427 = vpack.c.b16 %v419, %v419
    %v428 = vpack.c.b16 %v420, %v420
    %v429 = vpack.c.b16 %v421, %v421
    %v430 = vpack.c.b16 %v422, %v422
    %v432 = vshrl.u32 %v423, 16
    %v434 = vrot.slane %v432, 7
    %v435 = vshll.u32 %v423, 16
    %v437 = vor.u32 %v434, %v435
    %v438 = vrot.slane %v434, 4
    %v440 = vshrl.u32 %v424, 16
    %v442 = vrot.slane %v440, 7
    %v443 = vshll.u32 %v424, 16
    %v445 = vor.u32 %v442, %v443
    %v446 = vrot.slane %v442, 4
    %v448 = vshrl.u32 %v425, 16
    %v450 = vrot.slane %v448, 7
    %v451 = vshll.u32 %v425, 16
    %v453 = vor.u32 %v450, %v451
    %v454 = vrot.slane %v450, 4
    %v456 = vshrl.u32 %v426, 16
    %v458 = vrot.slane %v456, 7
    %v459 = vshll.u32 %v426, 16
    %v461 = vor.u32 %v458, %v459
    %v462 = vrot.slane %v458, 4
    %v464 = vshrl.u32 %v427, 16
    %v466 = vrot.slane %v464, 7
    %v467 = vshll.u32 %v427, 16
    %v469 = vor.u32 %v466, %v467
    %v470 = vrot.slane %v466, 4
    %v472 = vshrl.u32 %v428, 16
    %v474 = vrot.slane %v472, 7
    %v475 = vshll.u32 %v428, 16
    %v477 = vor.u32 %v474, %v475
    %v478 = vrot.slane %v474, 4
    %v480 = vshrl.u32 %v429, 16
    %v482 = vrot.slane %v480, 7
    %v483 = vshll.u32 %v429, 16
    %v485 = vor.u32 %v482, %v483
    %v486 = vrot.slane %v482, 4
    %v488 = vshrl.u32 %v430, 16
    %v490 = vrot.slane %v488, 7
    %v491 = vshll.u32 %v430, 16
    %v493 = vor.u32 %v490, %v491
    %v494 = vrot.slane %v490, 4
    %vm511 = vcmask 1043456
    %vm512 = vmand %vm511, %vm385
    %v513 = vld [vmem:[%s357] sm:$0xf]
    %v514 = vsel %vm512, %v437, %v513
    %515 = vst [vmem:[%s357] sm:$0xf] %v514
    %v516 = vld [vmem:[%s357 + $0x4] sm:$0x1]
    %v517 = vsel %vm360, %v438, %v516
    %518 = vst [vmem:[%s357 + $0x4] sm:$0x1] %v517
    %v519 = vld [vmem:[%s357 + $0x8] sm:$0xf]
    %v520 = vsel %vm512, %v445, %v519
    %521 = vst [vmem:[%s357 + $0x8] sm:$0xf] %v520
    %v522 = vld [vmem:[%s357 + $0xc] sm:$0x1]
    %v523 = vsel %vm360, %v446, %v522
    %524 = vst [vmem:[%s357 + $0xc] sm:$0x1] %v523
    %v525 = vld [vmem:[%s357 + $0x10] sm:$0xf]
    %v526 = vsel %vm512, %v453, %v525
    %527 = vst [vmem:[%s357 + $0x10] sm:$0xf] %v526
    %v528 = vld [vmem:[%s357 + $0x14] sm:$0x1]
    %v529 = vsel %vm360, %v454, %v528
    %530 = vst [vmem:[%s357 + $0x14] sm:$0x1] %v529
    %v531 = vld [vmem:[%s357 + $0x18] sm:$0xf]
    %v532 = vsel %vm512, %v461, %v531
    %533 = vst [vmem:[%s357 + $0x18] sm:$0xf] %v532
    %v534 = vld [vmem:[%s357 + $0x1c] sm:$0x1]
    %v535 = vsel %vm360, %v462, %v534
    %536 = vst [vmem:[%s357 + $0x1c] sm:$0x1] %v535
    %v537 = vld [vmem:[%s357 + $0x20] sm:$0xf]
    %v538 = vsel %vm512, %v469, %v537
    %539 = vst [vmem:[%s357 + $0x20] sm:$0xf] %v538
    %v540 = vld [vmem:[%s357 + $0x24] sm:$0x1]
    %v541 = vsel %vm360, %v470, %v540
    %542 = vst [vmem:[%s357 + $0x24] sm:$0x1] %v541
    %v543 = vld [vmem:[%s357 + $0x28] sm:$0xf]
    %v544 = vsel %vm512, %v477, %v543
    %545 = vst [vmem:[%s357 + $0x28] sm:$0xf] %v544
    %v546 = vld [vmem:[%s357 + $0x2c] sm:$0x1]
    %v547 = vsel %vm360, %v478, %v546
    %548 = vst [vmem:[%s357 + $0x2c] sm:$0x1] %v547
    %v549 = vld [vmem:[%s357 + $0x30] sm:$0xf]
    %v550 = vsel %vm512, %v485, %v549
    %551 = vst [vmem:[%s357 + $0x30] sm:$0xf] %v550
    %v552 = vld [vmem:[%s357 + $0x34] sm:$0x1]
    %v553 = vsel %vm360, %v486, %v552
    %554 = vst [vmem:[%s357 + $0x34] sm:$0x1] %v553
    %v555 = vld [vmem:[%s357 + $0x38] sm:$0xf]
    %v556 = vsel %vm512, %v493, %v555
    %557 = vst [vmem:[%s357 + $0x38] sm:$0xf] %v556
    %v558 = vld [vmem:[%s357 + $0x3c] sm:$0x1]
    %v559 = vsel %vm360, %v494, %v558
    %560 = vst [vmem:[%s357 + $0x3c] sm:$0x1] %v559
    %s561 = scalar_lea.vmem [#allocation2], 80
    %562 = vst [vmem:[%s561] sm:$0xf] 0
    %563 = vst [vmem:[%s561 + $0x4] sm:$0x1] 0
    %s564 = scalar_lea.vmem [#allocation2], 152
    %565 = vst [vmem:[%s564] sm:$0xf] 0
    %566 = vst [vmem:[%s564 + $0x4] sm:$0x1] 0
    %s567 = scalar_lea.vmem [#allocation2], 88
    %v568 = vld [vmem:[%s567] sm:$0x1]
    %v569 = vsel %vm360, 0, %v568
    %570 = vst [vmem:[%s567] sm:$0x1] %v569
    %v571 = vld [vmem:[%s567 + $0x8] sm:$0x1]
    %v572 = vsel %vm360, 0, %v571
    %573 = vst [vmem:[%s567 + $0x8] sm:$0x1] %v572
    %v574 = vld [vmem:[%s567 + $0x10] sm:$0x1]
    %v575 = vsel %vm360, 0, %v574
    %576 = vst [vmem:[%s567 + $0x10] sm:$0x1] %v575
    %v577 = vld [vmem:[%s567 + $0x18] sm:$0x1]
    %v578 = vsel %vm360, 0, %v577
    %579 = vst [vmem:[%s567 + $0x18] sm:$0x1] %v578
    %v580 = vld [vmem:[%s567 + $0x20] sm:$0x1]
    %v581 = vsel %vm360, 0, %v580
    %582 = vst [vmem:[%s567 + $0x20] sm:$0x1] %v581
    %v583 = vld [vmem:[%s567 + $0x28] sm:$0x1]
    %v584 = vsel %vm360, 0, %v583
    %585 = vst [vmem:[%s567 + $0x28] sm:$0x1] %v584
    %v586 = vld [vmem:[%s567 + $0x30] sm:$0x1]
    %v587 = vsel %vm360, 0, %v586
    %588 = vst [vmem:[%s567 + $0x30] sm:$0x1] %v587
    %v589 = vld [vmem:[%s567 + $0x38] sm:$0x1]
    %v590 = vsel %vm360, 0, %v589
    %591 = vst [vmem:[%s567 + $0x38] sm:$0x1] %v590
    %v592 = vld [vmem:[%s567 + $0x4] sm:$0x1]
    %v593 = vsel %vm386, 0, %v592
    %594 = vst [vmem:[%s567 + $0x4] sm:$0x1] %v593
    %v595 = vld [vmem:[%s567 + $0xc] sm:$0x1]
    %v596 = vsel %vm386, 0, %v595
    %597 = vst [vmem:[%s567 + $0xc] sm:$0x1] %v596
    %v598 = vld [vmem:[%s567 + $0x14] sm:$0x1]
    %v599 = vsel %vm386, 0, %v598
    %600 = vst [vmem:[%s567 + $0x14] sm:$0x1] %v599
    %v601 = vld [vmem:[%s567 + $0x1c] sm:$0x1]
    %v602 = vsel %vm386, 0, %v601
    %603 = vst [vmem:[%s567 + $0x1c] sm:$0x1] %v602
    %v604 = vld [vmem:[%s567 + $0x24] sm:$0x1]
    %v605 = vsel %vm386, 0, %v604
    %606 = vst [vmem:[%s567 + $0x24] sm:$0x1] %v605
    %v607 = vld [vmem:[%s567 + $0x2c] sm:$0x1]
    %v608 = vsel %vm386, 0, %v607
    %609 = vst [vmem:[%s567 + $0x2c] sm:$0x1] %v608
    %v610 = vld [vmem:[%s567 + $0x34] sm:$0x1]
    %v611 = vsel %vm386, 0, %v610
    %612 = vst [vmem:[%s567 + $0x34] sm:$0x1] %v611
    %v613 = vld [vmem:[%s567 + $0x3c] sm:$0x1]
    %v614 = vsel %vm386, 0, %v613
    %615 = vst [vmem:[%s567 + $0x3c] sm:$0x1] %v614
    %v620 = vunpack.c.l.b16 %v348
    %v621 = vunpack.c.h.b16 %v348
    %v622 = vunpack.c.l.b16 %v349
    %v623 = vunpack.c.h.b16 %v349
    %v624 = vunpack.c.l.b16 %v350
    %v625 = vunpack.c.h.b16 %v350
    %v626 = vunpack.c.l.b16 %v351
    %v627 = vunpack.c.h.b16 %v351
    %v628 = vpack.c.b16 %v620, %v620
    %v629 = vpack.c.b16 %v621, %v621
    %v630 = vpack.c.b16 %v622, %v622
    %v631 = vpack.c.b16 %v623, %v623
    %v632 = vpack.c.b16 %v624, %v624
    %v633 = vpack.c.b16 %v625, %v625
    %v634 = vpack.c.b16 %v626, %v626
    %v635 = vpack.c.b16 %v627, %v627
    %v637 = vshrl.u32 %v628, 16
    %v639 = vrot.slane %v637, 7
    %v640 = vshll.u32 %v628, 16
    %v642 = vor.u32 %v639, %v640
    %v643 = vrot.slane %v639, 4
    %v645 = vshrl.u32 %v629, 16
    %v647 = vrot.slane %v645, 7
    %v648 = vshll.u32 %v629, 16
    %v650 = vor.u32 %v647, %v648
    %v651 = vrot.slane %v647, 4
    %v653 = vshrl.u32 %v630, 16
    %v655 = vrot.slane %v653, 7
    %v656 = vshll.u32 %v630, 16
    %v658 = vor.u32 %v655, %v656
    %v659 = vrot.slane %v655, 4
    %v661 = vshrl.u32 %v631, 16
    %v663 = vrot.slane %v661, 7
    %v664 = vshll.u32 %v631, 16
    %v666 = vor.u32 %v663, %v664
    %v667 = vrot.slane %v663, 4
    %v669 = vshrl.u32 %v632, 16
    %v671 = vrot.slane %v669, 7
    %v672 = vshll.u32 %v632, 16
    %v674 = vor.u32 %v671, %v672
    %v675 = vrot.slane %v671, 4
    %v677 = vshrl.u32 %v633, 16
    %v679 = vrot.slane %v677, 7
    %v680 = vshll.u32 %v633, 16
    %v682 = vor.u32 %v679, %v680
    %v683 = vrot.slane %v679, 4
    %v685 = vshrl.u32 %v634, 16
    %v687 = vrot.slane %v685, 7
    %v688 = vshll.u32 %v634, 16
    %v690 = vor.u32 %v687, %v688
    %v691 = vrot.slane %v687, 4
    %v693 = vshrl.u32 %v635, 16
    %v695 = vrot.slane %v693, 7
    %v696 = vshll.u32 %v635, 16
    %v698 = vor.u32 %v695, %v696
    %v699 = vrot.slane %v695, 4
    %v716 = vld [vmem:[%s567] sm:$0xf]
    %v717 = vsel %vm512, %v642, %v716
    %718 = vst [vmem:[%s567] sm:$0xf] %v717
    %v719 = vld [vmem:[%s567 + $0x4] sm:$0x1]
    %v720 = vsel %vm360, %v643, %v719
    %721 = vst [vmem:[%s567 + $0x4] sm:$0x1] %v720
    %v722 = vld [vmem:[%s567 + $0x8] sm:$0xf]
    %v723 = vsel %vm512, %v650, %v722
    %724 = vst [vmem:[%s567 + $0x8] sm:$0xf] %v723
    %v725 = vld [vmem:[%s567 + $0xc] sm:$0x1]
    %v726 = vsel %vm360, %v651, %v725
    %727 = vst [vmem:[%s567 + $0xc] sm:$0x1] %v726
    %v728 = vld [vmem:[%s567 + $0x10] sm:$0xf]
    %v729 = vsel %vm512, %v658, %v728
    %730 = vst [vmem:[%s567 + $0x10] sm:$0xf] %v729
    %v731 = vld [vmem:[%s567 + $0x14] sm:$0x1]
    %v732 = vsel %vm360, %v659, %v731
    %733 = vst [vmem:[%s567 + $0x14] sm:$0x1] %v732
    %v734 = vld [vmem:[%s567 + $0x18] sm:$0xf]
    %v735 = vsel %vm512, %v666, %v734
    %736 = vst [vmem:[%s567 + $0x18] sm:$0xf] %v735
    %v737 = vld [vmem:[%s567 + $0x1c] sm:$0x1]
    %v738 = vsel %vm360, %v667, %v737
    %739 = vst [vmem:[%s567 + $0x1c] sm:$0x1] %v738
    %v740 = vld [vmem:[%s567 + $0x20] sm:$0xf]
    %v741 = vsel %vm512, %v674, %v740
    %742 = vst [vmem:[%s567 + $0x20] sm:$0xf] %v741
    %v743 = vld [vmem:[%s567 + $0x24] sm:$0x1]
    %v744 = vsel %vm360, %v675, %v743
    %745 = vst [vmem:[%s567 + $0x24] sm:$0x1] %v744
    %v746 = vld [vmem:[%s567 + $0x28] sm:$0xf]
    %v747 = vsel %vm512, %v682, %v746
    %748 = vst [vmem:[%s567 + $0x28] sm:$0xf] %v747
    %v749 = vld [vmem:[%s567 + $0x2c] sm:$0x1]
    %v750 = vsel %vm360, %v683, %v749
    %751 = vst [vmem:[%s567 + $0x2c] sm:$0x1] %v750
    %v752 = vld [vmem:[%s567 + $0x30] sm:$0xf]
    %v753 = vsel %vm512, %v690, %v752
    %754 = vst [vmem:[%s567 + $0x30] sm:$0xf] %v753
    %v755 = vld [vmem:[%s567 + $0x34] sm:$0x1]
    %v756 = vsel %vm360, %v691, %v755
    %757 = vst [vmem:[%s567 + $0x34] sm:$0x1] %v756
    %v758 = vld [vmem:[%s567 + $0x38] sm:$0xf]
    %v759 = vsel %vm512, %v698, %v758
    %760 = vst [vmem:[%s567 + $0x38] sm:$0xf] %v759
    %v761 = vld [vmem:[%s567 + $0x3c] sm:$0x1]
    %v762 = vsel %vm360, %v699, %v761
    %763 = vst [vmem:[%s567 + $0x3c] sm:$0x1] %v762
    %v764 = vld [vmem:[#allocation2] sm:$0xf]
    %v765 = vld [vmem:[#allocation2 + $0x8] sm:$0xf]
    %v766 = vld [vmem:[#allocation2 + $0x10] sm:$0xf]
    %v767 = vld [vmem:[#allocation2 + $0x18] sm:$0xf]
    %v768 = vld [vmem:[#allocation2 + $0x20] sm:$0xf]
    %v769 = vld [vmem:[#allocation2 + $0x28] sm:$0xf]
    %v770 = vld [vmem:[#allocation2 + $0x30] sm:$0xf]
    %v771 = vld [vmem:[#allocation2 + $0x38] sm:$0xf]
    %772 = vst [vmem:[#allocation3] sm:$0xf] %v764
    %773 = vst [vmem:[#allocation3 + $0x24] sm:$0xf] %v765
    %774 = vst [vmem:[#allocation3 + $0x48] sm:$0xf] %v766
    %775 = vst [vmem:[#allocation3 + $0x6c] sm:$0xf] %v767
    %776 = vst [vmem:[#allocation3 + $0x90] sm:$0xf] %v768
    %777 = vst [vmem:[#allocation3 + $0xb4] sm:$0xf] %v769
    %778 = vst [vmem:[#allocation3 + $0xd8] sm:$0xf] %v770
    %779 = vst [vmem:[#allocation3 + $0xfc] sm:$0xf] %v771
    %v780 = vld [vmem:[%s561] sm:$0xf]
    %v781 = vld [vmem:[%s561 + $0x8] sm:$0xf]
    %v782 = vld [vmem:[%s561 + $0x10] sm:$0xf]
    %v783 = vld [vmem:[%s561 + $0x18] sm:$0xf]
    %v784 = vld [vmem:[%s561 + $0x20] sm:$0xf]
    %v785 = vld [vmem:[%s561 + $0x28] sm:$0xf]
    %v786 = vld [vmem:[%s561 + $0x30] sm:$0xf]
    %v787 = vld [vmem:[%s561 + $0x38] sm:$0xf]
    %788 = vst [vmem:[#allocation3 + $0x120] sm:$0xf] %v780
    %789 = vst [vmem:[#allocation3 + $0x144] sm:$0xf] %v781
    %790 = vst [vmem:[#allocation3 + $0x168] sm:$0xf] %v782
    %791 = vst [vmem:[#allocation3 + $0x18c] sm:$0xf] %v783
    %792 = vst [vmem:[#allocation3 + $0x1b0] sm:$0xf] %v784
    %793 = vst [vmem:[#allocation3 + $0x1d4] sm:$0xf] %v785
    %794 = vst [vmem:[#allocation3 + $0x1f8] sm:$0xf] %v786
    %795 = vst [vmem:[#allocation3 + $0x21c] sm:$0xf] %v787
    %v796 = vld [vmem:[#allocation2] sm:$0xf]
    %v797 = vld [vmem:[#allocation2 + $0x4] sm:$0x1]
    %v798 = vld [vmem:[#allocation2 + $0x8] sm:$0xf]
    %v799 = vld [vmem:[#allocation2 + $0xc] sm:$0x1]
    %v800 = vld [vmem:[#allocation2 + $0x10] sm:$0xf]
    %v801 = vld [vmem:[#allocation2 + $0x14] sm:$0x1]
    %v802 = vld [vmem:[#allocation2 + $0x18] sm:$0xf]
    %v803 = vld [vmem:[#allocation2 + $0x1c] sm:$0x1]
    %v804 = vld [vmem:[#allocation2 + $0x20] sm:$0xf]
    %v805 = vld [vmem:[#allocation2 + $0x24] sm:$0x1]
    %v806 = vld [vmem:[#allocation2 + $0x28] sm:$0xf]
    %v807 = vld [vmem:[#allocation2 + $0x2c] sm:$0x1]
    %v808 = vld [vmem:[#allocation2 + $0x30] sm:$0xf]
    %v809 = vld [vmem:[#allocation2 + $0x34] sm:$0x1]
    %v810 = vld [vmem:[#allocation2 + $0x38] sm:$0xf]
    %v811 = vld [vmem:[#allocation2 + $0x3c] sm:$0x1]
    %vm812 = vsmask.f32 3328
    %vm813 = vsmask.f32 7440
    %vm814 = vmor %vm812, %vm813
    %v816 = vshrl.u32 %v796, 16
    %v818 = vrot.slane %v816, 4
    %v819 = vshll.u32 %v796, 16
    %v821 = vrot.slane %v819, 5
    %v822 = vor.u32 %v818, %v821
    %v823 = vrot.slane %v822, 4
    %v825 = vshll.u32 %v797, 16
    %v827 = vrot.slane %v825, 5
    %v828 = vsel %vm814, %v823, %v827
    %v830 = vshrl.u32 %v798, 16
    %v832 = vrot.slane %v830, 4
    %v833 = vshll.u32 %v798, 16
    %v835 = vrot.slane %v833, 5
    %v836 = vor.u32 %v832, %v835
    %v837 = vrot.slane %v836, 4
    %v839 = vshll.u32 %v799, 16
    %v841 = vrot.slane %v839, 5
    %v842 = vsel %vm814, %v837, %v841
    %v844 = vshrl.u32 %v800, 16
    %v846 = vrot.slane %v844, 4
    %v847 = vshll.u32 %v800, 16
    %v849 = vrot.slane %v847, 5
    %v850 = vor.u32 %v846, %v849
    %v851 = vrot.slane %v850, 4
    %v853 = vshll.u32 %v801, 16
    %v855 = vrot.slane %v853, 5
    %v856 = vsel %vm814, %v851, %v855
    %v858 = vshrl.u32 %v802, 16
    %v860 = vrot.slane %v858, 4
    %v861 = vshll.u32 %v802, 16
    %v863 = vrot.slane %v861, 5
    %v864 = vor.u32 %v860, %v863
    %v865 = vrot.slane %v864, 4
    %v867 = vshll.u32 %v803, 16
    %v869 = vrot.slane %v867, 5
    %v870 = vsel %vm814, %v865, %v869
    %v872 = vshrl.u32 %v804, 16
    %v874 = vrot.slane %v872, 4
    %v875 = vshll.u32 %v804, 16
    %v877 = vrot.slane %v875, 5
    %v878 = vor.u32 %v874, %v877
    %v879 = vrot.slane %v878, 4
    %v881 = vshll.u32 %v805, 16
    %v883 = vrot.slane %v881, 5
    %v884 = vsel %vm814, %v879, %v883
    %v886 = vshrl.u32 %v806, 16
    %v888 = vrot.slane %v886, 4
    %v889 = vshll.u32 %v806, 16
    %v891 = vrot.slane %v889, 5
    %v892 = vor.u32 %v888, %v891
    %v893 = vrot.slane %v892, 4
    %v895 = vshll.u32 %v807, 16
    %v897 = vrot.slane %v895, 5
    %v898 = vsel %vm814, %v893, %v897
    %v900 = vshrl.u32 %v808, 16
    %v902 = vrot.slane %v900, 4
    %v903 = vshll.u32 %v808, 16
    %v905 = vrot.slane %v903, 5
    %v906 = vor.u32 %v902, %v905
    %v907 = vrot.slane %v906, 4
    %v909 = vshll.u32 %v809, 16
    %v911 = vrot.slane %v909, 5
    %v912 = vsel %vm814, %v907, %v911
    %v914 = vshrl.u32 %v810, 16
    %v916 = vrot.slane %v914, 4
    %v917 = vshll.u32 %v810, 16
    %v919 = vrot.slane %v917, 5
    %v920 = vor.u32 %v916, %v919
    %v921 = vrot.slane %v920, 4
    %v923 = vshll.u32 %v811, 16
    %v925 = vrot.slane %v923, 5
    %v926 = vsel %vm814, %v921, %v925
    %935 = vst [vmem:[#allocation3 + $0x4] sm:$0xf] %v828
    %936 = vst [vmem:[#allocation3 + $0x28] sm:$0xf] %v842
    %937 = vst [vmem:[#allocation3 + $0x4c] sm:$0xf] %v856
    %938 = vst [vmem:[#allocation3 + $0x70] sm:$0xf] %v870
    %939 = vst [vmem:[#allocation3 + $0x94] sm:$0xf] %v884
    %940 = vst [vmem:[#allocation3 + $0xb8] sm:$0xf] %v898
    %941 = vst [vmem:[#allocation3 + $0xdc] sm:$0xf] %v912
    %942 = vst [vmem:[#allocation3 + $0x100] sm:$0xf] %v926
    %v943 = vld [vmem:[%s561] sm:$0xf]
    %v944 = vld [vmem:[%s561 + $0x4] sm:$0x1]
    %v945 = vld [vmem:[%s561 + $0x8] sm:$0xf]
    %v946 = vld [vmem:[%s561 + $0xc] sm:$0x1]
    %v947 = vld [vmem:[%s561 + $0x10] sm:$0xf]
    %v948 = vld [vmem:[%s561 + $0x14] sm:$0x1]
    %v949 = vld [vmem:[%s561 + $0x18] sm:$0xf]
    %v950 = vld [vmem:[%s561 + $0x1c] sm:$0x1]
    %v951 = vld [vmem:[%s561 + $0x20] sm:$0xf]
    %v952 = vld [vmem:[%s561 + $0x24] sm:$0x1]
    %v953 = vld [vmem:[%s561 + $0x28] sm:$0xf]
    %v954 = vld [vmem:[%s561 + $0x2c] sm:$0x1]
    %v955 = vld [vmem:[%s561 + $0x30] sm:$0xf]
    %v956 = vld [vmem:[%s561 + $0x34] sm:$0x1]
    %v957 = vld [vmem:[%s561 + $0x38] sm:$0xf]
    %v958 = vld [vmem:[%s561 + $0x3c] sm:$0x1]
    %v960 = vshrl.u32 %v943, 16
    %v962 = vrot.slane %v960, 4
    %v963 = vshll.u32 %v943, 16
    %v965 = vrot.slane %v963, 5
    %v966 = vor.u32 %v962, %v965
    %v967 = vrot.slane %v966, 4
    %v969 = vshll.u32 %v944, 16
    %v971 = vrot.slane %v969, 5
    %v972 = vsel %vm814, %v967, %v971
    %v974 = vshrl.u32 %v945, 16
    %v976 = vrot.slane %v974, 4
    %v977 = vshll.u32 %v945, 16
    %v979 = vrot.slane %v977, 5
    %v980 = vor.u32 %v976, %v979
    %v981 = vrot.slane %v980, 4
    %v983 = vshll.u32 %v946, 16
    %v985 = vrot.slane %v983, 5
    %v986 = vsel %vm814, %v981, %v985
    %v988 = vshrl.u32 %v947, 16
    %v990 = vrot.slane %v988, 4
    %v991 = vshll.u32 %v947, 16
    %v993 = vrot.slane %v991, 5
    %v994 = vor.u32 %v990, %v993
    %v995 = vrot.slane %v994, 4
    %v997 = vshll.u32 %v948, 16
    %v999 = vrot.slane %v997, 5
    %v1000 = vsel %vm814, %v995, %v999
    %v1002 = vshrl.u32 %v949, 16
    %v1004 = vrot.slane %v1002, 4
    %v1005 = vshll.u32 %v949, 16
    %v1007 = vrot.slane %v1005, 5
    %v1008 = vor.u32 %v1004, %v1007
    %v1009 = vrot.slane %v1008, 4
    %v1011 = vshll.u32 %v950, 16
    %v1013 = vrot.slane %v1011, 5
    %v1014 = vsel %vm814, %v1009, %v1013
    %v1016 = vshrl.u32 %v951, 16
    %v1018 = vrot.slane %v1016, 4
    %v1019 = vshll.u32 %v951, 16
    %v1021 = vrot.slane %v1019, 5
    %v1022 = vor.u32 %v1018, %v1021
    %v1023 = vrot.slane %v1022, 4
    %v1025 = vshll.u32 %v952, 16
    %v1027 = vrot.slane %v1025, 5
    %v1028 = vsel %vm814, %v1023, %v1027
    %v1030 = vshrl.u32 %v953, 16
    %v1032 = vrot.slane %v1030, 4
    %v1033 = vshll.u32 %v953, 16
    %v1035 = vrot.slane %v1033, 5
    %v1036 = vor.u32 %v1032, %v1035
    %v1037 = vrot.slane %v1036, 4
    %v1039 = vshll.u32 %v954, 16
    %v1041 = vrot.slane %v1039, 5
    %v1042 = vsel %vm814, %v1037, %v1041
    %v1044 = vshrl.u32 %v955, 16
    %v1046 = vrot.slane %v1044, 4
    %v1047 = vshll.u32 %v955, 16
    %v1049 = vrot.slane %v1047, 5
    %v1050 = vor.u32 %v1046, %v1049
    %v1051 = vrot.slane %v1050, 4
    %v1053 = vshll.u32 %v956, 16
    %v1055 = vrot.slane %v1053, 5
    %v1056 = vsel %vm814, %v1051, %v1055
    %v1058 = vshrl.u32 %v957, 16
    %v1060 = vrot.slane %v1058, 4
    %v1061 = vshll.u32 %v957, 16
    %v1063 = vrot.slane %v1061, 5
    %v1064 = vor.u32 %v1060, %v1063
    %v1065 = vrot.slane %v1064, 4
    %v1067 = vshll.u32 %v958, 16
    %v1069 = vrot.slane %v1067, 5
    %v1070 = vsel %vm814, %v1065, %v1069
    %1079 = vst [vmem:[#allocation3 + $0x124] sm:$0xf] %v972
    %1080 = vst [vmem:[#allocation3 + $0x148] sm:$0xf] %v986
    %1081 = vst [vmem:[#allocation3 + $0x16c] sm:$0xf] %v1000
    %1082 = vst [vmem:[#allocation3 + $0x190] sm:$0xf] %v1014
    %1083 = vst [vmem:[#allocation3 + $0x1b4] sm:$0xf] %v1028
    %1084 = vst [vmem:[#allocation3 + $0x1d8] sm:$0xf] %v1042
    %1085 = vst [vmem:[#allocation3 + $0x1fc] sm:$0xf] %v1056
    %1086 = vst [vmem:[#allocation3 + $0x220] sm:$0xf] %v1070
    %v1087 = vld [vmem:[#allocation2] sm:$0xe]
    %v1088 = vld [vmem:[#allocation2 + $0x4] sm:$0x1]
    %v1089 = vld [vmem:[#allocation2 + $0x8] sm:$0xe]
    %v1090 = vld [vmem:[#allocation2 + $0xc] sm:$0x1]
    %v1091 = vld [vmem:[#allocation2 + $0x10] sm:$0xe]
    %v1092 = vld [vmem:[#allocation2 + $0x14] sm:$0x1]
    %v1093 = vld [vmem:[#allocation2 + $0x18] sm:$0xe]
    %v1094 = vld [vmem:[#allocation2 + $0x1c] sm:$0x1]
    %v1095 = vld [vmem:[#allocation2 + $0x20] sm:$0xe]
    %v1096 = vld [vmem:[#allocation2 + $0x24] sm:$0x1]
    %v1097 = vld [vmem:[#allocation2 + $0x28] sm:$0xe]
    %v1098 = vld [vmem:[#allocation2 + $0x2c] sm:$0x1]
    %v1099 = vld [vmem:[#allocation2 + $0x30] sm:$0xe]
    %v1100 = vld [vmem:[#allocation2 + $0x34] sm:$0x1]
    %v1101 = vld [vmem:[#allocation2 + $0x38] sm:$0xe]
    %v1102 = vld [vmem:[#allocation2 + $0x3c] sm:$0x1]
    %vm1119 = vcmask 1042432
    %vm1120 = vcmask 1046532
    %vm1121 = vmor %vm1119, %vm1120
    %v1122 = vrot.slane %v1087, 5
    %v1123 = vrot.slane %v1122, 4
    %v1124 = vrot.slane %v1088, 5
    %v1125 = vsel %vm1121, %v1123, %v1124
    %v1126 = vrot.slane %v1089, 5
    %v1127 = vrot.slane %v1126, 4
    %v1128 = vrot.slane %v1090, 5
    %v1129 = vsel %vm1121, %v1127, %v1128
    %v1130 = vrot.slane %v1091, 5
    %v1131 = vrot.slane %v1130, 4
    %v1132 = vrot.slane %v1092, 5
    %v1133 = vsel %vm1121, %v1131, %v1132
    %v1134 = vrot.slane %v1093, 5
    %v1135 = vrot.slane %v1134, 4
    %v1136 = vrot.slane %v1094, 5
    %v1137 = vsel %vm1121, %v1135, %v1136
    %v1138 = vrot.slane %v1095, 5
    %v1139 = vrot.slane %v1138, 4
    %v1140 = vrot.slane %v1096, 5
    %v1141 = vsel %vm1121, %v1139, %v1140
    %v1142 = vrot.slane %v1097, 5
    %v1143 = vrot.slane %v1142, 4
    %v1144 = vrot.slane %v1098, 5
    %v1145 = vsel %vm1121, %v1143, %v1144
    %v1146 = vrot.slane %v1099, 5
    %v1147 = vrot.slane %v1146, 4
    %v1148 = vrot.slane %v1100, 5
    %v1149 = vsel %vm1121, %v1147, %v1148
    %v1150 = vrot.slane %v1101, 5
    %v1151 = vrot.slane %v1150, 4
    %v1152 = vrot.slane %v1102, 5
    %v1153 = vsel %vm1121, %v1151, %v1152
    %1162 = vst [vmem:[#allocation3 + $0x8] sm:$0xf] %v1125
    %1163 = vst [vmem:[#allocation3 + $0x2c] sm:$0xf] %v1129
    %1164 = vst [vmem:[#allocation3 + $0x50] sm:$0xf] %v1133
    %1165 = vst [vmem:[#allocation3 + $0x74] sm:$0xf] %v1137
    %1166 = vst [vmem:[#allocation3 + $0x98] sm:$0xf] %v1141
    %1167 = vst [vmem:[#allocation3 + $0xbc] sm:$0xf] %v1145
    %1168 = vst [vmem:[#allocation3 + $0xe0] sm:$0xf] %v1149
    %1169 = vst [vmem:[#allocation3 + $0x104] sm:$0xf] %v1153
    %v1170 = vld [vmem:[%s561] sm:$0xe]
    %v1171 = vld [vmem:[%s561 + $0x4] sm:$0x1]
    %v1172 = vld [vmem:[%s561 + $0x8] sm:$0xe]
    %v1173 = vld [vmem:[%s561 + $0xc] sm:$0x1]
    %v1174 = vld [vmem:[%s561 + $0x10] sm:$0xe]
    %v1175 = vld [vmem:[%s561 + $0x14] sm:$0x1]
    %v1176 = vld [vmem:[%s561 + $0x18] sm:$0xe]
    %v1177 = vld [vmem:[%s561 + $0x1c] sm:$0x1]
    %v1178 = vld [vmem:[%s561 + $0x20] sm:$0xe]
    %v1179 = vld [vmem:[%s561 + $0x24] sm:$0x1]
    %v1180 = vld [vmem:[%s561 + $0x28] sm:$0xe]
    %v1181 = vld [vmem:[%s561 + $0x2c] sm:$0x1]
    %v1182 = vld [vmem:[%s561 + $0x30] sm:$0xe]
    %v1183 = vld [vmem:[%s561 + $0x34] sm:$0x1]
    %v1184 = vld [vmem:[%s561 + $0x38] sm:$0xe]
    %v1185 = vld [vmem:[%s561 + $0x3c] sm:$0x1]
    %v1202 = vrot.slane %v1170, 5
    %v1203 = vrot.slane %v1202, 4
    %v1204 = vrot.slane %v1171, 5
    %v1205 = vsel %vm1121, %v1203, %v1204
    %v1206 = vrot.slane %v1172, 5
    %v1207 = vrot.slane %v1206, 4
    %v1208 = vrot.slane %v1173, 5
    %v1209 = vsel %vm1121, %v1207, %v1208
    %v1210 = vrot.slane %v1174, 5
    %v1211 = vrot.slane %v1210, 4
    %v1212 = vrot.slane %v1175, 5
    %v1213 = vsel %vm1121, %v1211, %v1212
    %v1214 = vrot.slane %v1176, 5
    %v1215 = vrot.slane %v1214, 4
    %v1216 = vrot.slane %v1177, 5
    %v1217 = vsel %vm1121, %v1215, %v1216
    %v1218 = vrot.slane %v1178, 5
    %v1219 = vrot.slane %v1218, 4
    %v1220 = vrot.slane %v1179, 5
    %v1221 = vsel %vm1121, %v1219, %v1220
    %v1222 = vrot.slane %v1180, 5
    %v1223 = vrot.slane %v1222, 4
    %v1224 = vrot.slane %v1181, 5
    %v1225 = vsel %vm1121, %v1223, %v1224
    %v1226 = vrot.slane %v1182, 5
    %v1227 = vrot.slane %v1226, 4
    %v1228 = vrot.slane %v1183, 5
    %v1229 = vsel %vm1121, %v1227, %v1228
    %v1230 = vrot.slane %v1184, 5
    %v1231 = vrot.slane %v1230, 4
    %v1232 = vrot.slane %v1185, 5
    %v1233 = vsel %vm1121, %v1231, %v1232
    %1242 = vst [vmem:[#allocation3 + $0x128] sm:$0xf] %v1205
    %1243 = vst [vmem:[#allocation3 + $0x14c] sm:$0xf] %v1209
    %1244 = vst [vmem:[#allocation3 + $0x170] sm:$0xf] %v1213
    %1245 = vst [vmem:[#allocation3 + $0x194] sm:$0xf] %v1217
    %1246 = vst [vmem:[#allocation3 + $0x1b8] sm:$0xf] %v1221
    %1247 = vst [vmem:[#allocation3 + $0x1dc] sm:$0xf] %v1225
    %1248 = vst [vmem:[#allocation3 + $0x200] sm:$0xf] %v1229
    %1249 = vst [vmem:[#allocation3 + $0x224] sm:$0xf] %v1233
    %v1250 = vld [vmem:[%s357] sm:$0xf]
    %v1251 = vld [vmem:[%s357 + $0x8] sm:$0xf]
    %v1252 = vld [vmem:[%s357 + $0x10] sm:$0xf]
    %v1253 = vld [vmem:[%s357 + $0x18] sm:$0xf]
    %v1254 = vld [vmem:[%s357 + $0x20] sm:$0xf]
    %v1255 = vld [vmem:[%s357 + $0x28] sm:$0xf]
    %v1256 = vld [vmem:[%s357 + $0x30] sm:$0xf]
    %v1257 = vld [vmem:[%s357 + $0x38] sm:$0xf]
    %1258 = vst [vmem:[#allocation3 + $0xc] sm:$0xf] %v1250
    %1259 = vst [vmem:[#allocation3 + $0x30] sm:$0xf] %v1251
    %1260 = vst [vmem:[#allocation3 + $0x54] sm:$0xf] %v1252
    %1261 = vst [vmem:[#allocation3 + $0x78] sm:$0xf] %v1253
    %1262 = vst [vmem:[#allocation3 + $0x9c] sm:$0xf] %v1254
    %1263 = vst [vmem:[#allocation3 + $0xc0] sm:$0xf] %v1255
    %1264 = vst [vmem:[#allocation3 + $0xe4] sm:$0xf] %v1256
    %1265 = vst [vmem:[#allocation3 + $0x108] sm:$0xf] %v1257
    %v1266 = vld [vmem:[%s567] sm:$0xf]
    %v1267 = vld [vmem:[%s567 + $0x8] sm:$0xf]
    %v1268 = vld [vmem:[%s567 + $0x10] sm:$0xf]
    %v1269 = vld [vmem:[%s567 + $0x18] sm:$0xf]
    %v1270 = vld [vmem:[%s567 + $0x20] sm:$0xf]
    %v1271 = vld [vmem:[%s567 + $0x28] sm:$0xf]
    %v1272 = vld [vmem:[%s567 + $0x30] sm:$0xf]
    %v1273 = vld [vmem:[%s567 + $0x38] sm:$0xf]
    %1274 = vst [vmem:[#allocation3 + $0x12c] sm:$0xf] %v1266
    %1275 = vst [vmem:[#allocation3 + $0x150] sm:$0xf] %v1267
    %1276 = vst [vmem:[#allocation3 + $0x174] sm:$0xf] %v1268
    %1277 = vst [vmem:[#allocation3 + $0x198] sm:$0xf] %v1269
    %1278 = vst [vmem:[#allocation3 + $0x1bc] sm:$0xf] %v1270
    %1279 = vst [vmem:[#allocation3 + $0x1e0] sm:$0xf] %v1271
    %1280 = vst [vmem:[#allocation3 + $0x204] sm:$0xf] %v1272
    %1281 = vst [vmem:[#allocation3 + $0x228] sm:$0xf] %v1273
    %v1282 = vld [vmem:[%s357] sm:$0xf]
    %v1283 = vld [vmem:[%s357 + $0x4] sm:$0x1]
    %v1284 = vld [vmem:[%s357 + $0x8] sm:$0xf]
    %v1285 = vld [vmem:[%s357 + $0xc] sm:$0x1]
    %v1286 = vld [vmem:[%s357 + $0x10] sm:$0xf]
    %v1287 = vld [vmem:[%s357 + $0x14] sm:$0x1]
    %v1288 = vld [vmem:[%s357 + $0x18] sm:$0xf]
    %v1289 = vld [vmem:[%s357 + $0x1c] sm:$0x1]
    %v1290 = vld [vmem:[%s357 + $0x20] sm:$0xf]
    %v1291 = vld [vmem:[%s357 + $0x24] sm:$0x1]
    %v1292 = vld [vmem:[%s357 + $0x28] sm:$0xf]
    %v1293 = vld [vmem:[%s357 + $0x2c] sm:$0x1]
    %v1294 = vld [vmem:[%s357 + $0x30] sm:$0xf]
    %v1295 = vld [vmem:[%s357 + $0x34] sm:$0x1]
    %v1296 = vld [vmem:[%s357 + $0x38] sm:$0xf]
    %v1297 = vld [vmem:[%s357 + $0x3c] sm:$0x1]
    %v1299 = vshrl.u32 %v1282, 16
    %v1301 = vrot.slane %v1299, 4
    %v1302 = vshll.u32 %v1282, 16
    %v1304 = vrot.slane %v1302, 5
    %v1305 = vor.u32 %v1301, %v1304
    %v1306 = vrot.slane %v1305, 4
    %v1308 = vshll.u32 %v1283, 16
    %v1310 = vrot.slane %v1308, 5
    %v1311 = vsel %vm814, %v1306, %v1310
    %v1313 = vshrl.u32 %v1284, 16
    %v1315 = vrot.slane %v1313, 4
    %v1316 = vshll.u32 %v1284, 16
    %v1318 = vrot.slane %v1316, 5
    %v1319 = vor.u32 %v1315, %v1318
    %v1320 = vrot.slane %v1319, 4
    %v1322 = vshll.u32 %v1285, 16
    %v1324 = vrot.slane %v1322, 5
    %v1325 = vsel %vm814, %v1320, %v1324
    %v1327 = vshrl.u32 %v1286, 16
    %v1329 = vrot.slane %v1327, 4
    %v1330 = vshll.u32 %v1286, 16
    %v1332 = vrot.slane %v1330, 5
    %v1333 = vor.u32 %v1329, %v1332
    %v1334 = vrot.slane %v1333, 4
    %v1336 = vshll.u32 %v1287, 16
    %v1338 = vrot.slane %v1336, 5
    %v1339 = vsel %vm814, %v1334, %v1338
    %v1341 = vshrl.u32 %v1288, 16
    %v1343 = vrot.slane %v1341, 4
    %v1344 = vshll.u32 %v1288, 16
    %v1346 = vrot.slane %v1344, 5
    %v1347 = vor.u32 %v1343, %v1346
    %v1348 = vrot.slane %v1347, 4
    %v1350 = vshll.u32 %v1289, 16
    %v1352 = vrot.slane %v1350, 5
    %v1353 = vsel %vm814, %v1348, %v1352
    %v1355 = vshrl.u32 %v1290, 16
    %v1357 = vrot.slane %v1355, 4
    %v1358 = vshll.u32 %v1290, 16
    %v1360 = vrot.slane %v1358, 5
    %v1361 = vor.u32 %v1357, %v1360
    %v1362 = vrot.slane %v1361, 4
    %v1364 = vshll.u32 %v1291, 16
    %v1366 = vrot.slane %v1364, 5
    %v1367 = vsel %vm814, %v1362, %v1366
    %v1369 = vshrl.u32 %v1292, 16
    %v1371 = vrot.slane %v1369, 4
    %v1372 = vshll.u32 %v1292, 16
    %v1374 = vrot.slane %v1372, 5
    %v1375 = vor.u32 %v1371, %v1374
    %v1376 = vrot.slane %v1375, 4
    %v1378 = vshll.u32 %v1293, 16
    %v1380 = vrot.slane %v1378, 5
    %v1381 = vsel %vm814, %v1376, %v1380
    %v1383 = vshrl.u32 %v1294, 16
    %v1385 = vrot.slane %v1383, 4
    %v1386 = vshll.u32 %v1294, 16
    %v1388 = vrot.slane %v1386, 5
    %v1389 = vor.u32 %v1385, %v1388
    %v1390 = vrot.slane %v1389, 4
    %v1392 = vshll.u32 %v1295, 16
    %v1394 = vrot.slane %v1392, 5
    %v1395 = vsel %vm814, %v1390, %v1394
    %v1397 = vshrl.u32 %v1296, 16
    %v1399 = vrot.slane %v1397, 4
    %v1400 = vshll.u32 %v1296, 16
    %v1402 = vrot.slane %v1400, 5
    %v1403 = vor.u32 %v1399, %v1402
    %v1404 = vrot.slane %v1403, 4
    %v1406 = vshll.u32 %v1297, 16
    %v1408 = vrot.slane %v1406, 5
    %v1409 = vsel %vm814, %v1404, %v1408
    %1418 = vst [vmem:[#allocation3 + $0x10] sm:$0xf] %v1311
    %1419 = vst [vmem:[#allocation3 + $0x34] sm:$0xf] %v1325
    %1420 = vst [vmem:[#allocation3 + $0x58] sm:$0xf] %v1339
    %1421 = vst [vmem:[#allocation3 + $0x7c] sm:$0xf] %v1353
    %1422 = vst [vmem:[#allocation3 + $0xa0] sm:$0xf] %v1367
    %1423 = vst [vmem:[#allocation3 + $0xc4] sm:$0xf] %v1381
    %1424 = vst [vmem:[#allocation3 + $0xe8] sm:$0xf] %v1395
    %1425 = vst [vmem:[#allocation3 + $0x10c] sm:$0xf] %v1409
    %v1426 = vld [vmem:[%s567] sm:$0xf]
    %v1427 = vld [vmem:[%s567 + $0x4] sm:$0x1]
    %v1428 = vld [vmem:[%s567 + $0x8] sm:$0xf]
    %v1429 = vld [vmem:[%s567 + $0xc] sm:$0x1]
    %v1430 = vld [vmem:[%s567 + $0x10] sm:$0xf]
    %v1431 = vld [vmem:[%s567 + $0x14] sm:$0x1]
    %v1432 = vld [vmem:[%s567 + $0x18] sm:$0xf]
    %v1433 = vld [vmem:[%s567 + $0x1c] sm:$0x1]
    %v1434 = vld [vmem:[%s567 + $0x20] sm:$0xf]
    %v1435 = vld [vmem:[%s567 + $0x24] sm:$0x1]
    %v1436 = vld [vmem:[%s567 + $0x28] sm:$0xf]
    %v1437 = vld [vmem:[%s567 + $0x2c] sm:$0x1]
    %v1438 = vld [vmem:[%s567 + $0x30] sm:$0xf]
    %v1439 = vld [vmem:[%s567 + $0x34] sm:$0x1]
    %v1440 = vld [vmem:[%s567 + $0x38] sm:$0xf]
    %v1441 = vld [vmem:[%s567 + $0x3c] sm:$0x1]
    %v1443 = vshrl.u32 %v1426, 16
    %v1445 = vrot.slane %v1443, 4
    %v1446 = vshll.u32 %v1426, 16
    %v1448 = vrot.slane %v1446, 5
    %v1449 = vor.u32 %v1445, %v1448
    %v1450 = vrot.slane %v1449, 4
    %v1452 = vshll.u32 %v1427, 16
    %v1454 = vrot.slane %v1452, 5
    %v1455 = vsel %vm814, %v1450, %v1454
    %v1457 = vshrl.u32 %v1428, 16
    %v1459 = vrot.slane %v1457, 4
    %v1460 = vshll.u32 %v1428, 16
    %v1462 = vrot.slane %v1460, 5
    %v1463 = vor.u32 %v1459, %v1462
    %v1464 = vrot.slane %v1463, 4
    %v1466 = vshll.u32 %v1429, 16
    %v1468 = vrot.slane %v1466, 5
    %v1469 = vsel %vm814, %v1464, %v1468
    %v1471 = vshrl.u32 %v1430, 16
    %v1473 = vrot.slane %v1471, 4
    %v1474 = vshll.u32 %v1430, 16
    %v1476 = vrot.slane %v1474, 5
    %v1477 = vor.u32 %v1473, %v1476
    %v1478 = vrot.slane %v1477, 4
    %v1480 = vshll.u32 %v1431, 16
    %v1482 = vrot.slane %v1480, 5
    %v1483 = vsel %vm814, %v1478, %v1482
    %v1485 = vshrl.u32 %v1432, 16
    %v1487 = vrot.slane %v1485, 4
    %v1488 = vshll.u32 %v1432, 16
    %v1490 = vrot.slane %v1488, 5
    %v1491 = vor.u32 %v1487, %v1490
    %v1492 = vrot.slane %v1491, 4
    %v1494 = vshll.u32 %v1433, 16
    %v1496 = vrot.slane %v1494, 5
    %v1497 = vsel %vm814, %v1492, %v1496
    %v1499 = vshrl.u32 %v1434, 16
    %v1501 = vrot.slane %v1499, 4
    %v1502 = vshll.u32 %v1434, 16
    %v1504 = vrot.slane %v1502, 5
    %v1505 = vor.u32 %v1501, %v1504
    %v1506 = vrot.slane %v1505, 4
    %v1508 = vshll.u32 %v1435, 16
    %v1510 = vrot.slane %v1508, 5
    %v1511 = vsel %vm814, %v1506, %v1510
    %v1513 = vshrl.u32 %v1436, 16
    %v1515 = vrot.slane %v1513, 4
    %v1516 = vshll.u32 %v1436, 16
    %v1518 = vrot.slane %v1516, 5
    %v1519 = vor.u32 %v1515, %v1518
    %v1520 = vrot.slane %v1519, 4
    %v1522 = vshll.u32 %v1437, 16
    %v1524 = vrot.slane %v1522, 5
    %v1525 = vsel %vm814, %v1520, %v1524
    %v1527 = vshrl.u32 %v1438, 16
    %v1529 = vrot.slane %v1527, 4
    %v1530 = vshll.u32 %v1438, 16
    %v1532 = vrot.slane %v1530, 5
    %v1533 = vor.u32 %v1529, %v1532
    %v1534 = vrot.slane %v1533, 4
    %v1536 = vshll.u32 %v1439, 16
    %v1538 = vrot.slane %v1536, 5
    %v1539 = vsel %vm814, %v1534, %v1538
    %v1541 = vshrl.u32 %v1440, 16
    %v1543 = vrot.slane %v1541, 4
    %v1544 = vshll.u32 %v1440, 16
    %v1546 = vrot.slane %v1544, 5
    %v1547 = vor.u32 %v1543, %v1546
    %v1548 = vrot.slane %v1547, 4
    %v1550 = vshll.u32 %v1441, 16
    %v1552 = vrot.slane %v1550, 5
    %v1553 = vsel %vm814, %v1548, %v1552
    %1562 = vst [vmem:[#allocation3 + $0x130] sm:$0xf] %v1455
    %1563 = vst [vmem:[#allocation3 + $0x154] sm:$0xf] %v1469
    %1564 = vst [vmem:[#allocation3 + $0x178] sm:$0xf] %v1483
    %1565 = vst [vmem:[#allocation3 + $0x19c] sm:$0xf] %v1497
    %1566 = vst [vmem:[#allocation3 + $0x1c0] sm:$0xf] %v1511
    %1567 = vst [vmem:[#allocation3 + $0x1e4] sm:$0xf] %v1525
    %1568 = vst [vmem:[#allocation3 + $0x208] sm:$0xf] %v1539
    %1569 = vst [vmem:[#allocation3 + $0x22c] sm:$0xf] %v1553
    %v1570 = vld [vmem:[%s357] sm:$0xe]
    %v1571 = vld [vmem:[%s357 + $0x4] sm:$0x1]
    %v1572 = vld [vmem:[%s357 + $0x8] sm:$0xe]
    %v1573 = vld [vmem:[%s357 + $0xc] sm:$0x1]
    %v1574 = vld [vmem:[%s357 + $0x10] sm:$0xe]
    %v1575 = vld [vmem:[%s357 + $0x14] sm:$0x1]
    %v1576 = vld [vmem:[%s357 + $0x18] sm:$0xe]
    %v1577 = vld [vmem:[%s357 + $0x1c] sm:$0x1]
    %v1578 = vld [vmem:[%s357 + $0x20] sm:$0xe]
    %v1579 = vld [vmem:[%s357 + $0x24] sm:$0x1]
    %v1580 = vld [vmem:[%s357 + $0x28] sm:$0xe]
    %v1581 = vld [vmem:[%s357 + $0x2c] sm:$0x1]
    %v1582 = vld [vmem:[%s357 + $0x30] sm:$0xe]
    %v1583 = vld [vmem:[%s357 + $0x34] sm:$0x1]
    %v1584 = vld [vmem:[%s357 + $0x38] sm:$0xe]
    %v1585 = vld [vmem:[%s357 + $0x3c] sm:$0x1]
    %v1602 = vrot.slane %v1570, 5
    %v1603 = vrot.slane %v1602, 4
    %v1604 = vrot.slane %v1571, 5
    %v1605 = vsel %vm1121, %v1603, %v1604
    %v1606 = vrot.slane %v1572, 5
    %v1607 = vrot.slane %v1606, 4
    %v1608 = vrot.slane %v1573, 5
    %v1609 = vsel %vm1121, %v1607, %v1608
    %v1610 = vrot.slane %v1574, 5
    %v1611 = vrot.slane %v1610, 4
    %v1612 = vrot.slane %v1575, 5
    %v1613 = vsel %vm1121, %v1611, %v1612
    %v1614 = vrot.slane %v1576, 5
    %v1615 = vrot.slane %v1614, 4
    %v1616 = vrot.slane %v1577, 5
    %v1617 = vsel %vm1121, %v1615, %v1616
    %v1618 = vrot.slane %v1578, 5
    %v1619 = vrot.slane %v1618, 4
    %v1620 = vrot.slane %v1579, 5
    %v1621 = vsel %vm1121, %v1619, %v1620
    %v1622 = vrot.slane %v1580, 5
    %v1623 = vrot.slane %v1622, 4
    %v1624 = vrot.slane %v1581, 5
    %v1625 = vsel %vm1121, %v1623, %v1624
    %v1626 = vrot.slane %v1582, 5
    %v1627 = vrot.slane %v1626, 4
    %v1628 = vrot.slane %v1583, 5
    %v1629 = vsel %vm1121, %v1627, %v1628
    %v1630 = vrot.slane %v1584, 5
    %v1631 = vrot.slane %v1630, 4
    %v1632 = vrot.slane %v1585, 5
    %v1633 = vsel %vm1121, %v1631, %v1632
    %1642 = vst [vmem:[#allocation3 + $0x14] sm:$0xf] %v1605
    %1643 = vst [vmem:[#allocation3 + $0x38] sm:$0xf] %v1609
    %1644 = vst [vmem:[#allocation3 + $0x5c] sm:$0xf] %v1613
    %1645 = vst [vmem:[#allocation3 + $0x80] sm:$0xf] %v1617
    %1646 = vst [vmem:[#allocation3 + $0xa4] sm:$0xf] %v1621
    %1647 = vst [vmem:[#allocation3 + $0xc8] sm:$0xf] %v1625
    %1648 = vst [vmem:[#allocation3 + $0xec] sm:$0xf] %v1629
    %1649 = vst [vmem:[#allocation3 + $0x110] sm:$0xf] %v1633
    %v1650 = vld [vmem:[%s567] sm:$0xe]
    %v1651 = vld [vmem:[%s567 + $0x4] sm:$0x1]
    %v1652 = vld [vmem:[%s567 + $0x8] sm:$0xe]
    %v1653 = vld [vmem:[%s567 + $0xc] sm:$0x1]
    %v1654 = vld [vmem:[%s567 + $0x10] sm:$0xe]
    %v1655 = vld [vmem:[%s567 + $0x14] sm:$0x1]
    %v1656 = vld [vmem:[%s567 + $0x18] sm:$0xe]
    %v1657 = vld [vmem:[%s567 + $0x1c] sm:$0x1]
    %v1658 = vld [vmem:[%s567 + $0x20] sm:$0xe]
    %v1659 = vld [vmem:[%s567 + $0x24] sm:$0x1]
    %v1660 = vld [vmem:[%s567 + $0x28] sm:$0xe]
    %v1661 = vld [vmem:[%s567 + $0x2c] sm:$0x1]
    %v1662 = vld [vmem:[%s567 + $0x30] sm:$0xe]
    %v1663 = vld [vmem:[%s567 + $0x34] sm:$0x1]
    %v1664 = vld [vmem:[%s567 + $0x38] sm:$0xe]
    %v1665 = vld [vmem:[%s567 + $0x3c] sm:$0x1]
    %v1682 = vrot.slane %v1650, 5
    %v1683 = vrot.slane %v1682, 4
    %v1684 = vrot.slane %v1651, 5
    %v1685 = vsel %vm1121, %v1683, %v1684
    %v1686 = vrot.slane %v1652, 5
    %v1687 = vrot.slane %v1686, 4
    %v1688 = vrot.slane %v1653, 5
    %v1689 = vsel %vm1121, %v1687, %v1688
    %v1690 = vrot.slane %v1654, 5
    %v1691 = vrot.slane %v1690, 4
    %v1692 = vrot.slane %v1655, 5
    %v1693 = vsel %vm1121, %v1691, %v1692
    %v1694 = vrot.slane %v1656, 5
    %v1695 = vrot.slane %v1694, 4
    %v1696 = vrot.slane %v1657, 5
    %v1697 = vsel %vm1121, %v1695, %v1696
    %v1698 = vrot.slane %v1658, 5
    %v1699 = vrot.slane %v1698, 4
    %v1700 = vrot.slane %v1659, 5
    %v1701 = vsel %vm1121, %v1699, %v1700
    %v1702 = vrot.slane %v1660, 5
    %v1703 = vrot.slane %v1702, 4
    %v1704 = vrot.slane %v1661, 5
    %v1705 = vsel %vm1121, %v1703, %v1704
    %v1706 = vrot.slane %v1662, 5
    %v1707 = vrot.slane %v1706, 4
    %v1708 = vrot.slane %v1663, 5
    %v1709 = vsel %vm1121, %v1707, %v1708
    %v1710 = vrot.slane %v1664, 5
    %v1711 = vrot.slane %v1710, 4
    %v1712 = vrot.slane %v1665, 5
    %v1713 = vsel %vm1121, %v1711, %v1712
    %1722 = vst [vmem:[#allocation3 + $0x134] sm:$0xf] %v1685
    %1723 = vst [vmem:[#allocation3 + $0x158] sm:$0xf] %v1689
    %1724 = vst [vmem:[#allocation3 + $0x17c] sm:$0xf] %v1693
    %1725 = vst [vmem:[#allocation3 + $0x1a0] sm:$0xf] %v1697
    %1726 = vst [vmem:[#allocation3 + $0x1c4] sm:$0xf] %v1701
    %1727 = vst [vmem:[#allocation3 + $0x1e8] sm:$0xf] %v1705
    %1728 = vst [vmem:[#allocation3 + $0x20c] sm:$0xf] %v1709
    %1729 = vst [vmem:[#allocation3 + $0x230] sm:$0xf] %v1713
    %s1730 = scalar_lea.vmem [#allocation2], 16
    %v1731 = vld [vmem:[%s1730] sm:$0xf]
    %v1732 = vld [vmem:[%s1730 + $0x8] sm:$0xf]
    %v1733 = vld [vmem:[%s1730 + $0x10] sm:$0xf]
    %v1734 = vld [vmem:[%s1730 + $0x18] sm:$0xf]
    %v1735 = vld [vmem:[%s1730 + $0x20] sm:$0xf]
    %v1736 = vld [vmem:[%s1730 + $0x28] sm:$0xf]
    %v1737 = vld [vmem:[%s1730 + $0x30] sm:$0xf]
    %v1738 = vld [vmem:[%s1730 + $0x38] sm:$0xf]
    %1739 = vst [vmem:[#allocation3 + $0x18] sm:$0xf] %v1731
    %1740 = vst [vmem:[#allocation3 + $0x3c] sm:$0xf] %v1732
    %1741 = vst [vmem:[#allocation3 + $0x60] sm:$0xf] %v1733
    %1742 = vst [vmem:[#allocation3 + $0x84] sm:$0xf] %v1734
    %1743 = vst [vmem:[#allocation3 + $0xa8] sm:$0xf] %v1735
    %1744 = vst [vmem:[#allocation3 + $0xcc] sm:$0xf] %v1736
    %1745 = vst [vmem:[#allocation3 + $0xf0] sm:$0xf] %v1737
    %1746 = vst [vmem:[#allocation3 + $0x114] sm:$0xf] %v1738
    %s1747 = scalar_lea.vmem [#allocation2], 96
    %v1748 = vld [vmem:[%s1747] sm:$0xf]
    %v1749 = vld [vmem:[%s1747 + $0x8] sm:$0xf]
    %v1750 = vld [vmem:[%s1747 + $0x10] sm:$0xf]
    %v1751 = vld [vmem:[%s1747 + $0x18] sm:$0xf]
    %v1752 = vld [vmem:[%s1747 + $0x20] sm:$0xf]
    %v1753 = vld [vmem:[%s1747 + $0x28] sm:$0xf]
    %v1754 = vld [vmem:[%s1747 + $0x30] sm:$0xf]
    %v1755 = vld [vmem:[%s1747 + $0x38] sm:$0xf]
    %1756 = vst [vmem:[#allocation3 + $0x138] sm:$0xf] %v1748
    %1757 = vst [vmem:[#allocation3 + $0x15c] sm:$0xf] %v1749
    %1758 = vst [vmem:[#allocation3 + $0x180] sm:$0xf] %v1750
    %1759 = vst [vmem:[#allocation3 + $0x1a4] sm:$0xf] %v1751
    %1760 = vst [vmem:[#allocation3 + $0x1c8] sm:$0xf] %v1752
    %1761 = vst [vmem:[#allocation3 + $0x1ec] sm:$0xf] %v1753
    %1762 = vst [vmem:[#allocation3 + $0x210] sm:$0xf] %v1754
    %1763 = vst [vmem:[#allocation3 + $0x234] sm:$0xf] %v1755
    %v1764 = vld [vmem:[%s1730] sm:$0xf]
    %v1765 = vld [vmem:[%s1730 + $0x4] sm:$0x1]
    %v1766 = vld [vmem:[%s1730 + $0x8] sm:$0xf]
    %v1767 = vld [vmem:[%s1730 + $0xc] sm:$0x1]
    %v1768 = vld [vmem:[%s1730 + $0x10] sm:$0xf]
    %v1769 = vld [vmem:[%s1730 + $0x14] sm:$0x1]
    %v1770 = vld [vmem:[%s1730 + $0x18] sm:$0xf]
    %v1771 = vld [vmem:[%s1730 + $0x1c] sm:$0x1]
    %v1772 = vld [vmem:[%s1730 + $0x20] sm:$0xf]
    %v1773 = vld [vmem:[%s1730 + $0x24] sm:$0x1]
    %v1774 = vld [vmem:[%s1730 + $0x28] sm:$0xf]
    %v1775 = vld [vmem:[%s1730 + $0x2c] sm:$0x1]
    %v1776 = vld [vmem:[%s1730 + $0x30] sm:$0xf]
    %v1777 = vld [vmem:[%s1730 + $0x34] sm:$0x1]
    %v1778 = vld [vmem:[%s1730 + $0x38] sm:$0xf]
    %v1779 = vld [vmem:[%s1730 + $0x3c] sm:$0x1]
    %v1781 = vshrl.u32 %v1764, 16
    %v1783 = vrot.slane %v1781, 4
    %v1784 = vshll.u32 %v1764, 16
    %v1786 = vrot.slane %v1784, 5
    %v1787 = vor.u32 %v1783, %v1786
    %v1788 = vrot.slane %v1787, 4
    %v1790 = vshll.u32 %v1765, 16
    %v1792 = vrot.slane %v1790, 5
    %v1793 = vsel %vm814, %v1788, %v1792
    %v1795 = vshrl.u32 %v1766, 16
    %v1797 = vrot.slane %v1795, 4
    %v1798 = vshll.u32 %v1766, 16
    %v1800 = vrot.slane %v1798, 5
    %v1801 = vor.u32 %v1797, %v1800
    %v1802 = vrot.slane %v1801, 4
    %v1804 = vshll.u32 %v1767, 16
    %v1806 = vrot.slane %v1804, 5
    %v1807 = vsel %vm814, %v1802, %v1806
    %v1809 = vshrl.u32 %v1768, 16
    %v1811 = vrot.slane %v1809, 4
    %v1812 = vshll.u32 %v1768, 16
    %v1814 = vrot.slane %v1812, 5
    %v1815 = vor.u32 %v1811, %v1814
    %v1816 = vrot.slane %v1815, 4
    %v1818 = vshll.u32 %v1769, 16
    %v1820 = vrot.slane %v1818, 5
    %v1821 = vsel %vm814, %v1816, %v1820
    %v1823 = vshrl.u32 %v1770, 16
    %v1825 = vrot.slane %v1823, 4
    %v1826 = vshll.u32 %v1770, 16
    %v1828 = vrot.slane %v1826, 5
    %v1829 = vor.u32 %v1825, %v1828
    %v1830 = vrot.slane %v1829, 4
    %v1832 = vshll.u32 %v1771, 16
    %v1834 = vrot.slane %v1832, 5
    %v1835 = vsel %vm814, %v1830, %v1834
    %v1837 = vshrl.u32 %v1772, 16
    %v1839 = vrot.slane %v1837, 4
    %v1840 = vshll.u32 %v1772, 16
    %v1842 = vrot.slane %v1840, 5
    %v1843 = vor.u32 %v1839, %v1842
    %v1844 = vrot.slane %v1843, 4
    %v1846 = vshll.u32 %v1773, 16
    %v1848 = vrot.slane %v1846, 5
    %v1849 = vsel %vm814, %v1844, %v1848
    %v1851 = vshrl.u32 %v1774, 16
    %v1853 = vrot.slane %v1851, 4
    %v1854 = vshll.u32 %v1774, 16
    %v1856 = vrot.slane %v1854, 5
    %v1857 = vor.u32 %v1853, %v1856
    %v1858 = vrot.slane %v1857, 4
    %v1860 = vshll.u32 %v1775, 16
    %v1862 = vrot.slane %v1860, 5
    %v1863 = vsel %vm814, %v1858, %v1862
    %v1865 = vshrl.u32 %v1776, 16
    %v1867 = vrot.slane %v1865, 4
    %v1868 = vshll.u32 %v1776, 16
    %v1870 = vrot.slane %v1868, 5
    %v1871 = vor.u32 %v1867, %v1870
    %v1872 = vrot.slane %v1871, 4
    %v1874 = vshll.u32 %v1777, 16
    %v1876 = vrot.slane %v1874, 5
    %v1877 = vsel %vm814, %v1872, %v1876
    %v1879 = vshrl.u32 %v1778, 16
    %v1881 = vrot.slane %v1879, 4
    %v1882 = vshll.u32 %v1778, 16
    %v1884 = vrot.slane %v1882, 5
    %v1885 = vor.u32 %v1881, %v1884
    %v1886 = vrot.slane %v1885, 4
    %v1888 = vshll.u32 %v1779, 16
    %v1890 = vrot.slane %v1888, 5
    %v1891 = vsel %vm814, %v1886, %v1890
    %1900 = vst [vmem:[#allocation3 + $0x1c] sm:$0xf] %v1793
    %1901 = vst [vmem:[#allocation3 + $0x40] sm:$0xf] %v1807
    %1902 = vst [vmem:[#allocation3 + $0x64] sm:$0xf] %v1821
    %1903 = vst [vmem:[#allocation3 + $0x88] sm:$0xf] %v1835
    %1904 = vst [vmem:[#allocation3 + $0xac] sm:$0xf] %v1849
    %1905 = vst [vmem:[#allocation3 + $0xd0] sm:$0xf] %v1863
    %1906 = vst [vmem:[#allocation3 + $0xf4] sm:$0xf] %v1877
    %1907 = vst [vmem:[#allocation3 + $0x118] sm:$0xf] %v1891
    %v1908 = vld [vmem:[%s1747] sm:$0xf]
    %v1909 = vld [vmem:[%s1747 + $0x4] sm:$0x1]
    %v1910 = vld [vmem:[%s1747 + $0x8] sm:$0xf]
    %v1911 = vld [vmem:[%s1747 + $0xc] sm:$0x1]
    %v1912 = vld [vmem:[%s1747 + $0x10] sm:$0xf]
    %v1913 = vld [vmem:[%s1747 + $0x14] sm:$0x1]
    %v1914 = vld [vmem:[%s1747 + $0x18] sm:$0xf]
    %v1915 = vld [vmem:[%s1747 + $0x1c] sm:$0x1]
    %v1916 = vld [vmem:[%s1747 + $0x20] sm:$0xf]
    %v1917 = vld [vmem:[%s1747 + $0x24] sm:$0x1]
    %v1918 = vld [vmem:[%s1747 + $0x28] sm:$0xf]
    %v1919 = vld [vmem:[%s1747 + $0x2c] sm:$0x1]
    %v1920 = vld [vmem:[%s1747 + $0x30] sm:$0xf]
    %v1921 = vld [vmem:[%s1747 + $0x34] sm:$0x1]
    %v1922 = vld [vmem:[%s1747 + $0x38] sm:$0xf]
    %v1923 = vld [vmem:[%s1747 + $0x3c] sm:$0x1]
    %v1925 = vshrl.u32 %v1908, 16
    %v1927 = vrot.slane %v1925, 4
    %v1928 = vshll.u32 %v1908, 16
    %v1930 = vrot.slane %v1928, 5
    %v1931 = vor.u32 %v1927, %v1930
    %v1932 = vrot.slane %v1931, 4
    %v1934 = vshll.u32 %v1909, 16
    %v1936 = vrot.slane %v1934, 5
    %v1937 = vsel %vm814, %v1932, %v1936
    %v1939 = vshrl.u32 %v1910, 16
    %v1941 = vrot.slane %v1939, 4
    %v1942 = vshll.u32 %v1910, 16
    %v1944 = vrot.slane %v1942, 5
    %v1945 = vor.u32 %v1941, %v1944
    %v1946 = vrot.slane %v1945, 4
    %v1948 = vshll.u32 %v1911, 16
    %v1950 = vrot.slane %v1948, 5
    %v1951 = vsel %vm814, %v1946, %v1950
    %v1953 = vshrl.u32 %v1912, 16
    %v1955 = vrot.slane %v1953, 4
    %v1956 = vshll.u32 %v1912, 16
    %v1958 = vrot.slane %v1956, 5
    %v1959 = vor.u32 %v1955, %v1958
    %v1960 = vrot.slane %v1959, 4
    %v1962 = vshll.u32 %v1913, 16
    %v1964 = vrot.slane %v1962, 5
    %v1965 = vsel %vm814, %v1960, %v1964
    %v1967 = vshrl.u32 %v1914, 16
    %v1969 = vrot.slane %v1967, 4
    %v1970 = vshll.u32 %v1914, 16
    %v1972 = vrot.slane %v1970, 5
    %v1973 = vor.u32 %v1969, %v1972
    %v1974 = vrot.slane %v1973, 4
    %v1976 = vshll.u32 %v1915, 16
    %v1978 = vrot.slane %v1976, 5
    %v1979 = vsel %vm814, %v1974, %v1978
    %v1981 = vshrl.u32 %v1916, 16
    %v1983 = vrot.slane %v1981, 4
    %v1984 = vshll.u32 %v1916, 16
    %v1986 = vrot.slane %v1984, 5
    %v1987 = vor.u32 %v1983, %v1986
    %v1988 = vrot.slane %v1987, 4
    %v1990 = vshll.u32 %v1917, 16
    %v1992 = vrot.slane %v1990, 5
    %v1993 = vsel %vm814, %v1988, %v1992
    %v1995 = vshrl.u32 %v1918, 16
    %v1997 = vrot.slane %v1995, 4
    %v1998 = vshll.u32 %v1918, 16
    %v2000 = vrot.slane %v1998, 5
    %v2001 = vor.u32 %v1997, %v2000
    %v2002 = vrot.slane %v2001, 4
    %v2004 = vshll.u32 %v1919, 16
    %v2006 = vrot.slane %v2004, 5
    %v2007 = vsel %vm814, %v2002, %v2006
    %v2009 = vshrl.u32 %v1920, 16
    %v2011 = vrot.slane %v2009, 4
    %v2012 = vshll.u32 %v1920, 16
    %v2014 = vrot.slane %v2012, 5
    %v2015 = vor.u32 %v2011, %v2014
    %v2016 = vrot.slane %v2015, 4
    %v2018 = vshll.u32 %v1921, 16
    %v2020 = vrot.slane %v2018, 5
    %v2021 = vsel %vm814, %v2016, %v2020
    %v2023 = vshrl.u32 %v1922, 16
    %v2025 = vrot.slane %v2023, 4
    %v2026 = vshll.u32 %v1922, 16
    %v2028 = vrot.slane %v2026, 5
    %v2029 = vor.u32 %v2025, %v2028
    %v2030 = vrot.slane %v2029, 4
    %v2032 = vshll.u32 %v1923, 16
    %v2034 = vrot.slane %v2032, 5
    %v2035 = vsel %vm814, %v2030, %v2034
    %2044 = vst [vmem:[#allocation3 + $0x13c] sm:$0xf] %v1937
    %2045 = vst [vmem:[#allocation3 + $0x160] sm:$0xf] %v1951
    %2046 = vst [vmem:[#allocation3 + $0x184] sm:$0xf] %v1965
    %2047 = vst [vmem:[#allocation3 + $0x1a8] sm:$0xf] %v1979
    %2048 = vst [vmem:[#allocation3 + $0x1cc] sm:$0xf] %v1993
    %2049 = vst [vmem:[#allocation3 + $0x1f0] sm:$0xf] %v2007
    %2050 = vst [vmem:[#allocation3 + $0x214] sm:$0xf] %v2021
    %2051 = vst [vmem:[#allocation3 + $0x238] sm:$0xf] %v2035
    %v2052 = vld [vmem:[%s1730] sm:$0xe]
    %v2053 = vld [vmem:[%s1730 + $0x4] sm:$0x1]
    %v2054 = vld [vmem:[%s1730 + $0x8] sm:$0xe]
    %v2055 = vld [vmem:[%s1730 + $0xc] sm:$0x1]
    %v2056 = vld [vmem:[%s1730 + $0x10] sm:$0xe]
    %v2057 = vld [vmem:[%s1730 + $0x14] sm:$0x1]
    %v2058 = vld [vmem:[%s1730 + $0x18] sm:$0xe]
    %v2059 = vld [vmem:[%s1730 + $0x1c] sm:$0x1]
    %v2060 = vld [vmem:[%s1730 + $0x20] sm:$0xe]
    %v2061 = vld [vmem:[%s1730 + $0x24] sm:$0x1]
    %v2062 = vld [vmem:[%s1730 + $0x28] sm:$0xe]
    %v2063 = vld [vmem:[%s1730 + $0x2c] sm:$0x1]
    %v2064 = vld [vmem:[%s1730 + $0x30] sm:$0xe]
    %v2065 = vld [vmem:[%s1730 + $0x34] sm:$0x1]
    %v2066 = vld [vmem:[%s1730 + $0x38] sm:$0xe]
    %v2067 = vld [vmem:[%s1730 + $0x3c] sm:$0x1]
    %v2084 = vrot.slane %v2052, 5
    %v2085 = vrot.slane %v2084, 4
    %v2086 = vrot.slane %v2053, 5
    %v2087 = vsel %vm1121, %v2085, %v2086
    %v2088 = vrot.slane %v2054, 5
    %v2089 = vrot.slane %v2088, 4
    %v2090 = vrot.slane %v2055, 5
    %v2091 = vsel %vm1121, %v2089, %v2090
    %v2092 = vrot.slane %v2056, 5
    %v2093 = vrot.slane %v2092, 4
    %v2094 = vrot.slane %v2057, 5
    %v2095 = vsel %vm1121, %v2093, %v2094
    %v2096 = vrot.slane %v2058, 5
    %v2097 = vrot.slane %v2096, 4
    %v2098 = vrot.slane %v2059, 5
    %v2099 = vsel %vm1121, %v2097, %v2098
    %v2100 = vrot.slane %v2060, 5
    %v2101 = vrot.slane %v2100, 4
    %v2102 = vrot.slane %v2061, 5
    %v2103 = vsel %vm1121, %v2101, %v2102
    %v2104 = vrot.slane %v2062, 5
    %v2105 = vrot.slane %v2104, 4
    %v2106 = vrot.slane %v2063, 5
    %v2107 = vsel %vm1121, %v2105, %v2106
    %v2108 = vrot.slane %v2064, 5
    %v2109 = vrot.slane %v2108, 4
    %v2110 = vrot.slane %v2065, 5
    %v2111 = vsel %vm1121, %v2109, %v2110
    %v2112 = vrot.slane %v2066, 5
    %v2113 = vrot.slane %v2112, 4
    %v2114 = vrot.slane %v2067, 5
    %v2115 = vsel %vm1121, %v2113, %v2114
    %2124 = vst [vmem:[#allocation3 + $0x20] sm:$0xf] %v2087
    %2125 = vst [vmem:[#allocation3 + $0x44] sm:$0xf] %v2091
    %2126 = vst [vmem:[#allocation3 + $0x68] sm:$0xf] %v2095
    %2127 = vst [vmem:[#allocation3 + $0x8c] sm:$0xf] %v2099
    %2128 = vst [vmem:[#allocation3 + $0xb0] sm:$0xf] %v2103
    %2129 = vst [vmem:[#allocation3 + $0xd4] sm:$0xf] %v2107
    %2130 = vst [vmem:[#allocation3 + $0xf8] sm:$0xf] %v2111
    %2131 = vst [vmem:[#allocation3 + $0x11c] sm:$0xf] %v2115
    %v2132 = vld [vmem:[%s1747] sm:$0xe]
    %v2133 = vld [vmem:[%s1747 + $0x4] sm:$0x1]
    %v2134 = vld [vmem:[%s1747 + $0x8] sm:$0xe]
    %v2135 = vld [vmem:[%s1747 + $0xc] sm:$0x1]
    %v2136 = vld [vmem:[%s1747 + $0x10] sm:$0xe]
    %v2137 = vld [vmem:[%s1747 + $0x14] sm:$0x1]
    %v2138 = vld [vmem:[%s1747 + $0x18] sm:$0xe]
    %v2139 = vld [vmem:[%s1747 + $0x1c] sm:$0x1]
    %v2140 = vld [vmem:[%s1747 + $0x20] sm:$0xe]
    %v2141 = vld [vmem:[%s1747 + $0x24] sm:$0x1]
    %v2142 = vld [vmem:[%s1747 + $0x28] sm:$0xe]
    %v2143 = vld [vmem:[%s1747 + $0x2c] sm:$0x1]
    %v2144 = vld [vmem:[%s1747 + $0x30] sm:$0xe]
    %v2145 = vld [vmem:[%s1747 + $0x34] sm:$0x1]
    %v2146 = vld [vmem:[%s1747 + $0x38] sm:$0xe]
    %v2147 = vld [vmem:[%s1747 + $0x3c] sm:$0x1]
    %v2164 = vrot.slane %v2132, 5
    %v2165 = vrot.slane %v2164, 4
    %v2166 = vrot.slane %v2133, 5
    %v2167 = vsel %vm1121, %v2165, %v2166
    %v2168 = vrot.slane %v2134, 5
    %v2169 = vrot.slane %v2168, 4
    %v2170 = vrot.slane %v2135, 5
    %v2171 = vsel %vm1121, %v2169, %v2170
    %v2172 = vrot.slane %v2136, 5
    %v2173 = vrot.slane %v2172, 4
    %v2174 = vrot.slane %v2137, 5
    %v2175 = vsel %vm1121, %v2173, %v2174
    %v2176 = vrot.slane %v2138, 5
    %v2177 = vrot.slane %v2176, 4
    %v2178 = vrot.slane %v2139, 5
    %v2179 = vsel %vm1121, %v2177, %v2178
    %v2180 = vrot.slane %v2140, 5
    %v2181 = vrot.slane %v2180, 4
    %v2182 = vrot.slane %v2141, 5
    %v2183 = vsel %vm1121, %v2181, %v2182
    %v2184 = vrot.slane %v2142, 5
    %v2185 = vrot.slane %v2184, 4
    %v2186 = vrot.slane %v2143, 5
    %v2187 = vsel %vm1121, %v2185, %v2186
    %v2188 = vrot.slane %v2144, 5
    %v2189 = vrot.slane %v2188, 4
    %v2190 = vrot.slane %v2145, 5
    %v2191 = vsel %vm1121, %v2189, %v2190
    %v2192 = vrot.slane %v2146, 5
    %v2193 = vrot.slane %v2192, 4
    %v2194 = vrot.slane %v2147, 5
    %v2195 = vsel %vm1121, %v2193, %v2194
    %2204 = vst [vmem:[#allocation3 + $0x140] sm:$0xf] %v2167
    %2205 = vst [vmem:[#allocation3 + $0x164] sm:$0xf] %v2171
    %2206 = vst [vmem:[#allocation3 + $0x188] sm:$0xf] %v2175
    %2207 = vst [vmem:[#allocation3 + $0x1ac] sm:$0xf] %v2179
    %2208 = vst [vmem:[#allocation3 + $0x1d0] sm:$0xf] %v2183
    %2209 = vst [vmem:[#allocation3 + $0x1f4] sm:$0xf] %v2187
    %2210 = vst [vmem:[#allocation3 + $0x218] sm:$0xf] %v2191
    %2211 = vst [vmem:[#allocation3 + $0x23c] sm:$0xf] %v2195
    %v2212 = vld [vmem:[#allocation3] sm:$0xff]
    %v2213 = vld [vmem:[#allocation3 + $0x8] sm:$0xff]
    %v2214 = vld [vmem:[#allocation3 + $0x10] sm:$0xff]
    %v2215 = vld [vmem:[#allocation3 + $0x18] sm:$0xff]
    %v2216 = vld [vmem:[#allocation3 + $0x20] sm:$0xf]
    %v2217 = vld [vmem:[#allocation3 + $0x24] sm:$0xff]
    %v2218 = vld [vmem:[#allocation3 + $0x2c] sm:$0xff]
    %v2219 = vld [vmem:[#allocation3 + $0x34] sm:$0xff]
    %v2220 = vld [vmem:[#allocation3 + $0x3c] sm:$0xff]
    %v2221 = vld [vmem:[#allocation3 + $0x44] sm:$0xf]
    %v2222 = vld [vmem:[#allocation3 + $0x48] sm:$0xff]
    %v2223 = vld [vmem:[#allocation3 + $0x50] sm:$0xff]
    %v2224 = vld [vmem:[#allocation3 + $0x58] sm:$0xff]
    %v2225 = vld [vmem:[#allocation3 + $0x60] sm:$0xff]
    %v2226 = vld [vmem:[#allocation3 + $0x68] sm:$0xf]
    %v2227 = vld [vmem:[#allocation3 + $0x6c] sm:$0xff]
    %v2228 = vld [vmem:[#allocation3 + $0x74] sm:$0xff]
    %v2229 = vld [vmem:[#allocation3 + $0x7c] sm:$0xff]
    %v2230 = vld [vmem:[#allocation3 + $0x84] sm:$0xff]
    %v2231 = vld [vmem:[#allocation3 + $0x8c] sm:$0xf]
    %v2232 = vld [vmem:[#allocation3 + $0x90] sm:$0xff]
    %v2233 = vld [vmem:[#allocation3 + $0x98] sm:$0xff]
    %v2234 = vld [vmem:[#allocation3 + $0xa0] sm:$0xff]
    %v2235 = vld [vmem:[#allocation3 + $0xa8] sm:$0xff]
    %v2236 = vld [vmem:[#allocation3 + $0xb0] sm:$0xf]
    %v2237 = vld [vmem:[#allocation3 + $0xb4] sm:$0xff]
    %v2238 = vld [vmem:[#allocation3 + $0xbc] sm:$0xff]
    %v2239 = vld [vmem:[#allocation3 + $0xc4] sm:$0xff]
    %v2240 = vld [vmem:[#allocation3 + $0xcc] sm:$0xff]
    %v2241 = vld [vmem:[#allocation3 + $0xd4] sm:$0xf]
    %v2242 = vld [vmem:[#allocation3 + $0xd8] sm:$0xff]
    %v2243 = vld [vmem:[#allocation3 + $0xe0] sm:$0xff]
    %v2244 = vld [vmem:[#allocation3 + $0xe8] sm:$0xff]
    %v2245 = vld [vmem:[#allocation3 + $0xf0] sm:$0xff]
    %v2246 = vld [vmem:[#allocation3 + $0xf8] sm:$0xf]
    %v2247 = vld [vmem:[#allocation3 + $0xfc] sm:$0xff]
    %v2248 = vld [vmem:[#allocation3 + $0x104] sm:$0xff]
    %v2249 = vld [vmem:[#allocation3 + $0x10c] sm:$0xff]
    %v2250 = vld [vmem:[#allocation3 + $0x114] sm:$0xff]
    %v2251 = vld [vmem:[#allocation3 + $0x11c] sm:$0xf]
    %v2252 = vld [vmem:[#allocation3 + $0x120] sm:$0xff]
    %v2253 = vld [vmem:[#allocation3 + $0x128] sm:$0xff]
    %v2254 = vld [vmem:[#allocation3 + $0x130] sm:$0xff]
    %v2255 = vld [vmem:[#allocation3 + $0x138] sm:$0xff]
    %v2256 = vld [vmem:[#allocation3 + $0x140] sm:$0xf]
    %v2257 = vld [vmem:[#allocation3 + $0x144] sm:$0xff]
    %v2258 = vld [vmem:[#allocation3 + $0x14c] sm:$0xff]
    %v2259 = vld [vmem:[#allocation3 + $0x154] sm:$0xff]
    %v2260 = vld [vmem:[#allocation3 + $0x15c] sm:$0xff]
    %v2261 = vld [vmem:[#allocation3 + $0x164] sm:$0xf]
    %v2262 = vld [vmem:[#allocation3 + $0x168] sm:$0xff]
    %v2263 = vld [vmem:[#allocation3 + $0x170] sm:$0xff]
    %v2264 = vld [vmem:[#allocation3 + $0x178] sm:$0xff]
    %v2265 = vld [vmem:[#allocation3 + $0x180] sm:$0xff]
    %v2266 = vld [vmem:[#allocation3 + $0x188] sm:$0xf]
    %v2267 = vld [vmem:[#allocation3 + $0x18c] sm:$0xff]
    %v2268 = vld [vmem:[#allocation3 + $0x194] sm:$0xff]
    %v2269 = vld [vmem:[#allocation3 + $0x19c] sm:$0xff]
    %v2270 = vld [vmem:[#allocation3 + $0x1a4] sm:$0xff]
    %v2271 = vld [vmem:[#allocation3 + $0x1ac] sm:$0xf]
    %v2272 = vld [vmem:[#allocation3 + $0x1b0] sm:$0xff]
    %v2273 = vld [vmem:[#allocation3 + $0x1b8] sm:$0xff]
    %v2274 = vld [vmem:[#allocation3 + $0x1c0] sm:$0xff]
    %v2275 = vld [vmem:[#allocation3 + $0x1c8] sm:$0xff]
    %v2276 = vld [vmem:[#allocation3 + $0x1d0] sm:$0xf]
    %v2277 = vld [vmem:[#allocation3 + $0x1d4] sm:$0xff]
    %v2278 = vld [vmem:[#allocation3 + $0x1dc] sm:$0xff]
    %v2279 = vld [vmem:[#allocation3 + $0x1e4] sm:$0xff]
    %v2280 = vld [vmem:[#allocation3 + $0x1ec] sm:$0xff]
    %v2281 = vld [vmem:[#allocation3 + $0x1f4] sm:$0xf]
    %v2282 = vld [vmem:[#allocation3 + $0x1f8] sm:$0xff]
    %v2283 = vld [vmem:[#allocation3 + $0x200] sm:$0xff]
    %v2284 = vld [vmem:[#allocation3 + $0x208] sm:$0xff]
    %v2285 = vld [vmem:[#allocation3 + $0x210] sm:$0xff]
    %v2286 = vld [vmem:[#allocation3 + $0x218] sm:$0xf]
    %v2287 = vld [vmem:[#allocation3 + $0x21c] sm:$0xff]
    %v2288 = vld [vmem:[#allocation3 + $0x224] sm:$0xff]
    %v2289 = vld [vmem:[#allocation3 + $0x22c] sm:$0xff]
    %v2290 = vld [vmem:[#allocation3 + $0x234] sm:$0xff]
    %v2291 = vld [vmem:[#allocation3 + $0x23c] sm:$0xf]
    %v2292 = vld [vmem:[#allocation9] sm:$0xf]
    %v2293 = vld [vmem:[#allocation9 + $0x4] sm:$0xf]
    %v2294 = vld [vmem:[#allocation9 + $0x8] sm:$0xf]
    %v2295 = vld [vmem:[#allocation9 + $0xc] sm:$0xf]
    %v2296 = vld [vmem:[#allocation9 + $0x10] sm:$0xf]
    %v2297 = vld [vmem:[#allocation9 + $0x14] sm:$0xf]
    %v2298 = vld [vmem:[#allocation9 + $0x18] sm:$0xf]
    %v2299 = vld [vmem:[#allocation9 + $0x1c] sm:$0xf]
    %v2300 = vld [vmem:[#allocation9 + $0x20] sm:$0xf]
    %v2301 = vld [vmem:[#allocation9 + $0x24] sm:$0xf]
    %v2302 = vld [vmem:[#allocation9 + $0x28] sm:$0xf]
    %v2303 = vld [vmem:[#allocation9 + $0x2c] sm:$0xf]
    %v2304 = vld [vmem:[#allocation9 + $0x30] sm:$0xf]
    %v2305 = vld [vmem:[#allocation9 + $0x34] sm:$0xf]
    %v2306 = vld [vmem:[#allocation9 + $0x38] sm:$0xf]
    %v2307 = vld [vmem:[#allocation9 + $0x3c] sm:$0xf]
    %v2308 = vld [vmem:[#allocation9 + $0x40] sm:$0xf]
    %v2309 = vld [vmem:[#allocation9 + $0x44] sm:$0xf]
    %v2310 = vld [vmem:[#allocation9 + $0x48] sm:$0xf]
    %v2311 = vld [vmem:[#allocation9 + $0x4c] sm:$0xf]
    %v2312 = vld [vmem:[#allocation9 + $0x50] sm:$0xf]
    %v2313 = vld [vmem:[#allocation9 + $0x54] sm:$0xf]
    %v2314 = vld [vmem:[#allocation9 + $0x58] sm:$0xf]
    %v2315 = vld [vmem:[#allocation9 + $0x5c] sm:$0xf]
    %v2316 = vld [vmem:[#allocation9 + $0x60] sm:$0xf]
    %v2317 = vld [vmem:[#allocation9 + $0x64] sm:$0xf]
    %v2318 = vld [vmem:[#allocation9 + $0x68] sm:$0xf]
    %v2319 = vld [vmem:[#allocation9 + $0x6c] sm:$0xf]
    %v2320 = vld [vmem:[#allocation9 + $0x70] sm:$0xf]
    %v2321 = vld [vmem:[#allocation9 + $0x74] sm:$0xf]
    %v2322 = vld [vmem:[#allocation9 + $0x78] sm:$0xf]
    %v2323 = vld [vmem:[#allocation9 + $0x7c] sm:$0xf]
    %v2324 = vld [vmem:[#allocation9 + $0x80] sm:$0xf]
    %v2325 = vld [vmem:[#allocation9 + $0x84] sm:$0xf]
    %v2326 = vld [vmem:[#allocation9 + $0x88] sm:$0xf]
    %v2327 = vld [vmem:[#allocation9 + $0x8c] sm:$0xf]
    %v2328 = vld [vmem:[#allocation9 + $0x90] sm:$0xf]
    %v2329 = vld [vmem:[#allocation9 + $0x94] sm:$0xf]
    %v2330 = vld [vmem:[#allocation9 + $0x98] sm:$0xf]
    %v2331 = vld [vmem:[#allocation9 + $0x9c] sm:$0xf]
    %v2332 = vld [vmem:[#allocation9 + $0xa0] sm:$0xf]
    %v2333 = vld [vmem:[#allocation9 + $0xa4] sm:$0xf]
    %v2334 = vld [vmem:[#allocation9 + $0xa8] sm:$0xf]
    %v2335 = vld [vmem:[#allocation9 + $0xac] sm:$0xf]
    %v2336 = vld [vmem:[#allocation9 + $0xb0] sm:$0xf]
    %v2337 = vld [vmem:[#allocation9 + $0xb4] sm:$0xf]
    %v2338 = vld [vmem:[#allocation9 + $0xb8] sm:$0xf]
    %v2339 = vld [vmem:[#allocation9 + $0xbc] sm:$0xf]
    %v2340 = vld [vmem:[#allocation9 + $0xc0] sm:$0xf]
    %v2341 = vld [vmem:[#allocation9 + $0xc4] sm:$0xf]
    %v2342 = vld [vmem:[#allocation9 + $0xc8] sm:$0xf]
    %v2343 = vld [vmem:[#allocation9 + $0xcc] sm:$0xf]
    %v2344 = vld [vmem:[#allocation9 + $0xd0] sm:$0xf]
    %v2345 = vld [vmem:[#allocation9 + $0xd4] sm:$0xf]
    %v2346 = vld [vmem:[#allocation9 + $0xd8] sm:$0xf]
    %v2347 = vld [vmem:[#allocation9 + $0xdc] sm:$0xf]
    %v2348 = vld [vmem:[#allocation9 + $0xe0] sm:$0xf]
    %v2349 = vld [vmem:[#allocation9 + $0xe4] sm:$0xf]
    %v2350 = vld [vmem:[#allocation9 + $0xe8] sm:$0xf]
    %v2351 = vld [vmem:[#allocation9 + $0xec] sm:$0xf]
    %v2352 = vld [vmem:[#allocation9 + $0xf0] sm:$0xf]
    %v2353 = vld [vmem:[#allocation9 + $0xf4] sm:$0xf]
    %v2354 = vld [vmem:[#allocation9 + $0xf8] sm:$0xf]
    %v2355 = vld [vmem:[#allocation9 + $0xfc] sm:$0xf]
    %v2356 = vld [vmem:[#allocation9 + $0x100] sm:$0xf]
    %v2357 = vld [vmem:[#allocation9 + $0x104] sm:$0xf]
    %v2358 = vld [vmem:[#allocation9 + $0x108] sm:$0xf]
    %v2359 = vld [vmem:[#allocation9 + $0x10c] sm:$0xf]
    %v2360 = vld [vmem:[#allocation9 + $0x110] sm:$0xf]
    %v2361 = vld [vmem:[#allocation9 + $0x114] sm:$0xf]
    %v2362 = vld [vmem:[#allocation9 + $0x118] sm:$0xf]
    %v2363 = vld [vmem:[#allocation9 + $0x11c] sm:$0xf]
    %v2364 = vld [vmem:[#allocation9 + $0x120] sm:$0xf]
    %v2365 = vld [vmem:[#allocation9 + $0x124] sm:$0xf]
    %v2366 = vld [vmem:[#allocation9 + $0x128] sm:$0xf]
    %v2367 = vld [vmem:[#allocation9 + $0x12c] sm:$0xf]
    %v2368 = vld [vmem:[#allocation9 + $0x130] sm:$0xf]
    %v2369 = vld [vmem:[#allocation9 + $0x134] sm:$0xf]
    %v2370 = vld [vmem:[#allocation9 + $0x138] sm:$0xf]
    %v2371 = vld [vmem:[#allocation9 + $0x13c] sm:$0xf]
    %v2372 = vld [vmem:[#allocation9 + $0x140] sm:$0xf]
    %v2373 = vld [vmem:[#allocation9 + $0x144] sm:$0xf]
    %v2374 = vld [vmem:[#allocation9 + $0x148] sm:$0xf]
    %v2375 = vld [vmem:[#allocation9 + $0x14c] sm:$0xf]
    %v2376 = vld [vmem:[#allocation9 + $0x150] sm:$0xf]
    %v2377 = vld [vmem:[#allocation9 + $0x154] sm:$0xf]
    %v2378 = vld [vmem:[#allocation9 + $0x158] sm:$0xf]
    %v2379 = vld [vmem:[#allocation9 + $0x15c] sm:$0xf]
    %v2380 = vld [vmem:[#allocation9 + $0x160] sm:$0xf]
    %v2381 = vld [vmem:[#allocation9 + $0x164] sm:$0xf]
    %v2382 = vld [vmem:[#allocation9 + $0x168] sm:$0xf]
    %v2383 = vld [vmem:[#allocation9 + $0x16c] sm:$0xf]
    %v2384 = vld [vmem:[#allocation9 + $0x170] sm:$0xf]
    %v2385 = vld [vmem:[#allocation9 + $0x174] sm:$0xf]
    %v2386 = vld [vmem:[#allocation9 + $0x178] sm:$0xf]
    %v2387 = vld [vmem:[#allocation9 + $0x17c] sm:$0xf]
    %v2388 = vld [vmem:[#allocation9 + $0x180] sm:$0xf]
    %v2389 = vld [vmem:[#allocation9 + $0x184] sm:$0xf]
    %v2390 = vld [vmem:[#allocation9 + $0x188] sm:$0xf]
    %v2391 = vld [vmem:[#allocation9 + $0x18c] sm:$0xf]
    %v2392 = vld [vmem:[#allocation9 + $0x190] sm:$0xf]
    %v2393 = vld [vmem:[#allocation9 + $0x194] sm:$0xf]
    %v2394 = vld [vmem:[#allocation9 + $0x198] sm:$0xf]
    %v2395 = vld [vmem:[#allocation9 + $0x19c] sm:$0xf]
    %v2396 = vld [vmem:[#allocation9 + $0x1a0] sm:$0xf]
    %v2397 = vld [vmem:[#allocation9 + $0x1a4] sm:$0xf]
    %v2398 = vld [vmem:[#allocation9 + $0x1a8] sm:$0xf]
    %v2399 = vld [vmem:[#allocation9 + $0x1ac] sm:$0xf]
    %v2400 = vld [vmem:[#allocation9 + $0x1b0] sm:$0xf]
    %v2401 = vld [vmem:[#allocation9 + $0x1b4] sm:$0xf]
    %v2402 = vld [vmem:[#allocation9 + $0x1b8] sm:$0xf]
    %v2403 = vld [vmem:[#allocation9 + $0x1bc] sm:$0xf]
    %v2404 = vld [vmem:[#allocation9 + $0x1c0] sm:$0xf]
    %v2405 = vld [vmem:[#allocation9 + $0x1c4] sm:$0xf]
    %v2406 = vld [vmem:[#allocation9 + $0x1c8] sm:$0xf]
    %v2407 = vld [vmem:[#allocation9 + $0x1cc] sm:$0xf]
    %v2408 = vld [vmem:[#allocation9 + $0x1d0] sm:$0xf]
    %v2409 = vld [vmem:[#allocation9 + $0x1d4] sm:$0xf]
    %v2410 = vld [vmem:[#allocation9 + $0x1d8] sm:$0xf]
    %v2411 = vld [vmem:[#allocation9 + $0x1dc] sm:$0xf]
    %v2412 = vld [vmem:[#allocation9 + $0x1e0] sm:$0xf]
    %v2413 = vld [vmem:[#allocation9 + $0x1e4] sm:$0xf]
    %v2414 = vld [vmem:[#allocation9 + $0x1e8] sm:$0xf]
    %v2415 = vld [vmem:[#allocation9 + $0x1ec] sm:$0xf]
    %v2416 = vld [vmem:[#allocation9 + $0x1f0] sm:$0xf]
    %v2417 = vld [vmem:[#allocation9 + $0x1f4] sm:$0xf]
    %v2418 = vld [vmem:[#allocation9 + $0x1f8] sm:$0xf]
    %v2419 = vld [vmem:[#allocation9 + $0x1fc] sm:$0xf]
    %v2420 = vld [vmem:[#allocation9 + $0x200] sm:$0xf]
    %v2421 = vld [vmem:[#allocation9 + $0x204] sm:$0xf]
    %v2422 = vld [vmem:[#allocation9 + $0x208] sm:$0xf]
    %v2423 = vld [vmem:[#allocation9 + $0x20c] sm:$0xf]
    %v2424 = vld [vmem:[#allocation9 + $0x210] sm:$0xf]
    %v2425 = vld [vmem:[#allocation9 + $0x214] sm:$0xf]
    %v2426 = vld [vmem:[#allocation9 + $0x218] sm:$0xf]
    %v2427 = vld [vmem:[#allocation9 + $0x21c] sm:$0xf]
    %v2428 = vld [vmem:[#allocation9 + $0x220] sm:$0xf]
    %v2429 = vld [vmem:[#allocation9 + $0x224] sm:$0xf]
    %v2430 = vld [vmem:[#allocation9 + $0x228] sm:$0xf]
    %v2431 = vld [vmem:[#allocation9 + $0x22c] sm:$0xf]
    %v2432 = vld [vmem:[#allocation9 + $0x230] sm:$0xf]
    %v2433 = vld [vmem:[#allocation9 + $0x234] sm:$0xf]
    %v2434 = vld [vmem:[#allocation9 + $0x238] sm:$0xf]
    %v2435 = vld [vmem:[#allocation9 + $0x23c] sm:$0xf]
    %v2436 = vld [vmem:[%s4] sm:$0x1]
    %v2438 = vlaneseq
    %v2439 = vshrl.u32 %v2438, 7
    %v2440 = vsub.s32 0, %v2439
    %v2441 = vrot.slane %v2436, %v2440
    %v2523 = vunpack.c.l.b16 %v2212
    %v2524 = vunpack.c.h.b16 %v2212
    %v2525 = vunpack.c.l.b16 %v2213
    %v2526 = vunpack.c.h.b16 %v2213
    %v2527 = vunpack.c.l.b16 %v2214
    %v2528 = vunpack.c.h.b16 %v2214
    %v2529 = vunpack.c.l.b16 %v2215
    %v2530 = vunpack.c.h.b16 %v2215
    %v2531 = vunpack.c.l.b16 %v2216
    %v2532 = vunpack.c.l.b16 %v2217
    %v2533 = vunpack.c.h.b16 %v2217
    %v2534 = vunpack.c.l.b16 %v2218
    %v2535 = vunpack.c.h.b16 %v2218
    %v2536 = vunpack.c.l.b16 %v2219
    %v2537 = vunpack.c.h.b16 %v2219
    %v2538 = vunpack.c.l.b16 %v2220
    %v2539 = vunpack.c.h.b16 %v2220
    %v2540 = vunpack.c.l.b16 %v2221
    %v2541 = vunpack.c.l.b16 %v2222
    %v2542 = vunpack.c.h.b16 %v2222
    %v2543 = vunpack.c.l.b16 %v2223
    %v2544 = vunpack.c.h.b16 %v2223
    %v2545 = vunpack.c.l.b16 %v2224
    %v2546 = vunpack.c.h.b16 %v2224
    %v2547 = vunpack.c.l.b16 %v2225
    %v2548 = vunpack.c.h.b16 %v2225
    %v2549 = vunpack.c.l.b16 %v2226
    %v2550 = vunpack.c.l.b16 %v2227
    %v2551 = vunpack.c.h.b16 %v2227
    %v2552 = vunpack.c.l.b16 %v2228
    %v2553 = vunpack.c.h.b16 %v2228
    %v2554 = vunpack.c.l.b16 %v2229
    %v2555 = vunpack.c.h.b16 %v2229
    %v2556 = vunpack.c.l.b16 %v2230
    %v2557 = vunpack.c.h.b16 %v2230
    %v2558 = vunpack.c.l.b16 %v2231
    %v2559 = vunpack.c.l.b16 %v2232
    %v2560 = vunpack.c.h.b16 %v2232
    %v2561 = vunpack.c.l.b16 %v2233
    %v2562 = vunpack.c.h.b16 %v2233
    %v2563 = vunpack.c.l.b16 %v2234
    %v2564 = vunpack.c.h.b16 %v2234
    %v2565 = vunpack.c.l.b16 %v2235
    %v2566 = vunpack.c.h.b16 %v2235
    %v2567 = vunpack.c.l.b16 %v2236
    %v2568 = vunpack.c.l.b16 %v2237
    %v2569 = vunpack.c.h.b16 %v2237
    %v2570 = vunpack.c.l.b16 %v2238
    %v2571 = vunpack.c.h.b16 %v2238
    %v2572 = vunpack.c.l.b16 %v2239
    %v2573 = vunpack.c.h.b16 %v2239
    %v2574 = vunpack.c.l.b16 %v2240
    %v2575 = vunpack.c.h.b16 %v2240
    %v2576 = vunpack.c.l.b16 %v2241
    %v2577 = vunpack.c.l.b16 %v2242
    %v2578 = vunpack.c.h.b16 %v2242
    %v2579 = vunpack.c.l.b16 %v2243
    %v2580 = vunpack.c.h.b16 %v2243
    %v2581 = vunpack.c.l.b16 %v2244
    %v2582 = vunpack.c.h.b16 %v2244
    %v2583 = vunpack.c.l.b16 %v2245
    %v2584 = vunpack.c.h.b16 %v2245
    %v2585 = vunpack.c.l.b16 %v2246
    %v2586 = vunpack.c.l.b16 %v2247
    %v2587 = vunpack.c.h.b16 %v2247
    %v2588 = vunpack.c.l.b16 %v2248
    %v2589 = vunpack.c.h.b16 %v2248
    %v2590 = vunpack.c.l.b16 %v2249
    %v2591 = vunpack.c.h.b16 %v2249
    %v2592 = vunpack.c.l.b16 %v2250
    %v2593 = vunpack.c.h.b16 %v2250
    %v2594 = vunpack.c.l.b16 %v2251
    %v2595 = vunpack.c.l.b16 %v2252
    %v2596 = vunpack.c.h.b16 %v2252
    %v2597 = vunpack.c.l.b16 %v2253
    %v2598 = vunpack.c.h.b16 %v2253
    %v2599 = vunpack.c.l.b16 %v2254
    %v2600 = vunpack.c.h.b16 %v2254
    %v2601 = vunpack.c.l.b16 %v2255
    %v2602 = vunpack.c.h.b16 %v2255
    %v2603 = vunpack.c.l.b16 %v2256
    %v2604 = vunpack.c.l.b16 %v2257
    %v2605 = vunpack.c.h.b16 %v2257
    %v2606 = vunpack.c.l.b16 %v2258
    %v2607 = vunpack.c.h.b16 %v2258
    %v2608 = vunpack.c.l.b16 %v2259
    %v2609 = vunpack.c.h.b16 %v2259
    %v2610 = vunpack.c.l.b16 %v2260
    %v2611 = vunpack.c.h.b16 %v2260
    %v2612 = vunpack.c.l.b16 %v2261
    %v2613 = vunpack.c.l.b16 %v2262
    %v2614 = vunpack.c.h.b16 %v2262
    %v2615 = vunpack.c.l.b16 %v2263
    %v2616 = vunpack.c.h.b16 %v2263
    %v2617 = vunpack.c.l.b16 %v2264
    %v2618 = vunpack.c.h.b16 %v2264
    %v2619 = vunpack.c.l.b16 %v2265
    %v2620 = vunpack.c.h.b16 %v2265
    %v2621 = vunpack.c.l.b16 %v2266
    %v2622 = vunpack.c.l.b16 %v2267
    %v2623 = vunpack.c.h.b16 %v2267
    %v2624 = vunpack.c.l.b16 %v2268
    %v2625 = vunpack.c.h.b16 %v2268
    %v2626 = vunpack.c.l.b16 %v2269
    %v2627 = vunpack.c.h.b16 %v2269
    %v2628 = vunpack.c.l.b16 %v2270
    %v2629 = vunpack.c.h.b16 %v2270
    %v2630 = vunpack.c.l.b16 %v2271
    %v2631 = vunpack.c.l.b16 %v2272
    %v2632 = vunpack.c.h.b16 %v2272
    %v2633 = vunpack.c.l.b16 %v2273
    %v2634 = vunpack.c.h.b16 %v2273
    %v2635 = vunpack.c.l.b16 %v2274
    %v2636 = vunpack.c.h.b16 %v2274
    %v2637 = vunpack.c.l.b16 %v2275
    %v2638 = vunpack.c.h.b16 %v2275
    %v2639 = vunpack.c.l.b16 %v2276
    %v2640 = vunpack.c.l.b16 %v2277
    %v2641 = vunpack.c.h.b16 %v2277
    %v2642 = vunpack.c.l.b16 %v2278
    %v2643 = vunpack.c.h.b16 %v2278
    %v2644 = vunpack.c.l.b16 %v2279
    %v2645 = vunpack.c.h.b16 %v2279
    %v2646 = vunpack.c.l.b16 %v2280
    %v2647 = vunpack.c.h.b16 %v2280
    %v2648 = vunpack.c.l.b16 %v2281
    %v2649 = vunpack.c.l.b16 %v2282
    %v2650 = vunpack.c.h.b16 %v2282
    %v2651 = vunpack.c.l.b16 %v2283
    %v2652 = vunpack.c.h.b16 %v2283
    %v2653 = vunpack.c.l.b16 %v2284
    %v2654 = vunpack.c.h.b16 %v2284
    %v2655 = vunpack.c.l.b16 %v2285
    %v2656 = vunpack.c.h.b16 %v2285
    %v2657 = vunpack.c.l.b16 %v2286
    %v2658 = vunpack.c.l.b16 %v2287
    %v2659 = vunpack.c.h.b16 %v2287
    %v2660 = vunpack.c.l.b16 %v2288
    %v2661 = vunpack.c.h.b16 %v2288
    %v2662 = vunpack.c.l.b16 %v2289
    %v2663 = vunpack.c.h.b16 %v2289
    %v2664 = vunpack.c.l.b16 %v2290
    %v2665 = vunpack.c.h.b16 %v2290
    %v2666 = vunpack.c.l.b16 %v2291
    %v2667 = vpack.c.b16 %v2532, %v2523
    %v2668 = vpack.c.b16 %v2533, %v2524
    %v2669 = vpack.c.b16 %v2534, %v2525
    %v2670 = vpack.c.b16 %v2535, %v2526
    %v2671 = vpack.c.b16 %v2536, %v2527
    %v2672 = vpack.c.b16 %v2537, %v2528
    %v2673 = vpack.c.b16 %v2538, %v2529
    %v2674 = vpack.c.b16 %v2539, %v2530
    %v2675 = vpack.c.b16 %v2540, %v2531
    %v2676 = vpack.c.b16 %v2550, %v2541
    %v2677 = vpack.c.b16 %v2551, %v2542
    %v2678 = vpack.c.b16 %v2552, %v2543
    %v2679 = vpack.c.b16 %v2553, %v2544
    %v2680 = vpack.c.b16 %v2554, %v2545
    %v2681 = vpack.c.b16 %v2555, %v2546
    %v2682 = vpack.c.b16 %v2556, %v2547
    %v2683 = vpack.c.b16 %v2557, %v2548
    %v2684 = vpack.c.b16 %v2558, %v2549
    %v2685 = vpack.c.b16 %v2568, %v2559
    %v2686 = vpack.c.b16 %v2569, %v2560
    %v2687 = vpack.c.b16 %v2570, %v2561
    %v2688 = vpack.c.b16 %v2571, %v2562
    %v2689 = vpack.c.b16 %v2572, %v2563
    %v2690 = vpack.c.b16 %v2573, %v2564
    %v2691 = vpack.c.b16 %v2574, %v2565
    %v2692 = vpack.c.b16 %v2575, %v2566
    %v2693 = vpack.c.b16 %v2576, %v2567
    %v2694 = vpack.c.b16 %v2586, %v2577
    %v2695 = vpack.c.b16 %v2587, %v2578
    %v2696 = vpack.c.b16 %v2588, %v2579
    %v2697 = vpack.c.b16 %v2589, %v2580
    %v2698 = vpack.c.b16 %v2590, %v2581
    %v2699 = vpack.c.b16 %v2591, %v2582
    %v2700 = vpack.c.b16 %v2592, %v2583
    %v2701 = vpack.c.b16 %v2593, %v2584
    %v2702 = vpack.c.b16 %v2594, %v2585
    %v2703 = vpack.c.b16 %v2604, %v2595
    %v2704 = vpack.c.b16 %v2605, %v2596
    %v2705 = vpack.c.b16 %v2606, %v2597
    %v2706 = vpack.c.b16 %v2607, %v2598
    %v2707 = vpack.c.b16 %v2608, %v2599
    %v2708 = vpack.c.b16 %v2609, %v2600
    %v2709 = vpack.c.b16 %v2610, %v2601
    %v2710 = vpack.c.b16 %v2611, %v2602
    %v2711 = vpack.c.b16 %v2612, %v2603
    %v2712 = vpack.c.b16 %v2622, %v2613
    %v2713 = vpack.c.b16 %v2623, %v2614
    %v2714 = vpack.c.b16 %v2624, %v2615
    %v2715 = vpack.c.b16 %v2625, %v2616
    %v2716 = vpack.c.b16 %v2626, %v2617
    %v2717 = vpack.c.b16 %v2627, %v2618
    %v2718 = vpack.c.b16 %v2628, %v2619
    %v2719 = vpack.c.b16 %v2629, %v2620
    %v2720 = vpack.c.b16 %v2630, %v2621
    %v2721 = vpack.c.b16 %v2640, %v2631
    %v2722 = vpack.c.b16 %v2641, %v2632
    %v2723 = vpack.c.b16 %v2642, %v2633
    %v2724 = vpack.c.b16 %v2643, %v2634
    %v2725 = vpack.c.b16 %v2644, %v2635
    %v2726 = vpack.c.b16 %v2645, %v2636
    %v2727 = vpack.c.b16 %v2646, %v2637
    %v2728 = vpack.c.b16 %v2647, %v2638
    %v2729 = vpack.c.b16 %v2648, %v2639
    %v2730 = vpack.c.b16 %v2658, %v2649
    %v2731 = vpack.c.b16 %v2659, %v2650
    %v2732 = vpack.c.b16 %v2660, %v2651
    %v2733 = vpack.c.b16 %v2661, %v2652
    %v2734 = vpack.c.b16 %v2662, %v2653
    %v2735 = vpack.c.b16 %v2663, %v2654
    %v2736 = vpack.c.b16 %v2664, %v2655
    %v2737 = vpack.c.b16 %v2665, %v2656
    %v2738 = vpack.c.b16 %v2666, %v2657
    %v2955 = vunpack.c.l.b16 %v2292
    %v2956 = vunpack.c.l.b16 %v2293
    %v2957 = vunpack.c.l.b16 %v2294
    %v2958 = vunpack.c.l.b16 %v2295
    %v2959 = vunpack.c.l.b16 %v2296
    %v2960 = vunpack.c.l.b16 %v2297
    %v2961 = vunpack.c.l.b16 %v2298
    %v2962 = vunpack.c.l.b16 %v2299
    %v2963 = vunpack.c.l.b16 %v2300
    %v2964 = vunpack.c.l.b16 %v2301
    %v2965 = vunpack.c.l.b16 %v2302
    %v2966 = vunpack.c.l.b16 %v2303
    %v2967 = vunpack.c.l.b16 %v2304
    %v2968 = vunpack.c.l.b16 %v2305
    %v2969 = vunpack.c.l.b16 %v2306
    %v2970 = vunpack.c.l.b16 %v2307
    %v2971 = vunpack.c.l.b16 %v2308
    %v2972 = vunpack.c.l.b16 %v2309
    %v2973 = vunpack.c.l.b16 %v2310
    %v2974 = vunpack.c.l.b16 %v2311
    %v2975 = vunpack.c.l.b16 %v2312
    %v2976 = vunpack.c.l.b16 %v2313
    %v2977 = vunpack.c.l.b16 %v2314
    %v2978 = vunpack.c.l.b16 %v2315
    %v2979 = vunpack.c.l.b16 %v2316
    %v2980 = vunpack.c.l.b16 %v2317
    %v2981 = vunpack.c.l.b16 %v2318
    %v2982 = vunpack.c.l.b16 %v2319
    %v2983 = vunpack.c.l.b16 %v2320
    %v2984 = vunpack.c.l.b16 %v2321
    %v2985 = vunpack.c.l.b16 %v2322
    %v2986 = vunpack.c.l.b16 %v2323
    %v2987 = vunpack.c.l.b16 %v2324
    %v2988 = vunpack.c.l.b16 %v2325
    %v2989 = vunpack.c.l.b16 %v2326
    %v2990 = vunpack.c.l.b16 %v2327
    %v2991 = vunpack.c.l.b16 %v2328
    %v2992 = vunpack.c.l.b16 %v2329
    %v2993 = vunpack.c.l.b16 %v2330
    %v2994 = vunpack.c.l.b16 %v2331
    %v2995 = vunpack.c.l.b16 %v2332
    %v2996 = vunpack.c.l.b16 %v2333
    %v2997 = vunpack.c.l.b16 %v2334
    %v2998 = vunpack.c.l.b16 %v2335
    %v2999 = vunpack.c.l.b16 %v2336
    %v3000 = vunpack.c.l.b16 %v2337
    %v3001 = vunpack.c.l.b16 %v2338
    %v3002 = vunpack.c.l.b16 %v2339
    %v3003 = vunpack.c.l.b16 %v2340
    %v3004 = vunpack.c.l.b16 %v2341
    %v3005 = vunpack.c.l.b16 %v2342
    %v3006 = vunpack.c.l.b16 %v2343
    %v3007 = vunpack.c.l.b16 %v2344
    %v3008 = vunpack.c.l.b16 %v2345
    %v3009 = vunpack.c.l.b16 %v2346
    %v3010 = vunpack.c.l.b16 %v2347
    %v3011 = vunpack.c.l.b16 %v2348
    %v3012 = vunpack.c.l.b16 %v2349
    %v3013 = vunpack.c.l.b16 %v2350
    %v3014 = vunpack.c.l.b16 %v2351
    %v3015 = vunpack.c.l.b16 %v2352
    %v3016 = vunpack.c.l.b16 %v2353
    %v3017 = vunpack.c.l.b16 %v2354
    %v3018 = vunpack.c.l.b16 %v2355
    %v3019 = vunpack.c.l.b16 %v2356
    %v3020 = vunpack.c.l.b16 %v2357
    %v3021 = vunpack.c.l.b16 %v2358
    %v3022 = vunpack.c.l.b16 %v2359
    %v3023 = vunpack.c.l.b16 %v2360
    %v3024 = vunpack.c.l.b16 %v2361
    %v3025 = vunpack.c.l.b16 %v2362
    %v3026 = vunpack.c.l.b16 %v2363
    %v3027 = vunpack.c.l.b16 %v2364
    %v3028 = vunpack.c.l.b16 %v2365
    %v3029 = vunpack.c.l.b16 %v2366
    %v3030 = vunpack.c.l.b16 %v2367
    %v3031 = vunpack.c.l.b16 %v2368
    %v3032 = vunpack.c.l.b16 %v2369
    %v3033 = vunpack.c.l.b16 %v2370
    %v3034 = vunpack.c.l.b16 %v2371
    %v3035 = vunpack.c.l.b16 %v2372
    %v3036 = vunpack.c.l.b16 %v2373
    %v3037 = vunpack.c.l.b16 %v2374
    %v3038 = vunpack.c.l.b16 %v2375
    %v3039 = vunpack.c.l.b16 %v2376
    %v3040 = vunpack.c.l.b16 %v2377
    %v3041 = vunpack.c.l.b16 %v2378
    %v3042 = vunpack.c.l.b16 %v2379
    %v3043 = vunpack.c.l.b16 %v2380
    %v3044 = vunpack.c.l.b16 %v2381
    %v3045 = vunpack.c.l.b16 %v2382
    %v3046 = vunpack.c.l.b16 %v2383
    %v3047 = vunpack.c.l.b16 %v2384
    %v3048 = vunpack.c.l.b16 %v2385
    %v3049 = vunpack.c.l.b16 %v2386
    %v3050 = vunpack.c.l.b16 %v2387
    %v3051 = vunpack.c.l.b16 %v2388
    %v3052 = vunpack.c.l.b16 %v2389
    %v3053 = vunpack.c.l.b16 %v2390
    %v3054 = vunpack.c.l.b16 %v2391
    %v3055 = vunpack.c.l.b16 %v2392
    %v3056 = vunpack.c.l.b16 %v2393
    %v3057 = vunpack.c.l.b16 %v2394
    %v3058 = vunpack.c.l.b16 %v2395
    %v3059 = vunpack.c.l.b16 %v2396
    %v3060 = vunpack.c.l.b16 %v2397
    %v3061 = vunpack.c.l.b16 %v2398
    %v3062 = vunpack.c.l.b16 %v2399
    %v3063 = vunpack.c.l.b16 %v2400
    %v3064 = vunpack.c.l.b16 %v2401
    %v3065 = vunpack.c.l.b16 %v2402
    %v3066 = vunpack.c.l.b16 %v2403
    %v3067 = vunpack.c.l.b16 %v2404
    %v3068 = vunpack.c.l.b16 %v2405
    %v3069 = vunpack.c.l.b16 %v2406
    %v3070 = vunpack.c.l.b16 %v2407
    %v3071 = vunpack.c.l.b16 %v2408
    %v3072 = vunpack.c.l.b16 %v2409
    %v3073 = vunpack.c.l.b16 %v2410
    %v3074 = vunpack.c.l.b16 %v2411
    %v3075 = vunpack.c.l.b16 %v2412
    %v3076 = vunpack.c.l.b16 %v2413
    %v3077 = vunpack.c.l.b16 %v2414
    %v3078 = vunpack.c.l.b16 %v2415
    %v3079 = vunpack.c.l.b16 %v2416
    %v3080 = vunpack.c.l.b16 %v2417
    %v3081 = vunpack.c.l.b16 %v2418
    %v3082 = vunpack.c.l.b16 %v2419
    %v3083 = vunpack.c.l.b16 %v2420
    %v3084 = vunpack.c.l.b16 %v2421
    %v3085 = vunpack.c.l.b16 %v2422
    %v3086 = vunpack.c.l.b16 %v2423
    %v3087 = vunpack.c.l.b16 %v2424
    %v3088 = vunpack.c.l.b16 %v2425
    %v3089 = vunpack.c.l.b16 %v2426
    %v3090 = vunpack.c.l.b16 %v2427
    %v3091 = vunpack.c.l.b16 %v2428
    %v3092 = vunpack.c.l.b16 %v2429
    %v3093 = vunpack.c.l.b16 %v2430
    %v3094 = vunpack.c.l.b16 %v2431
    %v3095 = vunpack.c.l.b16 %v2432
    %v3096 = vunpack.c.l.b16 %v2433
    %v3097 = vunpack.c.l.b16 %v2434
    %v3098 = vunpack.c.l.b16 %v2435
    %v3099 = vpack.c.b16 %v2956, %v2955
    %v3100 = vpack.c.b16 %v2958, %v2957
    %v3101 = vpack.c.b16 %v2960, %v2959
    %v3102 = vpack.c.b16 %v2962, %v2961
    %v3103 = vpack.c.b16 %v2964, %v2963
    %v3104 = vpack.c.b16 %v2966, %v2965
    %v3105 = vpack.c.b16 %v2968, %v2967
    %v3106 = vpack.c.b16 %v2970, %v2969
    %v3107 = vpack.c.b16 %v2972, %v2971
    %v3108 = vpack.c.b16 %v2974, %v2973
    %v3109 = vpack.c.b16 %v2976, %v2975
    %v3110 = vpack.c.b16 %v2978, %v2977
    %v3111 = vpack.c.b16 %v2980, %v2979
    %v3112 = vpack.c.b16 %v2982, %v2981
    %v3113 = vpack.c.b16 %v2984, %v2983
    %v3114 = vpack.c.b16 %v2986, %v2985
    %v3115 = vpack.c.b16 %v2988, %v2987
    %v3116 = vpack.c.b16 %v2990, %v2989
    %v3117 = vpack.c.b16 %v2992, %v2991
    %v3118 = vpack.c.b16 %v2994, %v2993
    %v3119 = vpack.c.b16 %v2996, %v2995
    %v3120 = vpack.c.b16 %v2998, %v2997
    %v3121 = vpack.c.b16 %v3000, %v2999
    %v3122 = vpack.c.b16 %v3002, %v3001
    %v3123 = vpack.c.b16 %v3004, %v3003
    %v3124 = vpack.c.b16 %v3006, %v3005
    %v3125 = vpack.c.b16 %v3008, %v3007
    %v3126 = vpack.c.b16 %v3010, %v3009
    %v3127 = vpack.c.b16 %v3012, %v3011
    %v3128 = vpack.c.b16 %v3014, %v3013
    %v3129 = vpack.c.b16 %v3016, %v3015
    %v3130 = vpack.c.b16 %v3018, %v3017
    %v3131 = vpack.c.b16 %v3020, %v3019
    %v3132 = vpack.c.b16 %v3022, %v3021
    %v3133 = vpack.c.b16 %v3024, %v3023
    %v3134 = vpack.c.b16 %v3026, %v3025
    %v3135 = vpack.c.b16 %v3028, %v3027
    %v3136 = vpack.c.b16 %v3030, %v3029
    %v3137 = vpack.c.b16 %v3032, %v3031
    %v3138 = vpack.c.b16 %v3034, %v3033
    %v3139 = vpack.c.b16 %v3036, %v3035
    %v3140 = vpack.c.b16 %v3038, %v3037
    %v3141 = vpack.c.b16 %v3040, %v3039
    %v3142 = vpack.c.b16 %v3042, %v3041
    %v3143 = vpack.c.b16 %v3044, %v3043
    %v3144 = vpack.c.b16 %v3046, %v3045
    %v3145 = vpack.c.b16 %v3048, %v3047
    %v3146 = vpack.c.b16 %v3050, %v3049
    %v3147 = vpack.c.b16 %v3052, %v3051
    %v3148 = vpack.c.b16 %v3054, %v3053
    %v3149 = vpack.c.b16 %v3056, %v3055
    %v3150 = vpack.c.b16 %v3058, %v3057
    %v3151 = vpack.c.b16 %v3060, %v3059
    %v3152 = vpack.c.b16 %v3062, %v3061
    %v3153 = vpack.c.b16 %v3064, %v3063
    %v3154 = vpack.c.b16 %v3066, %v3065
    %v3155 = vpack.c.b16 %v3068, %v3067
    %v3156 = vpack.c.b16 %v3070, %v3069
    %v3157 = vpack.c.b16 %v3072, %v3071
    %v3158 = vpack.c.b16 %v3074, %v3073
    %v3159 = vpack.c.b16 %v3076, %v3075
    %v3160 = vpack.c.b16 %v3078, %v3077
    %v3161 = vpack.c.b16 %v3080, %v3079
    %v3162 = vpack.c.b16 %v3082, %v3081
    %v3163 = vpack.c.b16 %v3084, %v3083
    %v3164 = vpack.c.b16 %v3086, %v3085
    %v3165 = vpack.c.b16 %v3088, %v3087
    %v3166 = vpack.c.b16 %v3090, %v3089
    %v3167 = vpack.c.b16 %v3092, %v3091
    %v3168 = vpack.c.b16 %v3094, %v3093
    %v3169 = vpack.c.b16 %v3096, %v3095
    %v3170 = vpack.c.b16 %v3098, %v3097
    %3243 = vmatprep.subr.bf16.mxu0 0
    %3244 = vmatpush1.bf16.msra.mxu0 %v3106
    %3245 = vmatprep.subr.bf16.mxu0 0
    %3246 = vmatpush1.bf16.msra.mxu0 %v3105
    %3247 = vmatprep.subr.bf16.mxu0 0
    %3248 = vmatpush1.bf16.msra.mxu0 %v3104
    %3249 = vmatprep.subr.bf16.mxu0 0
    %3250 = vmatpush1.bf16.msra.mxu0 %v3103
    %3251 = vmatprep.subr.bf16.mxu0 0
    %3252 = vmatpush1.bf16.msra.mxu0 %v3102
    %3253 = vmatprep.subr.bf16.mxu0 0
    %3254 = vmatpush1.bf16.msra.mxu0 %v3101
    %3255 = vmatprep.subr.bf16.mxu0 0
    %3256 = vmatpush1.bf16.msra.mxu0 %v3100
    %3257 = vmatprep.subr.bf16.mxu0 0
    %3258 = vmatpush1.bf16.msra.mxu0 %v3099
    %3259 = vmatprep.subr.bf16.mxu0 0
    %3260 = vmatpush2.bf16.msra.mxu0 %v3114
    %3261 = vmatprep.subr.bf16.mxu0 0
    %3262 = vmatpush2.bf16.msra.mxu0 %v3113
    %3263 = vmatprep.subr.bf16.mxu0 0
    %3264 = vmatpush2.bf16.msra.mxu0 %v3112
    %3265 = vmatprep.subr.bf16.mxu0 0
    %3266 = vmatpush2.bf16.msra.mxu0 %v3111
    %3267 = vmatprep.subr.bf16.mxu0 0
    %3268 = vmatpush2.bf16.msra.mxu0 %v3110
    %3269 = vmatprep.subr.bf16.mxu0 0
    %3270 = vmatpush2.bf16.msra.mxu0 %v3109
    %3271 = vmatprep.subr.bf16.mxu0 0
    %3272 = vmatpush2.bf16.msra.mxu0 %v3108
    %3273 = vmatprep.subr.bf16.mxu0 0
    %3274 = vmatpush2.bf16.msra.mxu0 %v3107
    %3275 = vmatprep.mubr.bf16.mxu0 %v2668
    %3276 = vmatmul.mubr.bf16.gmra.mxu0 %v2667
    %v3277 = vpop.f32.mrf.mxu0
    %v3278 = vadd.f32 %v2441, %v3277
    %v3279 = vpop.f32.mrf.mxu0
    %v3280 = vpop.f32.mrf.mxu0
    %v3281 = vadd.f32 %v2441, %v3280
    %v3282 = vpop.f32.mrf.mxu0
    %3283 = vmatprep.mubr.bf16.mxu0 %v2677
    %3284 = vmatmul.mubr.bf16.gmra.mxu0 %v2676
    %v3285 = vpop.f32.mrf.mxu0
    %v3286 = vadd.f32 %v2441, %v3285
    %v3287 = vpop.f32.mrf.mxu0
    %v3288 = vpop.f32.mrf.mxu0
    %v3289 = vadd.f32 %v2441, %v3288
    %v3290 = vpop.f32.mrf.mxu0
    %3291 = vmatprep.mubr.bf16.mxu0 %v2686
    %3292 = vmatmul.mubr.bf16.gmra.mxu0 %v2685
    %v3293 = vpop.f32.mrf.mxu0
    %v3294 = vadd.f32 %v2441, %v3293
    %v3295 = vpop.f32.mrf.mxu0
    %v3296 = vpop.f32.mrf.mxu0
    %v3297 = vadd.f32 %v2441, %v3296
    %v3298 = vpop.f32.mrf.mxu0
    %3299 = vmatprep.mubr.bf16.mxu0 %v2695
    %3300 = vmatmul.mubr.bf16.gmra.mxu0 %v2694
    %v3301 = vpop.f32.mrf.mxu0
    %v3302 = vadd.f32 %v2441, %v3301
    %v3303 = vpop.f32.mrf.mxu0
    %v3304 = vpop.f32.mrf.mxu0
    %v3305 = vadd.f32 %v2441, %v3304
    %v3306 = vpop.f32.mrf.mxu0
    %3307 = vmatprep.mubr.bf16.mxu0 %v2704
    %3308 = vmatmul.mubr.bf16.gmra.mxu0 %v2703
    %v3309 = vpop.f32.mrf.mxu0
    %v3310 = vadd.f32 %v2441, %v3309
    %v3311 = vpop.f32.mrf.mxu0
    %v3312 = vpop.f32.mrf.mxu0
    %v3313 = vadd.f32 %v2441, %v3312
    %v3314 = vpop.f32.mrf.mxu0
    %3315 = vmatprep.mubr.bf16.mxu0 %v2713
    %3316 = vmatmul.mubr.bf16.gmra.mxu0 %v2712
    %v3317 = vpop.f32.mrf.mxu0
    %v3318 = vadd.f32 %v2441, %v3317
    %v3319 = vpop.f32.mrf.mxu0
    %v3320 = vpop.f32.mrf.mxu0
    %v3321 = vadd.f32 %v2441, %v3320
    %v3322 = vpop.f32.mrf.mxu0
    %3323 = vmatprep.mubr.bf16.mxu0 %v2722
    %3324 = vmatmul.mubr.bf16.gmra.mxu0 %v2721
    %v3325 = vpop.f32.mrf.mxu0
    %v3326 = vadd.f32 %v2441, %v3325
    %v3327 = vpop.f32.mrf.mxu0
    %v3328 = vpop.f32.mrf.mxu0
    %v3329 = vadd.f32 %v2441, %v3328
    %v3330 = vpop.f32.mrf.mxu0
    %3331 = vmatprep.mubr.bf16.mxu0 %v2731
    %3332 = vmatmul.mubr.bf16.gmra.mxu0 %v2730
    %v3333 = vpop.f32.mrf.mxu0
    %v3334 = vadd.f32 %v2441, %v3333
    %v3335 = vpop.f32.mrf.mxu0
    %v3336 = vpop.f32.mrf.mxu0
    %v3337 = vadd.f32 %v2441, %v3336
    %v3338 = vpop.f32.mrf.mxu0
    %3339 = vdwg.mxu0
    %3340 = vmatprep.subr.bf16.mxu0 0
    %3341 = vmatpush1.bf16.msra.mxu0 %v3122
    %3342 = vmatprep.subr.bf16.mxu0 0
    %3343 = vmatpush1.bf16.msra.mxu0 %v3121
    %3344 = vmatprep.subr.bf16.mxu0 0
    %3345 = vmatpush1.bf16.msra.mxu0 %v3120
    %3346 = vmatprep.subr.bf16.mxu0 0
    %3347 = vmatpush1.bf16.msra.mxu0 %v3119
    %3348 = vmatprep.subr.bf16.mxu0 0
    %3349 = vmatpush1.bf16.msra.mxu0 %v3118
    %3350 = vmatprep.subr.bf16.mxu0 0
    %3351 = vmatpush1.bf16.msra.mxu0 %v3117
    %3352 = vmatprep.subr.bf16.mxu0 0
    %3353 = vmatpush1.bf16.msra.mxu0 %v3116
    %3354 = vmatprep.subr.bf16.mxu0 0
    %3355 = vmatpush1.bf16.msra.mxu0 %v3115
    %3356 = vmatprep.subr.bf16.mxu0 0
    %3357 = vmatpush2.bf16.msra.mxu0 %v3130
    %3358 = vmatprep.subr.bf16.mxu0 0
    %3359 = vmatpush2.bf16.msra.mxu0 %v3129
    %3360 = vmatprep.subr.bf16.mxu0 0
    %3361 = vmatpush2.bf16.msra.mxu0 %v3128
    %3362 = vmatprep.subr.bf16.mxu0 0
    %3363 = vmatpush2.bf16.msra.mxu0 %v3127
    %3364 = vmatprep.subr.bf16.mxu0 0
    %3365 = vmatpush2.bf16.msra.mxu0 %v3126
    %3366 = vmatprep.subr.bf16.mxu0 0
    %3367 = vmatpush2.bf16.msra.mxu0 %v3125
    %3368 = vmatprep.subr.bf16.mxu0 0
    %3369 = vmatpush2.bf16.msra.mxu0 %v3124
    %3370 = vmatprep.subr.bf16.mxu0 0
    %3371 = vmatpush2.bf16.msra.mxu0 %v3123
    %3372 = vmatprep.mubr.bf16.mxu0 %v2670
    %3373 = vmatmul.mubr.bf16.gmra.mxu0 %v2669
    %v3374 = vpop.f32.mrf.mxu0
    %v3375 = vadd.f32 %v3278, %v3374
    %v3376 = vpop.f32.mrf.mxu0
    %v3377 = vpop.f32.mrf.mxu0
    %v3378 = vadd.f32 %v3281, %v3377
    %v3379 = vpop.f32.mrf.mxu0
    %3380 = vmatprep.mubr.bf16.mxu0 %v2679
    %3381 = vmatmul.mubr.bf16.gmra.mxu0 %v2678
    %v3382 = vpop.f32.mrf.mxu0
    %v3383 = vadd.f32 %v3286, %v3382
    %v3384 = vpop.f32.mrf.mxu0
    %v3385 = vpop.f32.mrf.mxu0
    %v3386 = vadd.f32 %v3289, %v3385
    %v3387 = vpop.f32.mrf.mxu0
    %3388 = vmatprep.mubr.bf16.mxu0 %v2688
    %3389 = vmatmul.mubr.bf16.gmra.mxu0 %v2687
    %v3390 = vpop.f32.mrf.mxu0
    %v3391 = vadd.f32 %v3294, %v3390
    %v3392 = vpop.f32.mrf.mxu0
    %v3393 = vpop.f32.mrf.mxu0
    %v3394 = vadd.f32 %v3297, %v3393
    %v3395 = vpop.f32.mrf.mxu0
    %3396 = vmatprep.mubr.bf16.mxu0 %v2697
    %3397 = vmatmul.mubr.bf16.gmra.mxu0 %v2696
    %v3398 = vpop.f32.mrf.mxu0
    %v3399 = vadd.f32 %v3302, %v3398
    %v3400 = vpop.f32.mrf.mxu0
    %v3401 = vpop.f32.mrf.mxu0
    %v3402 = vadd.f32 %v3305, %v3401
    %v3403 = vpop.f32.mrf.mxu0
    %3404 = vmatprep.mubr.bf16.mxu0 %v2706
    %3405 = vmatmul.mubr.bf16.gmra.mxu0 %v2705
    %v3406 = vpop.f32.mrf.mxu0
    %v3407 = vadd.f32 %v3310, %v3406
    %v3408 = vpop.f32.mrf.mxu0
    %v3409 = vpop.f32.mrf.mxu0
    %v3410 = vadd.f32 %v3313, %v3409
    %v3411 = vpop.f32.mrf.mxu0
    %3412 = vmatprep.mubr.bf16.mxu0 %v2715
    %3413 = vmatmul.mubr.bf16.gmra.mxu0 %v2714
    %v3414 = vpop.f32.mrf.mxu0
    %v3415 = vadd.f32 %v3318, %v3414
    %v3416 = vpop.f32.mrf.mxu0
    %v3417 = vpop.f32.mrf.mxu0
    %v3418 = vadd.f32 %v3321, %v3417
    %v3419 = vpop.f32.mrf.mxu0
    %3420 = vmatprep.mubr.bf16.mxu0 %v2724
    %3421 = vmatmul.mubr.bf16.gmra.mxu0 %v2723
    %v3422 = vpop.f32.mrf.mxu0
    %v3423 = vadd.f32 %v3326, %v3422
    %v3424 = vpop.f32.mrf.mxu0
    %v3425 = vpop.f32.mrf.mxu0
    %v3426 = vadd.f32 %v3329, %v3425
    %v3427 = vpop.f32.mrf.mxu0
    %3428 = vmatprep.mubr.bf16.mxu0 %v2733
    %3429 = vmatmul.mubr.bf16.gmra.mxu0 %v2732
    %v3430 = vpop.f32.mrf.mxu0
    %v3431 = vadd.f32 %v3334, %v3430
    %v3432 = vpop.f32.mrf.mxu0
    %v3433 = vpop.f32.mrf.mxu0
    %v3434 = vadd.f32 %v3337, %v3433
    %v3435 = vpop.f32.mrf.mxu0
    %3436 = vdwg.mxu0
    %3437 = vmatprep.subr.bf16.mxu0 0
    %3438 = vmatpush1.bf16.msra.mxu0 %v3138
    %3439 = vmatprep.subr.bf16.mxu0 0
    %3440 = vmatpush1.bf16.msra.mxu0 %v3137
    %3441 = vmatprep.subr.bf16.mxu0 0
    %3442 = vmatpush1.bf16.msra.mxu0 %v3136
    %3443 = vmatprep.subr.bf16.mxu0 0
    %3444 = vmatpush1.bf16.msra.mxu0 %v3135
    %3445 = vmatprep.subr.bf16.mxu0 0
    %3446 = vmatpush1.bf16.msra.mxu0 %v3134
    %3447 = vmatprep.subr.bf16.mxu0 0
    %3448 = vmatpush1.bf16.msra.mxu0 %v3133
    %3449 = vmatprep.subr.bf16.mxu0 0
    %3450 = vmatpush1.bf16.msra.mxu0 %v3132
    %3451 = vmatprep.subr.bf16.mxu0 0
    %3452 = vmatpush1.bf16.msra.mxu0 %v3131
    %3453 = vmatprep.subr.bf16.mxu0 0
    %3454 = vmatpush2.bf16.msra.mxu0 %v3146
    %3455 = vmatprep.subr.bf16.mxu0 0
    %3456 = vmatpush2.bf16.msra.mxu0 %v3145
    %3457 = vmatprep.subr.bf16.mxu0 0
    %3458 = vmatpush2.bf16.msra.mxu0 %v3144
    %3459 = vmatprep.subr.bf16.mxu0 0
    %3460 = vmatpush2.bf16.msra.mxu0 %v3143
    %3461 = vmatprep.subr.bf16.mxu0 0
    %3462 = vmatpush2.bf16.msra.mxu0 %v3142
    %3463 = vmatprep.subr.bf16.mxu0 0
    %3464 = vmatpush2.bf16.msra.mxu0 %v3141
    %3465 = vmatprep.subr.bf16.mxu0 0
    %3466 = vmatpush2.bf16.msra.mxu0 %v3140
    %3467 = vmatprep.subr.bf16.mxu0 0
    %3468 = vmatpush2.bf16.msra.mxu0 %v3139
    %3469 = vmatprep.mubr.bf16.mxu0 %v2672
    %3470 = vmatmul.mubr.bf16.gmra.mxu0 %v2671
    %v3471 = vpop.f32.mrf.mxu0
    %v3472 = vadd.f32 %v3375, %v3471
    %v3473 = vpop.f32.mrf.mxu0
    %v3474 = vpop.f32.mrf.mxu0
    %v3475 = vadd.f32 %v3378, %v3474
    %v3476 = vpop.f32.mrf.mxu0
    %3477 = vmatprep.mubr.bf16.mxu0 %v2681
    %3478 = vmatmul.mubr.bf16.gmra.mxu0 %v2680
    %v3479 = vpop.f32.mrf.mxu0
    %v3480 = vadd.f32 %v3383, %v3479
    %v3481 = vpop.f32.mrf.mxu0
    %v3482 = vpop.f32.mrf.mxu0
    %v3483 = vadd.f32 %v3386, %v3482
    %v3484 = vpop.f32.mrf.mxu0
    %3485 = vmatprep.mubr.bf16.mxu0 %v2690
    %3486 = vmatmul.mubr.bf16.gmra.mxu0 %v2689
    %v3487 = vpop.f32.mrf.mxu0
    %v3488 = vadd.f32 %v3391, %v3487
    %v3489 = vpop.f32.mrf.mxu0
    %v3490 = vpop.f32.mrf.mxu0
    %v3491 = vadd.f32 %v3394, %v3490
    %v3492 = vpop.f32.mrf.mxu0
    %3493 = vmatprep.mubr.bf16.mxu0 %v2699
    %3494 = vmatmul.mubr.bf16.gmra.mxu0 %v2698
    %v3495 = vpop.f32.mrf.mxu0
    %v3496 = vadd.f32 %v3399, %v3495
    %v3497 = vpop.f32.mrf.mxu0
    %v3498 = vpop.f32.mrf.mxu0
    %v3499 = vadd.f32 %v3402, %v3498
    %v3500 = vpop.f32.mrf.mxu0
    %3501 = vmatprep.mubr.bf16.mxu0 %v2708
    %3502 = vmatmul.mubr.bf16.gmra.mxu0 %v2707
    %v3503 = vpop.f32.mrf.mxu0
    %v3504 = vadd.f32 %v3407, %v3503
    %v3505 = vpop.f32.mrf.mxu0
    %v3506 = vpop.f32.mrf.mxu0
    %v3507 = vadd.f32 %v3410, %v3506
    %v3508 = vpop.f32.mrf.mxu0
    %3509 = vmatprep.mubr.bf16.mxu0 %v2717
    %3510 = vmatmul.mubr.bf16.gmra.mxu0 %v2716
    %v3511 = vpop.f32.mrf.mxu0
    %v3512 = vadd.f32 %v3415, %v3511
    %v3513 = vpop.f32.mrf.mxu0
    %v3514 = vpop.f32.mrf.mxu0
    %v3515 = vadd.f32 %v3418, %v3514
    %v3516 = vpop.f32.mrf.mxu0
    %3517 = vmatprep.mubr.bf16.mxu0 %v2726
    %3518 = vmatmul.mubr.bf16.gmra.mxu0 %v2725
    %v3519 = vpop.f32.mrf.mxu0
    %v3520 = vadd.f32 %v3423, %v3519
    %v3521 = vpop.f32.mrf.mxu0
    %v3522 = vpop.f32.mrf.mxu0
    %v3523 = vadd.f32 %v3426, %v3522
    %v3524 = vpop.f32.mrf.mxu0
    %3525 = vmatprep.mubr.bf16.mxu0 %v2735
    %3526 = vmatmul.mubr.bf16.gmra.mxu0 %v2734
    %v3527 = vpop.f32.mrf.mxu0
    %v3528 = vadd.f32 %v3431, %v3527
    %v3529 = vpop.f32.mrf.mxu0
    %v3530 = vpop.f32.mrf.mxu0
    %v3531 = vadd.f32 %v3434, %v3530
    %v3532 = vpop.f32.mrf.mxu0
    %3533 = vdwg.mxu0
    %3534 = vmatprep.subr.bf16.mxu0 0
    %3535 = vmatpush1.bf16.msra.mxu0 %v3154
    %3536 = vmatprep.subr.bf16.mxu0 0
    %3537 = vmatpush1.bf16.msra.mxu0 %v3153
    %3538 = vmatprep.subr.bf16.mxu0 0
    %3539 = vmatpush1.bf16.msra.mxu0 %v3152
    %3540 = vmatprep.subr.bf16.mxu0 0
    %3541 = vmatpush1.bf16.msra.mxu0 %v3151
    %3542 = vmatprep.subr.bf16.mxu0 0
    %3543 = vmatpush1.bf16.msra.mxu0 %v3150
    %3544 = vmatprep.subr.bf16.mxu0 0
    %3545 = vmatpush1.bf16.msra.mxu0 %v3149
    %3546 = vmatprep.subr.bf16.mxu0 0
    %3547 = vmatpush1.bf16.msra.mxu0 %v3148
    %3548 = vmatprep.subr.bf16.mxu0 0
    %3549 = vmatpush1.bf16.msra.mxu0 %v3147
    %3550 = vmatprep.subr.bf16.mxu0 0
    %3551 = vmatpush2.bf16.msra.mxu0 %v3162
    %3552 = vmatprep.subr.bf16.mxu0 0
    %3553 = vmatpush2.bf16.msra.mxu0 %v3161
    %3554 = vmatprep.subr.bf16.mxu0 0
    %3555 = vmatpush2.bf16.msra.mxu0 %v3160
    %3556 = vmatprep.subr.bf16.mxu0 0
    %3557 = vmatpush2.bf16.msra.mxu0 %v3159
    %3558 = vmatprep.subr.bf16.mxu0 0
    %3559 = vmatpush2.bf16.msra.mxu0 %v3158
    %3560 = vmatprep.subr.bf16.mxu0 0
    %3561 = vmatpush2.bf16.msra.mxu0 %v3157
    %3562 = vmatprep.subr.bf16.mxu0 0
    %3563 = vmatpush2.bf16.msra.mxu0 %v3156
    %3564 = vmatprep.subr.bf16.mxu0 0
    %3565 = vmatpush2.bf16.msra.mxu0 %v3155
    %3566 = vmatprep.mubr.bf16.mxu0 %v2674
    %3567 = vmatmul.mubr.bf16.gmra.mxu0 %v2673
    %v3568 = vpop.f32.mrf.mxu0
    %v3569 = vadd.f32 %v3472, %v3568
    %v3570 = vpop.f32.mrf.mxu0
    %v3571 = vpop.f32.mrf.mxu0
    %v3572 = vadd.f32 %v3475, %v3571
    %v3573 = vpop.f32.mrf.mxu0
    %3574 = vmatprep.mubr.bf16.mxu0 %v2683
    %3575 = vmatmul.mubr.bf16.gmra.mxu0 %v2682
    %v3576 = vpop.f32.mrf.mxu0
    %v3577 = vadd.f32 %v3480, %v3576
    %v3578 = vpop.f32.mrf.mxu0
    %v3579 = vpop.f32.mrf.mxu0
    %v3580 = vadd.f32 %v3483, %v3579
    %v3581 = vpop.f32.mrf.mxu0
    %3582 = vmatprep.mubr.bf16.mxu0 %v2692
    %3583 = vmatmul.mubr.bf16.gmra.mxu0 %v2691
    %v3584 = vpop.f32.mrf.mxu0
    %v3585 = vadd.f32 %v3488, %v3584
    %v3586 = vpop.f32.mrf.mxu0
    %v3587 = vpop.f32.mrf.mxu0
    %v3588 = vadd.f32 %v3491, %v3587
    %v3589 = vpop.f32.mrf.mxu0
    %3590 = vmatprep.mubr.bf16.mxu0 %v2701
    %3591 = vmatmul.mubr.bf16.gmra.mxu0 %v2700
    %v3592 = vpop.f32.mrf.mxu0
    %v3593 = vadd.f32 %v3496, %v3592
    %v3594 = vpop.f32.mrf.mxu0
    %v3595 = vpop.f32.mrf.mxu0
    %v3596 = vadd.f32 %v3499, %v3595
    %v3597 = vpop.f32.mrf.mxu0
    %3598 = vmatprep.mubr.bf16.mxu0 %v2710
    %3599 = vmatmul.mubr.bf16.gmra.mxu0 %v2709
    %v3600 = vpop.f32.mrf.mxu0
    %v3601 = vadd.f32 %v3504, %v3600
    %v3602 = vpop.f32.mrf.mxu0
    %v3603 = vpop.f32.mrf.mxu0
    %v3604 = vadd.f32 %v3507, %v3603
    %v3605 = vpop.f32.mrf.mxu0
    %3606 = vmatprep.mubr.bf16.mxu0 %v2719
    %3607 = vmatmul.mubr.bf16.gmra.mxu0 %v2718
    %v3608 = vpop.f32.mrf.mxu0
    %v3609 = vadd.f32 %v3512, %v3608
    %v3610 = vpop.f32.mrf.mxu0
    %v3611 = vpop.f32.mrf.mxu0
    %v3612 = vadd.f32 %v3515, %v3611
    %v3613 = vpop.f32.mrf.mxu0
    %3614 = vmatprep.mubr.bf16.mxu0 %v2728
    %3615 = vmatmul.mubr.bf16.gmra.mxu0 %v2727
    %v3616 = vpop.f32.mrf.mxu0
    %v3617 = vadd.f32 %v3520, %v3616
    %v3618 = vpop.f32.mrf.mxu0
    %v3619 = vpop.f32.mrf.mxu0
    %v3620 = vadd.f32 %v3523, %v3619
    %v3621 = vpop.f32.mrf.mxu0
    %3622 = vmatprep.mubr.bf16.mxu0 %v2737
    %3623 = vmatmul.mubr.bf16.gmra.mxu0 %v2736
    %v3624 = vpop.f32.mrf.mxu0
    %v3625 = vadd.f32 %v3528, %v3624
    %v3626 = vpop.f32.mrf.mxu0
    %v3627 = vpop.f32.mrf.mxu0
    %v3628 = vadd.f32 %v3531, %v3627
    %v3629 = vpop.f32.mrf.mxu0
    %3630 = vdwg.mxu0
    %3631 = vmatprep.subr.bf16.mxu0 0
    %3632 = vmatpush1.bf16.msra.mxu0 %v3170
    %3633 = vmatprep.subr.bf16.mxu0 0
    %3634 = vmatpush1.bf16.msra.mxu0 %v3169
    %3635 = vmatprep.subr.bf16.mxu0 0
    %3636 = vmatpush1.bf16.msra.mxu0 %v3168
    %3637 = vmatprep.subr.bf16.mxu0 0
    %3638 = vmatpush1.bf16.msra.mxu0 %v3167
    %3639 = vmatprep.subr.bf16.mxu0 0
    %3640 = vmatpush1.bf16.msra.mxu0 %v3166
    %3641 = vmatprep.subr.bf16.mxu0 0
    %3642 = vmatpush1.bf16.msra.mxu0 %v3165
    %3643 = vmatprep.subr.bf16.mxu0 0
    %3644 = vmatpush1.bf16.msra.mxu0 %v3164
    %3645 = vmatprep.subr.bf16.mxu0 0
    %3646 = vmatpush1.bf16.msra.mxu0 %v3163
    %3647 = vmatprep.subr.bf16.mxu0 0
    %3648 = vmatpush2.bf16.msra.mxu0 0
    %3649 = vmatprep.subr.bf16.mxu0 0
    %3650 = vmatpush2.bf16.msra.mxu0 0
    %3651 = vmatprep.subr.bf16.mxu0 0
    %3652 = vmatpush2.bf16.msra.mxu0 0
    %3653 = vmatprep.subr.bf16.mxu0 0
    %3654 = vmatpush2.bf16.msra.mxu0 0
    %3655 = vmatprep.subr.bf16.mxu0 0
    %3656 = vmatpush2.bf16.msra.mxu0 0
    %3657 = vmatprep.subr.bf16.mxu0 0
    %3658 = vmatpush2.bf16.msra.mxu0 0
    %3659 = vmatprep.subr.bf16.mxu0 0
    %3660 = vmatpush2.bf16.msra.mxu0 0
    %3661 = vmatprep.subr.bf16.mxu0 0
    %3662 = vmatpush2.bf16.msra.mxu0 0
    %3663 = vmatprep.mubr.bf16.mxu0 0
    %3664 = vmatmul.mubr.bf16.gmra.mxu0 %v2675
    %v3665 = vpop.f32.mrf.mxu0
    %v3666 = vadd.f32 %v3569, %v3665
    %v3667 = vpop.f32.mrf.mxu0
    %v3668 = vpop.f32.mrf.mxu0
    %v3669 = vadd.f32 %v3572, %v3668
    %v3670 = vpop.f32.mrf.mxu0
    %3671 = vmatprep.mubr.bf16.mxu0 0
    %3672 = vmatmul.mubr.bf16.gmra.mxu0 %v2684
    %v3673 = vpop.f32.mrf.mxu0
    %v3674 = vadd.f32 %v3577, %v3673
    %v3675 = vpop.f32.mrf.mxu0
    %v3676 = vpop.f32.mrf.mxu0
    %v3677 = vadd.f32 %v3580, %v3676
    %v3678 = vpop.f32.mrf.mxu0
    %3679 = vmatprep.mubr.bf16.mxu0 0
    %3680 = vmatmul.mubr.bf16.gmra.mxu0 %v2693
    %v3681 = vpop.f32.mrf.mxu0
    %v3682 = vadd.f32 %v3585, %v3681
    %v3683 = vpop.f32.mrf.mxu0
    %v3684 = vpop.f32.mrf.mxu0
    %v3685 = vadd.f32 %v3588, %v3684
    %v3686 = vpop.f32.mrf.mxu0
    %3687 = vmatprep.mubr.bf16.mxu0 0
    %3688 = vmatmul.mubr.bf16.gmra.mxu0 %v2702
    %v3689 = vpop.f32.mrf.mxu0
    %v3690 = vadd.f32 %v3593, %v3689
    %v3691 = vpop.f32.mrf.mxu0
    %v3692 = vpop.f32.mrf.mxu0
    %v3693 = vadd.f32 %v3596, %v3692
    %v3694 = vpop.f32.mrf.mxu0
    %3695 = vmatprep.mubr.bf16.mxu0 0
    %3696 = vmatmul.mubr.bf16.gmra.mxu0 %v2711
    %v3697 = vpop.f32.mrf.mxu0
    %v3698 = vadd.f32 %v3601, %v3697
    %v3699 = vpop.f32.mrf.mxu0
    %v3700 = vpop.f32.mrf.mxu0
    %v3701 = vadd.f32 %v3604, %v3700
    %v3702 = vpop.f32.mrf.mxu0
    %3703 = vmatprep.mubr.bf16.mxu0 0
    %3704 = vmatmul.mubr.bf16.gmra.mxu0 %v2720
    %v3705 = vpop.f32.mrf.mxu0
    %v3706 = vadd.f32 %v3609, %v3705
    %v3707 = vpop.f32.mrf.mxu0
    %v3708 = vpop.f32.mrf.mxu0
    %v3709 = vadd.f32 %v3612, %v3708
    %v3710 = vpop.f32.mrf.mxu0
    %3711 = vmatprep.mubr.bf16.mxu0 0
    %3712 = vmatmul.mubr.bf16.gmra.mxu0 %v2729
    %v3713 = vpop.f32.mrf.mxu0
    %v3714 = vadd.f32 %v3617, %v3713
    %v3715 = vpop.f32.mrf.mxu0
    %v3716 = vpop.f32.mrf.mxu0
    %v3717 = vadd.f32 %v3620, %v3716
    %v3718 = vpop.f32.mrf.mxu0
    %3719 = vmatprep.mubr.bf16.mxu0 0
    %3720 = vmatmul.mubr.bf16.gmra.mxu0 %v2738
    %v3721 = vpop.f32.mrf.mxu0
    %v3722 = vadd.f32 %v3625, %v3721
    %v3723 = vpop.f32.mrf.mxu0
    %v3724 = vpop.f32.mrf.mxu0
    %v3725 = vadd.f32 %v3628, %v3724
    %v3726 = vpop.f32.mrf.mxu0
    %3727 = vdwg.mxu0
    %v3728 = vld [vmem:[#allocation10] sm:$0xf]
    %v3729 = vld [vmem:[#allocation10 + $0x4] sm:$0xf]
    %v3730 = vld [vmem:[#allocation10 + $0x8] sm:$0xf]
    %v3731 = vld [vmem:[#allocation10 + $0xc] sm:$0xf]
    %v3732 = vld [vmem:[#allocation10 + $0x10] sm:$0xf]
    %v3733 = vld [vmem:[#allocation10 + $0x14] sm:$0xf]
    %v3734 = vld [vmem:[#allocation10 + $0x18] sm:$0xf]
    %v3735 = vld [vmem:[#allocation10 + $0x1c] sm:$0xf]
    %v3736 = vld [vmem:[#allocation10 + $0x20] sm:$0xf]
    %v3737 = vld [vmem:[#allocation10 + $0x24] sm:$0xf]
    %v3738 = vld [vmem:[#allocation10 + $0x28] sm:$0xf]
    %v3739 = vld [vmem:[#allocation10 + $0x2c] sm:$0xf]
    %v3740 = vld [vmem:[#allocation10 + $0x30] sm:$0xf]
    %v3741 = vld [vmem:[#allocation10 + $0x34] sm:$0xf]
    %v3742 = vld [vmem:[#allocation10 + $0x38] sm:$0xf]
    %v3743 = vld [vmem:[#allocation10 + $0x3c] sm:$0xf]
    %v3744 = vunpack.c.l.bf16 %v3728
    %v3745 = vunpack.c.l.bf16 %v3729
    %v3746 = vunpack.c.l.bf16 %v3730
    %v3747 = vunpack.c.l.bf16 %v3731
    %v3748 = vunpack.c.l.bf16 %v3732
    %v3749 = vunpack.c.l.bf16 %v3733
    %v3750 = vunpack.c.l.bf16 %v3734
    %v3751 = vunpack.c.l.bf16 %v3735
    %v3752 = vunpack.c.l.bf16 %v3736
    %v3753 = vunpack.c.l.bf16 %v3737
    %v3754 = vunpack.c.l.bf16 %v3738
    %v3755 = vunpack.c.l.bf16 %v3739
    %v3756 = vunpack.c.l.bf16 %v3740
    %v3757 = vunpack.c.l.bf16 %v3741
    %v3758 = vunpack.c.l.bf16 %v3742
    %v3759 = vunpack.c.l.bf16 %v3743
    %v3760 = vadd.f32 %v3666, %v3744
    %v3761 = vadd.f32 %v3669, %v3745
    %v3762 = vadd.f32 %v3674, %v3746
    %v3763 = vadd.f32 %v3677, %v3747
    %v3764 = vadd.f32 %v3682, %v3748
    %v3765 = vadd.f32 %v3685, %v3749
    %v3766 = vadd.f32 %v3690, %v3750
    %v3767 = vadd.f32 %v3693, %v3751
    %v3768 = vadd.f32 %v3698, %v3752
    %v3769 = vadd.f32 %v3701, %v3753
    %v3770 = vadd.f32 %v3706, %v3754
    %v3771 = vadd.f32 %v3709, %v3755
    %v3772 = vadd.f32 %v3714, %v3756
    %v3773 = vadd.f32 %v3717, %v3757
    %v3774 = vadd.f32 %v3722, %v3758
    %v3775 = vadd.f32 %v3725, %v3759
    %v3776 = vmul.f32 %v3760, 0.01
    %v3777 = vmul.f32 %v3761, 0.01
    %v3778 = vmul.f32 %v3762, 0.01
    %v3779 = vmul.f32 %v3763, 0.01
    %v3780 = vmul.f32 %v3764, 0.01
    %v3781 = vmul.f32 %v3765, 0.01
    %v3782 = vmul.f32 %v3766, 0.01
    %v3783 = vmul.f32 %v3767, 0.01
    %v3784 = vmul.f32 %v3768, 0.01
    %v3785 = vmul.f32 %v3769, 0.01
    %v3786 = vmul.f32 %v3770, 0.01
    %v3787 = vmul.f32 %v3771, 0.01
    %v3788 = vmul.f32 %v3772, 0.01
    %v3789 = vmul.f32 %v3773, 0.01
    %v3790 = vmul.f32 %v3774, 0.01
    %v3791 = vmul.f32 %v3775, 0.01
    %v3792 = vmax.f32 %v3760, %v3776
    %v3793 = vmax.f32 %v3761, %v3777
    %v3794 = vmax.f32 %v3762, %v3778
    %v3795 = vmax.f32 %v3763, %v3779
    %v3796 = vmax.f32 %v3764, %v3780
    %v3797 = vmax.f32 %v3765, %v3781
    %v3798 = vmax.f32 %v3766, %v3782
    %v3799 = vmax.f32 %v3767, %v3783
    %v3800 = vmax.f32 %v3768, %v3784
    %v3801 = vmax.f32 %v3769, %v3785
    %v3802 = vmax.f32 %v3770, %v3786
    %v3803 = vmax.f32 %v3771, %v3787
    %v3804 = vmax.f32 %v3772, %v3788
    %v3805 = vmax.f32 %v3773, %v3789
    %v3806 = vmax.f32 %v3774, %v3790
    %v3807 = vmax.f32 %v3775, %v3791
    %3808 = vst [vmem:[#allocation12] sm:$0xff] %v3792
    %3809 = vst [vmem:[#allocation12 + $0x8] sm:$0xff] %v3793
    %3810 = vst [vmem:[#allocation12 + $0x10] sm:$0xff] %v3794
    %3811 = vst [vmem:[#allocation12 + $0x18] sm:$0xff] %v3795
    %3812 = vst [vmem:[#allocation12 + $0x20] sm:$0xff] %v3796
    %3813 = vst [vmem:[#allocation12 + $0x28] sm:$0xff] %v3797
    %3814 = vst [vmem:[#allocation12 + $0x30] sm:$0xff] %v3798
    %3815 = vst [vmem:[#allocation12 + $0x38] sm:$0xff] %v3799
    %3816 = vst [vmem:[#allocation12 + $0x40] sm:$0xff] %v3800
    %3817 = vst [vmem:[#allocation12 + $0x48] sm:$0xff] %v3801
    %3818 = vst [vmem:[#allocation12 + $0x50] sm:$0xff] %v3802
    %3819 = vst [vmem:[#allocation12 + $0x58] sm:$0xff] %v3803
    %3820 = vst [vmem:[#allocation12 + $0x60] sm:$0xff] %v3804
    %3821 = vst [vmem:[#allocation12 + $0x68] sm:$0xff] %v3805
    %3822 = vst [vmem:[#allocation12 + $0x70] sm:$0xff] %v3806
    %3823 = vst [vmem:[#allocation12 + $0x78] sm:$0xff] %v3807
    // Predicated region
    $region42: #{tpu_custom_call.1} parent=1 // pred_check
      _
    $region43: #{tpu_custom_call.1} parent=1 // pred_check_branch
      %3825 = sbr.rel (0) target = $region45
    $region44: #{tpu_custom_call.1} parent=1 // pred_region
      %s3827 = ssub.s32 2048, 2048
      %3828 = vsyncadd [#allocation6], %s3827
      %s3829 = sshll.u32 [#allocation12], 4
      %s3830 = int_to_ptr.vmem [resolvable:$true] %s3829
      %3835 = dma.vmem_to_hbm [thread:$0]  %s3830, 2048, %s6, [#allocation6], 128, 128, 8
    $region45: #{tpu_custom_call.1} parent=1 // pred_fallthru
      _
    // Predicated region
    $region46: #{tpu_custom_call.1} parent=1 // pred_check
      _
    $region47: #{tpu_custom_call.1} parent=1 // pred_check_branch
      %3837 = sbr.rel (0) target = $region49
    $region48: #{tpu_custom_call.1} parent=1 // pred_region
      %3838 = dma.done [#allocation6], 2048
    $region49: #{tpu_custom_call.1} parent=1 // pred_fallthru
      _
    %3839 = vsyncpa [#allocation5], 1
    %3840 = vsyncpa [#allocation8], 1
    %3841 = vsyncpa [#allocation11], 1
    %3842 = vsyncpa [#allocation6], 1

</llo_original>
